<compile_context>
chip_gen: v7x
topology: tpu7x:2x2x1
jax: 0.10.0
libtpu: 0.0.40
codegen_flags: <defaults>
</compile_context>

<pallas_src>
import functools

import jax
import jax.numpy as jnp
from jax.experimental import pallas as pl
from jax.experimental.pallas import tpu as pltpu  # noqa: F401  (TPU backend)

# ----------------------------- model config ---------------------------------
VOCAB = 128      # synthetic vocab (128 keeps the one-hot matmul lane-aligned)
B, S, H = 2, 8, 32
NH, HD = 4, 8    # heads, head_dim (NH * HD == H)
FFN = 64
NLAYERS = 2
LN_EPS = 1e-12   # matches BERT
QKV_PAD = 128    # each of Q/K/V gets a full 128-lane column slot in the slab
POOL_METHOD = "average"

# rows of the packed per-layer vector slab (NLAYERS, 6, H)
_BO, _LN1G, _LN1B, _B2, _LN2G, _LN2B = range(6)


# ------------------------------ kernel math ----------------------------------
def _layernorm(x, g, b, eps=LN_EPS):
    # Single-pass statistics: E[x] and E[x^2] are independent reductions
    # (var = E[x^2] - mu^2) -> no serial (x - mu)^2 second traversal.
    mu = jnp.mean(x, axis=-1, keepdims=True)
    ex2 = jnp.mean(x * x, axis=-1, keepdims=True)
    var = ex2 - mu * mu
    return (x - mu) * jax.lax.rsqrt(var + eps) * g + b


def fused_encoder_kernel(ids_ref, wemb_ref, pemb_ref, embln_ref,
                         wqkv_ref, bqkv_ref, wo_ref, w1_ref, w2_ref,
                         vec_ref, b1_ref, o_ref, *, nb, pool_method):
    """Entire SentenceEncoder forward for `nb` flattened sequences in one call."""
    bs = nb * S
    scale = 1.0 / (HD ** 0.5)

    # ---- embedding lookup as a one-hot matmul (gather stays on the MXU) ----
    # (scale-up: replace with a scalar-prefetch row gather; cast to bf16)
    ids = ids_ref[...]                                           # (bs, 1) int32
    onehot = (ids == jax.lax.broadcasted_iota(jnp.int32, (bs, VOCAB), 1))
    x = jnp.dot(onehot.astype(jnp.float32), wemb_ref[...],
                preferred_element_type=jnp.float32)              # (bs, H)
    # broadcast pos-emb add (no jnp.tile -> no materialized intermediate)
    x = (x.reshape(nb, S, H) + pemb_ref[...][None, :, :]).reshape(bs, H)
    x = _layernorm(x, embln_ref[0:1, :], embln_ref[1:2, :])

    # ---- transformer encoder stack (static unroll over layers) ----
    for l in range(NLAYERS):
        vec = vec_ref[l]                                         # (6, H)
        wo_l = wo_ref[l]                                         # (H, H)

        # fused QKV projection; Q/K/V column blocks are padded to 128 lanes
        # each so the slices below start on vreg lane boundaries (0/128/256)
        qkv = (jnp.dot(x, wqkv_ref[l], preferred_element_type=jnp.float32)
               + bqkv_ref[l])                                    # (bs, 3*128)
        q3 = qkv[:, 0 * QKV_PAD:0 * QKV_PAD + H].reshape(nb, S, H)
        k3 = qkv[:, 1 * QKV_PAD:1 * QKV_PAD + H].reshape(nb, S, H)
        v3 = qkv[:, 2 * QKV_PAD:2 * QKV_PAD + H].reshape(nb, S, H)

        # Multi-head attention: heads are a static unroll of 3-D single-batch
        # einsums (documented flash pattern).  The lane-axis concatenate of
        # head outputs is ELIMINATED by folding the output projection into the
        # head loop:  ctx @ Wo == sum_h ctx_h @ Wo[h*HD:(h+1)*HD, :]
        # (Wo row slices are sublane-aligned because HD == 8 == f32 sublane).
        ctx_proj = None
        for h in range(NH):
            sl = slice(h * HD, (h + 1) * HD)
            s = jnp.einsum("bqd,bkd->bqk", q3[..., sl], k3[..., sl],
                           preferred_element_type=jnp.float32) * scale
            s = s - jnp.max(s, axis=-1, keepdims=True)
            p = jnp.exp(s)
            # exact EUP reciprocal: off the VALU critical path, rows sum to 1
            p = p * pl.reciprocal(jnp.sum(p, axis=-1, keepdims=True),
                                  approx=False)
            hout = jnp.einsum("bqk,bkd->bqd", p, v3[..., sl],
                              preferred_element_type=jnp.float32)
            contrib = jnp.dot(hout.reshape(bs, HD), wo_l[sl, :],
                              preferred_element_type=jnp.float32)
            ctx_proj = contrib if ctx_proj is None else ctx_proj + contrib

        attn = ctx_proj + vec[_BO:_BO + 1]
        h1 = _layernorm(x + attn, vec[_LN1G:_LN1G + 1], vec[_LN1B:_LN1B + 1])

        ff = jnp.dot(h1, w1_ref[l], preferred_element_type=jnp.float32) + b1_ref[l]
        ff = jax.nn.gelu(ff, approximate=True)
        ff = (jnp.dot(ff, w2_ref[l], preferred_element_type=jnp.float32)
              + vec[_B2:_B2 + 1])
        x = _layernorm(h1 + ff, vec[_LN2G:_LN2G + 1], vec[_LN2B:_LN2B + 1])

    # ---- pooling (torch.mean(x, dim=-2) / max / cls / none) ----
    x3 = x.reshape(nb, S, H)
    if pool_method == "average":
        o_ref[...] = jnp.mean(x3, axis=1)
    elif pool_method == "max":
        o_ref[...] = jnp.max(x3, axis=1)
    elif pool_method == "cls":
        o_ref[...] = x3[:, 0, :]
    else:  # "none"
        o_ref[...] = x3


# ------------------------------ parameters -----------------------------------
def init_params(key):
    def nrm(k, shape):
        return (0.02 * jax.random.normal(k, shape)).astype(jnp.float32)

    k_emb, k_pos, k_layers = jax.random.split(key, 3)
    params = {
        "word_emb": nrm(k_emb, (VOCAB, H)),
        "pos_emb": nrm(k_pos, (S, H)),
        "emb_ln_g": jnp.ones((1, H), jnp.float32),
        "emb_ln_b": jnp.zeros((1, H), jnp.float32),
        "layers": [],
    }
    for lk in jax.random.split(k_layers, NLAYERS):
        ks = jax.random.split(lk, 12)
        params["layers"].append({
            "wq": nrm(ks[0], (H, H)),   "bq": nrm(ks[1], (1, H)),
            "wk": nrm(ks[2], (H, H)),   "bk": nrm(ks[3], (1, H)),
            "wv": nrm(ks[4], (H, H)),   "bv": nrm(ks[5], (1, H)),
            "wo": nrm(ks[6], (H, H)),   "bo": nrm(ks[7], (1, H)),
            "ln1_g": jnp.ones((1, H), jnp.float32),
            "ln1_b": nrm(ks[8], (1, H)),
            "w1": nrm(ks[9], (H, FFN)), "b1": nrm(ks[10], (1, FFN)),
            "w2": nrm(ks[11], (FFN, H)), "b2": jnp.zeros((1, H), jnp.float32),
            "ln2_g": jnp.ones((1, H), jnp.float32),
            "ln2_b": jnp.zeros((1, H), jnp.float32),
        })
    return params


def pack_params(params):
    """Stack/concat per-layer tensors into a few VMEM-friendly slabs."""
    wqkv, bqkv, wo, w1, w2, vec, b1 = [], [], [], [], [], [], []
    for lp in params["layers"]:
        wpad = jnp.zeros((H, 3 * QKV_PAD), jnp.float32)
        bpad = jnp.zeros((1, 3 * QKV_PAD), jnp.float32)
        for i, (wn, bn) in enumerate((("wq", "bq"), ("wk", "bk"), ("wv", "bv"))):
            wpad = wpad.at[:, i * QKV_PAD:i * QKV_PAD + H].set(lp[wn])
            bpad = bpad.at[:, i * QKV_PAD:i * QKV_PAD + H].set(lp[bn])
        wqkv.append(wpad)
        bqkv.append(bpad)
        wo.append(lp["wo"])
        w1.append(lp["w1"])
        w2.append(lp["w2"])
        vec.append(jnp.concatenate([lp["bo"], lp["ln1_g"], lp["ln1_b"],
                                    lp["b2"], lp["ln2_g"], lp["ln2_b"]], axis=0))
        b1.append(lp["b1"])
    return {
        "word_emb": params["word_emb"],
        "pos_emb": params["pos_emb"],
        "emb_ln": jnp.concatenate([params["emb_ln_g"], params["emb_ln_b"]], axis=0),
        "wqkv": jnp.stack(wqkv),   # (NLAYERS, H, 3*128)  lane-padded
        "bqkv": jnp.stack(bqkv),   # (NLAYERS, 1, 3*128)
        "wo": jnp.stack(wo),       # (NLAYERS, H, H)
        "w1": jnp.stack(w1),       # (NLAYERS, H, FFN)
        "w2": jnp.stack(w2),       # (NLAYERS, FFN, H)
        "vec": jnp.stack(vec),     # (NLAYERS, 6, H)
        "b1": jnp.stack(b1),       # (NLAYERS, 1, FFN)
    }


# ------------------------------ forward pass ----------------------------------
def sentence_encoder_forward(params, sentence_indexes, ndim=2,
                             pool_method=POOL_METHOD):
    """Mirrors SentenceEncoder.forward semantics for the synthetic transformer."""
    if ndim == 2:
        ids = sentence_indexes                       # (batch, seq)
        out_batch_shape = (sentence_indexes.shape[0],)
    elif ndim == 3:
        bsz, n_seq, seq_len = sentence_indexes.shape
        ids = sentence_indexes.reshape(-1, seq_len)  # flatten (glue)
        out_batch_shape = (bsz, n_seq)
    else:
        raise ValueError("Number of dim of input sequence must be 2 or 3.")

    if pool_method == "lstm":
        # TODO(synk): nn.LSTM pooler not implemented as a Pallas kernel.
        raise NotImplementedError(pool_method)
    if pool_method not in ("average", "max", "cls", "none"):
        raise NotImplementedError(pool_method)

    nb = ids.shape[0]
    assert ids.shape[1] == S, ids.shape
    packed = pack_params(params)
    ids2d = ids.reshape(nb * S, 1).astype(jnp.int32)

    if pool_method == "none":
        out_shape = jax.ShapeDtypeStruct((nb, S, H), jnp.float32)
    else:
        out_shape = jax.ShapeDtypeStruct((nb, H), jnp.float32)

    kern = functools.partial(fused_encoder_kernel, nb=nb, pool_method=pool_method)
    # Grid-less call: every operand becomes a single whole-array VMEM block
    # (~160 KB total), so there is one launch and no inter-layer HBM traffic.
    # (Add a leading 'parallel' batch grid axis for v7x once nb grows.)
    feat = pl.pallas_call(kern, out_shape=out_shape)(
        ids2d, packed["word_emb"], packed["pos_emb"], packed["emb_ln"],
        packed["wqkv"], packed["bqkv"], packed["wo"], packed["w1"],
        packed["w2"], packed["vec"], packed["b1"])

    if pool_method == "none":
        return feat.reshape(out_batch_shape + (S, H))
    return feat.reshape(out_batch_shape + (H,))


# ------------------------------ pure-JAX reference ----------------------------
def _reference_forward(params, ids, pool_method="average"):
    nb = ids.shape[0]
    x = jnp.take(params["word_emb"], ids, axis=0) + params["pos_emb"][None, :, :]
    x = _layernorm(x, params["emb_ln_g"], params["emb_ln_b"])
    for lp in params["layers"]:
        q = x @ lp["wq"] + lp["bq"]
        k = x @ lp["wk"] + lp["bk"]
        v = x @ lp["wv"] + lp["bv"]
        qh = q.reshape(nb, S, NH, HD).transpose(0, 2, 1, 3)
        kh = k.reshape(nb, S, NH, HD).transpose(0, 2, 1, 3)
        vh = v.reshape(nb, S, NH, HD).transpose(0, 2, 1, 3)
        s = jnp.einsum("bhqd,bhkd->bhqk", qh, kh) / (HD ** 0.5)
        p = jax.nn.softmax(s, axis=-1)
        ctx = jnp.einsum("bhqk,bhkd->bhqd", p, vh)
        ctx = ctx.transpose(0, 2, 1, 3).reshape(nb, S, H)
        attn_out = ctx @ lp["wo"] + lp["bo"]
        h1 = _layernorm(x + attn_out, lp["ln1_g"], lp["ln1_b"])
        ff = jax.nn.gelu(h1 @ lp["w1"] + lp["b1"], approximate=True)
        ff = ff @ lp["w2"] + lp["b2"]
        x = _layernorm(h1 + ff, lp["ln2_g"], lp["ln2_b"])
    if pool_method == "average":
        return jnp.mean(x, axis=-2)
    if pool_method == "max":
        return jnp.max(x, axis=-2)
    if pool_method == "cls":
        return x[:, 0, :]
    return x  # "none"


# ----------------------------------- main -------------------------------------
if __name__ == "__main__":
    key = jax.random.PRNGKey(0)
    k_param, k_ids = jax.random.split(key)

    params = init_params(k_param)
    sentence_indexes = jax.random.randint(k_ids, (B, S), 0, VOCAB, dtype=jnp.int32)

    expected_shapes = {"average": (B, H), "max": (B, H),
                       "cls": (B, H), "none": (B, S, H)}
    for pm in ("average", "max", "cls", "none"):
        fwd = jax.jit(functools.partial(sentence_encoder_forward,
                                        ndim=2, pool_method=pm))
        out = jax.block_until_ready(fwd(params, sentence_indexes))
        assert out.shape == expected_shapes[pm], (pm, out.shape)
        ref = jax.block_until_ready(
            _reference_forward(params, sentence_indexes, pool_method=pm))
        max_err = float(jnp.max(jnp.abs(out - ref)))
        assert jnp.allclose(out, ref, atol=5e-4, rtol=5e-4), (pm, max_err)

    # ndim=3 path (glue): (1, B, S) -> (1, B, H) for 'average'
    ids3 = sentence_indexes[None]
    fwd3 = jax.jit(functools.partial(sentence_encoder_forward,
                                     ndim=3, pool_method="average"))
    out3 = jax.block_until_ready(fwd3(params, ids3))
    assert out3.shape == (1, B, H), out3.shape
    ref3 = _reference_forward(params, sentence_indexes, pool_method="average")[None]
    assert jnp.allclose(out3, ref3, atol=5e-4, rtol=5e-4)

    print("KERNEL_OK")
</pallas_src>

<mosaic_0001>
module attributes {stable_mosaic.version = 11 : i64} {
  func.func @fused_encoder_kernel(%arg0: memref<16x1xi32, #tpu.memory_space<vmem>>, %arg1: memref<128x32xf32, #tpu.memory_space<vmem>>, %arg2: memref<8x32xf32, #tpu.memory_space<vmem>>, %arg3: memref<2x32xf32, #tpu.memory_space<vmem>>, %arg4: memref<2x32x384xf32, #tpu.memory_space<vmem>>, %arg5: memref<2x1x384xf32, #tpu.memory_space<vmem>>, %arg6: memref<2x32x32xf32, #tpu.memory_space<vmem>>, %arg7: memref<2x32x64xf32, #tpu.memory_space<vmem>>, %arg8: memref<2x64x32xf32, #tpu.memory_space<vmem>>, %arg9: memref<2x6x32xf32, #tpu.memory_space<vmem>>, %arg10: memref<2x1x64xf32, #tpu.memory_space<vmem>>, %arg11: memref<2x32xf32, #tpu.memory_space<vmem>>) attributes {dimension_semantics = [], scalar_prefetch = 0 : i64, scratch_operands = 0 : i64, tpu.core_type = #tpu.core_type<tc>} {
    %c0 = arith.constant 0 : index
    %c0_0 = arith.constant 0 : index
    %0 = vector.load %arg0[%c0, %c0_0] : memref<16x1xi32, #tpu.memory_space<vmem>>, vector<16x1xi32>
    %1 = tpu.iota {dimensions = array<i32: 1>} : vector<16x128xi32>
    %2 = vector.broadcast %0 : vector<16x1xi32> to vector<16x128xi32>
    %3 = arith.cmpi eq, %2, %1 : vector<16x128xi32>
    %4 = arith.extui %3 : vector<16x128xi1> to vector<16x128xi32>
    %5 = arith.sitofp %4 : vector<16x128xi32> to vector<16x128xf32>
    %c0_1 = arith.constant 0 : index
    %c0_2 = arith.constant 0 : index
    %6 = vector.load %arg1[%c0_1, %c0_2] : memref<128x32xf32, #tpu.memory_space<vmem>>, vector<128x32xf32>
    %cst = arith.constant dense<0.000000e+00> : vector<16x32xf32>
    %7 = tpu.matmul %5, %6, %cst {dimension_numbers = #tpu.dot_dimension_numbers<[1], [0], [0], [1], [0, 0, 1, 1], [], []>} : vector<16x128xf32>, vector<128x32xf32>, vector<16x32xf32> -> vector<16x32xf32>
    %8 = vector.shape_cast %7 : vector<16x32xf32> to vector<2x8x32xf32>
    %c0_3 = arith.constant 0 : index
    %c0_4 = arith.constant 0 : index
    %9 = vector.load %arg2[%c0_3, %c0_4] : memref<8x32xf32, #tpu.memory_space<vmem>>, vector<8x32xf32>
    %10 = vector.shape_cast %9 : vector<8x32xf32> to vector<1x8x32xf32>
    %11 = vector.broadcast %10 : vector<1x8x32xf32> to vector<2x8x32xf32>
    %12 = arith.addf %8, %11 : vector<2x8x32xf32>
    %13 = vector.shape_cast %12 : vector<2x8x32xf32> to vector<16x32xf32>
    %c0_5 = arith.constant 0 : index
    %c0_6 = arith.constant 0 : index
    %14 = vector.load %arg3[%c0_5, %c0_6] : memref<2x32xf32, #tpu.memory_space<vmem>>, vector<1x32xf32>
    %c1 = arith.constant 1 : index
    %c0_7 = arith.constant 0 : index
    %15 = vector.load %arg3[%c1, %c0_7] : memref<2x32xf32, #tpu.memory_space<vmem>>, vector<1x32xf32>
    %cst_8 = arith.constant dense<0.000000e+00> : vector<16xf32>
    %16 = vector.multi_reduction <add>, %13, %cst_8 [1] : vector<16x32xf32> to vector<16xf32>
    %17 = vector.shape_cast %16 : vector<16xf32> to vector<16x1xf32>
    %cst_9 = arith.constant 3.200000e+01 : f32
    %18 = vector.broadcast %cst_9 : f32 to vector<16x1xf32>
    %19 = arith.divf %17, %18 : vector<16x1xf32>
    %20 = arith.mulf %13, %13 : vector<16x32xf32>
    %cst_10 = arith.constant dense<0.000000e+00> : vector<16xf32>
    %21 = vector.multi_reduction <add>, %20, %cst_10 [1] : vector<16x32xf32> to vector<16xf32>
    %22 = vector.shape_cast %21 : vector<16xf32> to vector<16x1xf32>
    %cst_11 = arith.constant 3.200000e+01 : f32
    %23 = vector.broadcast %cst_11 : f32 to vector<16x1xf32>
    %24 = arith.divf %22, %23 : vector<16x1xf32>
    %25 = arith.mulf %19, %19 : vector<16x1xf32>
    %26 = arith.subf %24, %25 : vector<16x1xf32>
    %27 = vector.broadcast %19 : vector<16x1xf32> to vector<16x32xf32>
    %28 = arith.subf %13, %27 : vector<16x32xf32>
    %cst_12 = arith.constant 9.99999996E-13 : f32
    %29 = vector.broadcast %cst_12 : f32 to vector<16x1xf32>
    %30 = arith.addf %26, %29 : vector<16x1xf32>
    %31 = math.rsqrt %30 : vector<16x1xf32>
    %32 = vector.broadcast %31 : vector<16x1xf32> to vector<16x32xf32>
    %33 = arith.mulf %28, %32 : vector<16x32xf32>
    %34 = vector.broadcast %14 : vector<1x32xf32> to vector<16x32xf32>
    %35 = arith.mulf %33, %34 : vector<16x32xf32>
    %36 = vector.broadcast %15 : vector<1x32xf32> to vector<16x32xf32>
    %37 = arith.addf %35, %36 : vector<16x32xf32>
    %c0_13 = arith.constant 0 : index
    %c0_14 = arith.constant 0 : index
    %c0_15 = arith.constant 0 : index
    %38 = vector.load %arg9[%c0_13, %c0_14, %c0_15] : memref<2x6x32xf32, #tpu.memory_space<vmem>>, vector<1x6x32xf32>
    %39 = vector.shape_cast %38 : vector<1x6x32xf32> to vector<6x32xf32>
    %c0_16 = arith.constant 0 : index
    %c0_17 = arith.constant 0 : index
    %c0_18 = arith.constant 0 : index
    %40 = vector.load %arg6[%c0_16, %c0_17, %c0_18] : memref<2x32x32xf32, #tpu.memory_space<vmem>>, vector<1x32x32xf32>
    %41 = vector.shape_cast %40 : vector<1x32x32xf32> to vector<32x32xf32>
    %c0_19 = arith.constant 0 : index
    %c0_20 = arith.constant 0 : index
    %c0_21 = arith.constant 0 : index
    %42 = vector.load %arg4[%c0_19, %c0_20, %c0_21] : memref<2x32x384xf32, #tpu.memory_space<vmem>>, vector<1x32x384xf32>
    %43 = vector.shape_cast %42 : vector<1x32x384xf32> to vector<32x384xf32>
    %cst_22 = arith.constant dense<0.000000e+00> : vector<16x384xf32>
    %44 = tpu.matmul %37, %43, %cst_22 {dimension_numbers = #tpu.dot_dimension_numbers<[1], [0], [0], [1], [0, 0, 1, 1], [], []>} : vector<16x32xf32>, vector<32x384xf32>, vector<16x384xf32> -> vector<16x384xf32>
    %c0_23 = arith.constant 0 : index
    %c0_24 = arith.constant 0 : index
    %c0_25 = arith.constant 0 : index
    %45 = vector.load %arg5[%c0_23, %c0_24, %c0_25] : memref<2x1x384xf32, #tpu.memory_space<vmem>>, vector<1x1x384xf32>
    %46 = vector.shape_cast %45 : vector<1x1x384xf32> to vector<1x384xf32>
    %47 = vector.broadcast %46 : vector<1x384xf32> to vector<16x384xf32>
    %48 = arith.addf %44, %47 : vector<16x384xf32>
    %49 = vector.extract_strided_slice %48 {offsets = [0, 0], sizes = [16, 32], strides = [1, 1]} : vector<16x384xf32> to vector<16x32xf32>
    %50 = vector.shape_cast %49 : vector<16x32xf32> to vector<2x8x32xf32>
    %51 = vector.extract_strided_slice %48 {offsets = [0, 128], sizes = [16, 32], strides = [1, 1]} : vector<16x384xf32> to vector<16x32xf32>
    %52 = vector.shape_cast %51 : vector<16x32xf32> to vector<2x8x32xf32>
    %53 = vector.extract_strided_slice %48 {offsets = [0, 256], sizes = [16, 32], strides = [1, 1]} : vector<16x384xf32> to vector<16x32xf32>
    %54 = vector.shape_cast %53 : vector<16x32xf32> to vector<2x8x32xf32>
    %55 = vector.extract_strided_slice %50 {offsets = [0, 0, 0], sizes = [2, 8, 8], strides = [1, 1, 1]} : vector<2x8x32xf32> to vector<2x8x8xf32>
    %56 = vector.extract_strided_slice %52 {offsets = [0, 0, 0], sizes = [2, 8, 8], strides = [1, 1, 1]} : vector<2x8x32xf32> to vector<2x8x8xf32>
    "tpu.trace_start"() <{level = 10 : i32, message = "bqd,bkd->bqk"}> : () -> ()
    %cst_26 = arith.constant dense<0.000000e+00> : vector<2x8x8xf32>
    %57 = tpu.matmul %55, %56, %cst_26 {dimension_numbers = #tpu.dot_dimension_numbers<[2], [2], [1], [1], [0, 0, 0, 1, 1, 1], [0], [0]>} : vector<2x8x8xf32>, vector<2x8x8xf32>, vector<2x8x8xf32> -> vector<2x8x8xf32>
    "tpu.trace_stop"() : () -> ()
    %cst_27 = arith.constant 0.353553385 : f32
    %58 = vector.broadcast %cst_27 : f32 to vector<2x8x8xf32>
    %59 = arith.mulf %57, %58 : vector<2x8x8xf32>
    %cst_28 = arith.constant dense<0xFF800000> : vector<2x8xf32>
    %60 = vector.multi_reduction <maximumf>, %59, %cst_28 [2] : vector<2x8x8xf32> to vector<2x8xf32>
    %61 = vector.shape_cast %60 : vector<2x8xf32> to vector<2x8x1xf32>
    %62 = vector.broadcast %61 : vector<2x8x1xf32> to vector<2x8x8xf32>
    %63 = arith.subf %59, %62 : vector<2x8x8xf32>
    %64 = math.exp %63 : vector<2x8x8xf32>
    %cst_29 = arith.constant dense<0.000000e+00> : vector<2x8xf32>
    %65 = vector.multi_reduction <add>, %64, %cst_29 [2] : vector<2x8x8xf32> to vector<2x8xf32>
    %66 = vector.shape_cast %65 : vector<2x8xf32> to vector<2x8x1xf32>
    %67 = tpu.reciprocal %66 : vector<2x8x1xf32> -> vector<2x8x1xf32>
    %68 = vector.broadcast %67 : vector<2x8x1xf32> to vector<2x8x8xf32>
    %69 = arith.mulf %64, %68 : vector<2x8x8xf32>
    %70 = vector.extract_strided_slice %54 {offsets = [0, 0, 0], sizes = [2, 8, 8], strides = [1, 1, 1]} : vector<2x8x32xf32> to vector<2x8x8xf32>
    "tpu.trace_start"() <{level = 10 : i32, message = "bqk,bkd->bqd"}> : () -> ()
    %cst_30 = arith.constant dense<0.000000e+00> : vector<2x8x8xf32>
    %71 = tpu.matmul %69, %70, %cst_30 {dimension_numbers = #tpu.dot_dimension_numbers<[2], [1], [1], [2], [0, 0, 0, 1, 1, 2], [0], [0]>} : vector<2x8x8xf32>, vector<2x8x8xf32>, vector<2x8x8xf32> -> vector<2x8x8xf32>
    "tpu.trace_stop"() : () -> ()
    %72 = vector.shape_cast %71 : vector<2x8x8xf32> to vector<16x8xf32>
    %73 = vector.extract_strided_slice %41 {offsets = [0, 0], sizes = [8, 32], strides = [1, 1]} : vector<32x32xf32> to vector<8x32xf32>
    %cst_31 = arith.constant dense<0.000000e+00> : vector<16x32xf32>
    %74 = tpu.matmul %72, %73, %cst_31 {dimension_numbers = #tpu.dot_dimension_numbers<[1], [0], [0], [1], [0, 0, 1, 1], [], []>} : vector<16x8xf32>, vector<8x32xf32>, vector<16x32xf32> -> vector<16x32xf32>
    %75 = vector.extract_strided_slice %50 {offsets = [0, 0, 8], sizes = [2, 8, 8], strides = [1, 1, 1]} : vector<2x8x32xf32> to vector<2x8x8xf32>
    %76 = vector.extract_strided_slice %52 {offsets = [0, 0, 8], sizes = [2, 8, 8], strides = [1, 1, 1]} : vector<2x8x32xf32> to vector<2x8x8xf32>
    "tpu.trace_start"() <{level = 10 : i32, message = "bqd,bkd->bqk"}> : () -> ()
    %cst_32 = arith.constant dense<0.000000e+00> : vector<2x8x8xf32>
    %77 = tpu.matmul %75, %76, %cst_32 {dimension_numbers = #tpu.dot_dimension_numbers<[2], [2], [1], [1], [0, 0, 0, 1, 1, 1], [0], [0]>} : vector<2x8x8xf32>, vector<2x8x8xf32>, vector<2x8x8xf32> -> vector<2x8x8xf32>
    "tpu.trace_stop"() : () -> ()
    %cst_33 = arith.constant 0.353553385 : f32
    %78 = vector.broadcast %cst_33 : f32 to vector<2x8x8xf32>
    %79 = arith.mulf %77, %78 : vector<2x8x8xf32>
    %cst_34 = arith.constant dense<0xFF800000> : vector<2x8xf32>
    %80 = vector.multi_reduction <maximumf>, %79, %cst_34 [2] : vector<2x8x8xf32> to vector<2x8xf32>
    %81 = vector.shape_cast %80 : vector<2x8xf32> to vector<2x8x1xf32>
    %82 = vector.broadcast %81 : vector<2x8x1xf32> to vector<2x8x8xf32>
    %83 = arith.subf %79, %82 : vector<2x8x8xf32>
    %84 = math.exp %83 : vector<2x8x8xf32>
    %cst_35 = arith.constant dense<0.000000e+00> : vector<2x8xf32>
    %85 = vector.multi_reduction <add>, %84, %cst_35 [2] : vector<2x8x8xf32> to vector<2x8xf32>
    %86 = vector.shape_cast %85 : vector<2x8xf32> to vector<2x8x1xf32>
    %87 = tpu.reciprocal %86 : vector<2x8x1xf32> -> vector<2x8x1xf32>
    %88 = vector.broadcast %87 : vector<2x8x1xf32> to vector<2x8x8xf32>
    %89 = arith.mulf %84, %88 : vector<2x8x8xf32>
    %90 = vector.extract_strided_slice %54 {offsets = [0, 0, 8], sizes = [2, 8, 8], strides = [1, 1, 1]} : vector<2x8x32xf32> to vector<2x8x8xf32>
    "tpu.trace_start"() <{level = 10 : i32, message = "bqk,bkd->bqd"}> : () -> ()
    %cst_36 = arith.constant dense<0.000000e+00> : vector<2x8x8xf32>
    %91 = tpu.matmul %89, %90, %cst_36 {dimension_numbers = #tpu.dot_dimension_numbers<[2], [1], [1], [2], [0, 0, 0, 1, 1, 2], [0], [0]>} : vector<2x8x8xf32>, vector<2x8x8xf32>, vector<2x8x8xf32> -> vector<2x8x8xf32>
    "tpu.trace_stop"() : () -> ()
    %92 = vector.shape_cast %91 : vector<2x8x8xf32> to vector<16x8xf32>
    %93 = vector.extract_strided_slice %41 {offsets = [8, 0], sizes = [8, 32], strides = [1, 1]} : vector<32x32xf32> to vector<8x32xf32>
    %cst_37 = arith.constant dense<0.000000e+00> : vector<16x32xf32>
    %94 = tpu.matmul %92, %93, %cst_37 {dimension_numbers = #tpu.dot_dimension_numbers<[1], [0], [0], [1], [0, 0, 1, 1], [], []>} : vector<16x8xf32>, vector<8x32xf32>, vector<16x32xf32> -> vector<16x32xf32>
    %95 = arith.addf %74, %94 : vector<16x32xf32>
    %96 = vector.extract_strided_slice %50 {offsets = [0, 0, 16], sizes = [2, 8, 8], strides = [1, 1, 1]} : vector<2x8x32xf32> to vector<2x8x8xf32>
    %97 = vector.extract_strided_slice %52 {offsets = [0, 0, 16], sizes = [2, 8, 8], strides = [1, 1, 1]} : vector<2x8x32xf32> to vector<2x8x8xf32>
    "tpu.trace_start"() <{level = 10 : i32, message = "bqd,bkd->bqk"}> : () -> ()
    %cst_38 = arith.constant dense<0.000000e+00> : vector<2x8x8xf32>
    %98 = tpu.matmul %96, %97, %cst_38 {dimension_numbers = #tpu.dot_dimension_numbers<[2], [2], [1], [1], [0, 0, 0, 1, 1, 1], [0], [0]>} : vector<2x8x8xf32>, vector<2x8x8xf32>, vector<2x8x8xf32> -> vector<2x8x8xf32>
    "tpu.trace_stop"() : () -> ()
    %cst_39 = arith.constant 0.353553385 : f32
    %99 = vector.broadcast %cst_39 : f32 to vector<2x8x8xf32>
    %100 = arith.mulf %98, %99 : vector<2x8x8xf32>
    %cst_40 = arith.constant dense<0xFF800000> : vector<2x8xf32>
    %101 = vector.multi_reduction <maximumf>, %100, %cst_40 [2] : vector<2x8x8xf32> to vector<2x8xf32>
    %102 = vector.shape_cast %101 : vector<2x8xf32> to vector<2x8x1xf32>
    %103 = vector.broadcast %102 : vector<2x8x1xf32> to vector<2x8x8xf32>
    %104 = arith.subf %100, %103 : vector<2x8x8xf32>
    %105 = math.exp %104 : vector<2x8x8xf32>
    %cst_41 = arith.constant dense<0.000000e+00> : vector<2x8xf32>
    %106 = vector.multi_reduction <add>, %105, %cst_41 [2] : vector<2x8x8xf32> to vector<2x8xf32>
    %107 = vector.shape_cast %106 : vector<2x8xf32> to vector<2x8x1xf32>
    %108 = tpu.reciprocal %107 : vector<2x8x1xf32> -> vector<2x8x1xf32>
    %109 = vector.broadcast %108 : vector<2x8x1xf32> to vector<2x8x8xf32>
    %110 = arith.mulf %105, %109 : vector<2x8x8xf32>
    %111 = vector.extract_strided_slice %54 {offsets = [0, 0, 16], sizes = [2, 8, 8], strides = [1, 1, 1]} : vector<2x8x32xf32> to vector<2x8x8xf32>
    "tpu.trace_start"() <{level = 10 : i32, message = "bqk,bkd->bqd"}> : () -> ()
    %cst_42 = arith.constant dense<0.000000e+00> : vector<2x8x8xf32>
    %112 = tpu.matmul %110, %111, %cst_42 {dimension_numbers = #tpu.dot_dimension_numbers<[2], [1], [1], [2], [0, 0, 0, 1, 1, 2], [0], [0]>} : vector<2x8x8xf32>, vector<2x8x8xf32>, vector<2x8x8xf32> -> vector<2x8x8xf32>
    "tpu.trace_stop"() : () -> ()
    %113 = vector.shape_cast %112 : vector<2x8x8xf32> to vector<16x8xf32>
    %114 = vector.extract_strided_slice %41 {offsets = [16, 0], sizes = [8, 32], strides = [1, 1]} : vector<32x32xf32> to vector<8x32xf32>
    %cst_43 = arith.constant dense<0.000000e+00> : vector<16x32xf32>
    %115 = tpu.matmul %113, %114, %cst_43 {dimension_numbers = #tpu.dot_dimension_numbers<[1], [0], [0], [1], [0, 0, 1, 1], [], []>} : vector<16x8xf32>, vector<8x32xf32>, vector<16x32xf32> -> vector<16x32xf32>
    %116 = arith.addf %95, %115 : vector<16x32xf32>
    %117 = vector.extract_strided_slice %50 {offsets = [0, 0, 24], sizes = [2, 8, 8], strides = [1, 1, 1]} : vector<2x8x32xf32> to vector<2x8x8xf32>
    %118 = vector.extract_strided_slice %52 {offsets = [0, 0, 24], sizes = [2, 8, 8], strides = [1, 1, 1]} : vector<2x8x32xf32> to vector<2x8x8xf32>
    "tpu.trace_start"() <{level = 10 : i32, message = "bqd,bkd->bqk"}> : () -> ()
    %cst_44 = arith.constant dense<0.000000e+00> : vector<2x8x8xf32>
    %119 = tpu.matmul %117, %118, %cst_44 {dimension_numbers = #tpu.dot_dimension_numbers<[2], [2], [1], [1], [0, 0, 0, 1, 1, 1], [0], [0]>} : vector<2x8x8xf32>, vector<2x8x8xf32>, vector<2x8x8xf32> -> vector<2x8x8xf32>
    "tpu.trace_stop"() : () -> ()
    %cst_45 = arith.constant 0.353553385 : f32
    %120 = vector.broadcast %cst_45 : f32 to vector<2x8x8xf32>
    %121 = arith.mulf %119, %120 : vector<2x8x8xf32>
    %cst_46 = arith.constant dense<0xFF800000> : vector<2x8xf32>
    %122 = vector.multi_reduction <maximumf>, %121, %cst_46 [2] : vector<2x8x8xf32> to vector<2x8xf32>
    %123 = vector.shape_cast %122 : vector<2x8xf32> to vector<2x8x1xf32>
    %124 = vector.broadcast %123 : vector<2x8x1xf32> to vector<2x8x8xf32>
    %125 = arith.subf %121, %124 : vector<2x8x8xf32>
    %126 = math.exp %125 : vector<2x8x8xf32>
    %cst_47 = arith.constant dense<0.000000e+00> : vector<2x8xf32>
    %127 = vector.multi_reduction <add>, %126, %cst_47 [2] : vector<2x8x8xf32> to vector<2x8xf32>
    %128 = vector.shape_cast %127 : vector<2x8xf32> to vector<2x8x1xf32>
    %129 = tpu.reciprocal %128 : vector<2x8x1xf32> -> vector<2x8x1xf32>
    %130 = vector.broadcast %129 : vector<2x8x1xf32> to vector<2x8x8xf32>
    %131 = arith.mulf %126, %130 : vector<2x8x8xf32>
    %132 = vector.extract_strided_slice %54 {offsets = [0, 0, 24], sizes = [2, 8, 8], strides = [1, 1, 1]} : vector<2x8x32xf32> to vector<2x8x8xf32>
    "tpu.trace_start"() <{level = 10 : i32, message = "bqk,bkd->bqd"}> : () -> ()
    %cst_48 = arith.constant dense<0.000000e+00> : vector<2x8x8xf32>
    %133 = tpu.matmul %131, %132, %cst_48 {dimension_numbers = #tpu.dot_dimension_numbers<[2], [1], [1], [2], [0, 0, 0, 1, 1, 2], [0], [0]>} : vector<2x8x8xf32>, vector<2x8x8xf32>, vector<2x8x8xf32> -> vector<2x8x8xf32>
    "tpu.trace_stop"() : () -> ()
    %134 = vector.shape_cast %133 : vector<2x8x8xf32> to vector<16x8xf32>
    %135 = vector.extract_strided_slice %41 {offsets = [24, 0], sizes = [8, 32], strides = [1, 1]} : vector<32x32xf32> to vector<8x32xf32>
    %cst_49 = arith.constant dense<0.000000e+00> : vector<16x32xf32>
    %136 = tpu.matmul %134, %135, %cst_49 {dimension_numbers = #tpu.dot_dimension_numbers<[1], [0], [0], [1], [0, 0, 1, 1], [], []>} : vector<16x8xf32>, vector<8x32xf32>, vector<16x32xf32> -> vector<16x32xf32>
    %137 = arith.addf %116, %136 : vector<16x32xf32>
    %138 = vector.extract_strided_slice %39 {offsets = [0, 0], sizes = [1, 32], strides = [1, 1]} : vector<6x32xf32> to vector<1x32xf32>
    %139 = vector.broadcast %138 : vector<1x32xf32> to vector<16x32xf32>
    %140 = arith.addf %137, %139 : vector<16x32xf32>
    %141 = arith.addf %37, %140 : vector<16x32xf32>
    %142 = vector.extract_strided_slice %39 {offsets = [1, 0], sizes = [1, 32], strides = [1, 1]} : vector<6x32xf32> to vector<1x32xf32>
    %143 = vector.extract_strided_slice %39 {offsets = [2, 0], sizes = [1, 32], strides = [1, 1]} : vector<6x32xf32> to vector<1x32xf32>
    %cst_50 = arith.constant dense<0.000000e+00> : vector<16xf32>
    %144 = vector.multi_reduction <add>, %141, %cst_50 [1] : vector<16x32xf32> to vector<16xf32>
    %145 = vector.shape_cast %144 : vector<16xf32> to vector<16x1xf32>
    %cst_51 = arith.constant 3.200000e+01 : f32
    %146 = vector.broadcast %cst_51 : f32 to vector<16x1xf32>
    %147 = arith.divf %145, %146 : vector<16x1xf32>
    %148 = arith.mulf %141, %141 : vector<16x32xf32>
    %cst_52 = arith.constant dense<0.000000e+00> : vector<16xf32>
    %149 = vector.multi_reduction <add>, %148, %cst_52 [1] : vector<16x32xf32> to vector<16xf32>
    %150 = vector.shape_cast %149 : vector<16xf32> to vector<16x1xf32>
    %cst_53 = arith.constant 3.200000e+01 : f32
    %151 = vector.broadcast %cst_53 : f32 to vector<16x1xf32>
    %152 = arith.divf %150, %151 : vector<16x1xf32>
    %153 = arith.mulf %147, %147 : vector<16x1xf32>
    %154 = arith.subf %152, %153 : vector<16x1xf32>
    %155 = vector.broadcast %147 : vector<16x1xf32> to vector<16x32xf32>
    %156 = arith.subf %141, %155 : vector<16x32xf32>
    %cst_54 = arith.constant 9.99999996E-13 : f32
    %157 = vector.broadcast %cst_54 : f32 to vector<16x1xf32>
    %158 = arith.addf %154, %157 : vector<16x1xf32>
    %159 = math.rsqrt %158 : vector<16x1xf32>
    %160 = vector.broadcast %159 : vector<16x1xf32> to vector<16x32xf32>
    %161 = arith.mulf %156, %160 : vector<16x32xf32>
    %162 = vector.broadcast %142 : vector<1x32xf32> to vector<16x32xf32>
    %163 = arith.mulf %161, %162 : vector<16x32xf32>
    %164 = vector.broadcast %143 : vector<1x32xf32> to vector<16x32xf32>
    %165 = arith.addf %163, %164 : vector<16x32xf32>
    %c0_55 = arith.constant 0 : index
    %c0_56 = arith.constant 0 : index
    %c0_57 = arith.constant 0 : index
    %166 = vector.load %arg7[%c0_55, %c0_56, %c0_57] : memref<2x32x64xf32, #tpu.memory_space<vmem>>, vector<1x32x64xf32>
    %167 = vector.shape_cast %166 : vector<1x32x64xf32> to vector<32x64xf32>
    %cst_58 = arith.constant dense<0.000000e+00> : vector<16x64xf32>
    %168 = tpu.matmul %165, %167, %cst_58 {dimension_numbers = #tpu.dot_dimension_numbers<[1], [0], [0], [1], [0, 0, 1, 1], [], []>} : vector<16x32xf32>, vector<32x64xf32>, vector<16x64xf32> -> vector<16x64xf32>
    %c0_59 = arith.constant 0 : index
    %c0_60 = arith.constant 0 : index
    %c0_61 = arith.constant 0 : index
    %169 = vector.load %arg10[%c0_59, %c0_60, %c0_61] : memref<2x1x64xf32, #tpu.memory_space<vmem>>, vector<1x1x64xf32>
    %170 = vector.shape_cast %169 : vector<1x1x64xf32> to vector<1x64xf32>
    %171 = vector.broadcast %170 : vector<1x64xf32> to vector<16x64xf32>
    %172 = arith.addf %168, %171 : vector<16x64xf32>
    %173 = arith.mulf %172, %172 : vector<16x64xf32>
    %174 = arith.mulf %172, %173 : vector<16x64xf32>
    %cst_62 = arith.constant 4.471500e-02 : f32
    %175 = vector.broadcast %cst_62 : f32 to vector<16x64xf32>
    %176 = arith.mulf %175, %174 : vector<16x64xf32>
    %177 = arith.addf %172, %176 : vector<16x64xf32>
    %cst_63 = arith.constant 0.797884583 : f32
    %178 = vector.broadcast %cst_63 : f32 to vector<16x64xf32>
    %179 = arith.mulf %178, %177 : vector<16x64xf32>
    %180 = math.tanh %179 : vector<16x64xf32>
    %cst_64 = arith.constant 1.000000e+00 : f32
    %181 = vector.broadcast %cst_64 : f32 to vector<16x64xf32>
    %182 = arith.addf %181, %180 : vector<16x64xf32>
    %cst_65 = arith.constant 5.000000e-01 : f32
    %183 = vector.broadcast %cst_65 : f32 to vector<16x64xf32>
    %184 = arith.mulf %183, %182 : vector<16x64xf32>
    %185 = arith.mulf %172, %184 : vector<16x64xf32>
    %c0_66 = arith.constant 0 : index
    %c0_67 = arith.constant 0 : index
    %c0_68 = arith.constant 0 : index
    %186 = vector.load %arg8[%c0_66, %c0_67, %c0_68] : memref<2x64x32xf32, #tpu.memory_space<vmem>>, vector<1x64x32xf32>
    %187 = vector.shape_cast %186 : vector<1x64x32xf32> to vector<64x32xf32>
    %cst_69 = arith.constant dense<0.000000e+00> : vector<16x32xf32>
    %188 = tpu.matmul %185, %187, %cst_69 {dimension_numbers = #tpu.dot_dimension_numbers<[1], [0], [0], [1], [0, 0, 1, 1], [], []>} : vector<16x64xf32>, vector<64x32xf32>, vector<16x32xf32> -> vector<16x32xf32>
    %189 = vector.extract_strided_slice %39 {offsets = [3, 0], sizes = [1, 32], strides = [1, 1]} : vector<6x32xf32> to vector<1x32xf32>
    %190 = vector.broadcast %189 : vector<1x32xf32> to vector<16x32xf32>
    %191 = arith.addf %188, %190 : vector<16x32xf32>
    %192 = arith.addf %165, %191 : vector<16x32xf32>
    %193 = vector.extract_strided_slice %39 {offsets = [4, 0], sizes = [1, 32], strides = [1, 1]} : vector<6x32xf32> to vector<1x32xf32>
    %194 = vector.extract_strided_slice %39 {offsets = [5, 0], sizes = [1, 32], strides = [1, 1]} : vector<6x32xf32> to vector<1x32xf32>
    %cst_70 = arith.constant dense<0.000000e+00> : vector<16xf32>
    %195 = vector.multi_reduction <add>, %192, %cst_70 [1] : vector<16x32xf32> to vector<16xf32>
    %196 = vector.shape_cast %195 : vector<16xf32> to vector<16x1xf32>
    %cst_71 = arith.constant 3.200000e+01 : f32
    %197 = vector.broadcast %cst_71 : f32 to vector<16x1xf32>
    %198 = arith.divf %196, %197 : vector<16x1xf32>
    %199 = arith.mulf %192, %192 : vector<16x32xf32>
    %cst_72 = arith.constant dense<0.000000e+00> : vector<16xf32>
    %200 = vector.multi_reduction <add>, %199, %cst_72 [1] : vector<16x32xf32> to vector<16xf32>
    %201 = vector.shape_cast %200 : vector<16xf32> to vector<16x1xf32>
    %cst_73 = arith.constant 3.200000e+01 : f32
    %202 = vector.broadcast %cst_73 : f32 to vector<16x1xf32>
    %203 = arith.divf %201, %202 : vector<16x1xf32>
    %204 = arith.mulf %198, %198 : vector<16x1xf32>
    %205 = arith.subf %203, %204 : vector<16x1xf32>
    %206 = vector.broadcast %198 : vector<16x1xf32> to vector<16x32xf32>
    %207 = arith.subf %192, %206 : vector<16x32xf32>
    %cst_74 = arith.constant 9.99999996E-13 : f32
    %208 = vector.broadcast %cst_74 : f32 to vector<16x1xf32>
    %209 = arith.addf %205, %208 : vector<16x1xf32>
    %210 = math.rsqrt %209 : vector<16x1xf32>
    %211 = vector.broadcast %210 : vector<16x1xf32> to vector<16x32xf32>
    %212 = arith.mulf %207, %211 : vector<16x32xf32>
    %213 = vector.broadcast %193 : vector<1x32xf32> to vector<16x32xf32>
    %214 = arith.mulf %212, %213 : vector<16x32xf32>
    %215 = vector.broadcast %194 : vector<1x32xf32> to vector<16x32xf32>
    %216 = arith.addf %214, %215 : vector<16x32xf32>
    %c1_75 = arith.constant 1 : index
    %c0_76 = arith.constant 0 : index
    %c0_77 = arith.constant 0 : index
    %217 = vector.load %arg9[%c1_75, %c0_76, %c0_77] : memref<2x6x32xf32, #tpu.memory_space<vmem>>, vector<1x6x32xf32>
    %218 = vector.shape_cast %217 : vector<1x6x32xf32> to vector<6x32xf32>
    %c1_78 = arith.constant 1 : index
    %c0_79 = arith.constant 0 : index
    %c0_80 = arith.constant 0 : index
    %219 = vector.load %arg6[%c1_78, %c0_79, %c0_80] : memref<2x32x32xf32, #tpu.memory_space<vmem>>, vector<1x32x32xf32>
    %220 = vector.shape_cast %219 : vector<1x32x32xf32> to vector<32x32xf32>
    %c1_81 = arith.constant 1 : index
    %c0_82 = arith.constant 0 : index
    %c0_83 = arith.constant 0 : index
    %221 = vector.load %arg4[%c1_81, %c0_82, %c0_83] : memref<2x32x384xf32, #tpu.memory_space<vmem>>, vector<1x32x384xf32>
    %222 = vector.shape_cast %221 : vector<1x32x384xf32> to vector<32x384xf32>
    %cst_84 = arith.constant dense<0.000000e+00> : vector<16x384xf32>
    %223 = tpu.matmul %216, %222, %cst_84 {dimension_numbers = #tpu.dot_dimension_numbers<[1], [0], [0], [1], [0, 0, 1, 1], [], []>} : vector<16x32xf32>, vector<32x384xf32>, vector<16x384xf32> -> vector<16x384xf32>
    %c1_85 = arith.constant 1 : index
    %c0_86 = arith.constant 0 : index
    %c0_87 = arith.constant 0 : index
    %224 = vector.load %arg5[%c1_85, %c0_86, %c0_87] : memref<2x1x384xf32, #tpu.memory_space<vmem>>, vector<1x1x384xf32>
    %225 = vector.shape_cast %224 : vector<1x1x384xf32> to vector<1x384xf32>
    %226 = vector.broadcast %225 : vector<1x384xf32> to vector<16x384xf32>
    %227 = arith.addf %223, %226 : vector<16x384xf32>
    %228 = vector.extract_strided_slice %227 {offsets = [0, 0], sizes = [16, 32], strides = [1, 1]} : vector<16x384xf32> to vector<16x32xf32>
    %229 = vector.shape_cast %228 : vector<16x32xf32> to vector<2x8x32xf32>
    %230 = vector.extract_strided_slice %227 {offsets = [0, 128], sizes = [16, 32], strides = [1, 1]} : vector<16x384xf32> to vector<16x32xf32>
    %231 = vector.shape_cast %230 : vector<16x32xf32> to vector<2x8x32xf32>
    %232 = vector.extract_strided_slice %227 {offsets = [0, 256], sizes = [16, 32], strides = [1, 1]} : vector<16x384xf32> to vector<16x32xf32>
    %233 = vector.shape_cast %232 : vector<16x32xf32> to vector<2x8x32xf32>
    %234 = vector.extract_strided_slice %229 {offsets = [0, 0, 0], sizes = [2, 8, 8], strides = [1, 1, 1]} : vector<2x8x32xf32> to vector<2x8x8xf32>
    %235 = vector.extract_strided_slice %231 {offsets = [0, 0, 0], sizes = [2, 8, 8], strides = [1, 1, 1]} : vector<2x8x32xf32> to vector<2x8x8xf32>
    "tpu.trace_start"() <{level = 10 : i32, message = "bqd,bkd->bqk"}> : () -> ()
    %cst_88 = arith.constant dense<0.000000e+00> : vector<2x8x8xf32>
    %236 = tpu.matmul %234, %235, %cst_88 {dimension_numbers = #tpu.dot_dimension_numbers<[2], [2], [1], [1], [0, 0, 0, 1, 1, 1], [0], [0]>} : vector<2x8x8xf32>, vector<2x8x8xf32>, vector<2x8x8xf32> -> vector<2x8x8xf32>
    "tpu.trace_stop"() : () -> ()
    %cst_89 = arith.constant 0.353553385 : f32
    %237 = vector.broadcast %cst_89 : f32 to vector<2x8x8xf32>
    %238 = arith.mulf %236, %237 : vector<2x8x8xf32>
    %cst_90 = arith.constant dense<0xFF800000> : vector<2x8xf32>
    %239 = vector.multi_reduction <maximumf>, %238, %cst_90 [2] : vector<2x8x8xf32> to vector<2x8xf32>
    %240 = vector.shape_cast %239 : vector<2x8xf32> to vector<2x8x1xf32>
    %241 = vector.broadcast %240 : vector<2x8x1xf32> to vector<2x8x8xf32>
    %242 = arith.subf %238, %241 : vector<2x8x8xf32>
    %243 = math.exp %242 : vector<2x8x8xf32>
    %cst_91 = arith.constant dense<0.000000e+00> : vector<2x8xf32>
    %244 = vector.multi_reduction <add>, %243, %cst_91 [2] : vector<2x8x8xf32> to vector<2x8xf32>
    %245 = vector.shape_cast %244 : vector<2x8xf32> to vector<2x8x1xf32>
    %246 = tpu.reciprocal %245 : vector<2x8x1xf32> -> vector<2x8x1xf32>
    %247 = vector.broadcast %246 : vector<2x8x1xf32> to vector<2x8x8xf32>
    %248 = arith.mulf %243, %247 : vector<2x8x8xf32>
    %249 = vector.extract_strided_slice %233 {offsets = [0, 0, 0], sizes = [2, 8, 8], strides = [1, 1, 1]} : vector<2x8x32xf32> to vector<2x8x8xf32>
    "tpu.trace_start"() <{level = 10 : i32, message = "bqk,bkd->bqd"}> : () -> ()
    %cst_92 = arith.constant dense<0.000000e+00> : vector<2x8x8xf32>
    %250 = tpu.matmul %248, %249, %cst_92 {dimension_numbers = #tpu.dot_dimension_numbers<[2], [1], [1], [2], [0, 0, 0, 1, 1, 2], [0], [0]>} : vector<2x8x8xf32>, vector<2x8x8xf32>, vector<2x8x8xf32> -> vector<2x8x8xf32>
    "tpu.trace_stop"() : () -> ()
    %251 = vector.shape_cast %250 : vector<2x8x8xf32> to vector<16x8xf32>
    %252 = vector.extract_strided_slice %220 {offsets = [0, 0], sizes = [8, 32], strides = [1, 1]} : vector<32x32xf32> to vector<8x32xf32>
    %cst_93 = arith.constant dense<0.000000e+00> : vector<16x32xf32>
    %253 = tpu.matmul %251, %252, %cst_93 {dimension_numbers = #tpu.dot_dimension_numbers<[1], [0], [0], [1], [0, 0, 1, 1], [], []>} : vector<16x8xf32>, vector<8x32xf32>, vector<16x32xf32> -> vector<16x32xf32>
    %254 = vector.extract_strided_slice %229 {offsets = [0, 0, 8], sizes = [2, 8, 8], strides = [1, 1, 1]} : vector<2x8x32xf32> to vector<2x8x8xf32>
    %255 = vector.extract_strided_slice %231 {offsets = [0, 0, 8], sizes = [2, 8, 8], strides = [1, 1, 1]} : vector<2x8x32xf32> to vector<2x8x8xf32>
    "tpu.trace_start"() <{level = 10 : i32, message = "bqd,bkd->bqk"}> : () -> ()
    %cst_94 = arith.constant dense<0.000000e+00> : vector<2x8x8xf32>
    %256 = tpu.matmul %254, %255, %cst_94 {dimension_numbers = #tpu.dot_dimension_numbers<[2], [2], [1], [1], [0, 0, 0, 1, 1, 1], [0], [0]>} : vector<2x8x8xf32>, vector<2x8x8xf32>, vector<2x8x8xf32> -> vector<2x8x8xf32>
    "tpu.trace_stop"() : () -> ()
    %cst_95 = arith.constant 0.353553385 : f32
    %257 = vector.broadcast %cst_95 : f32 to vector<2x8x8xf32>
    %258 = arith.mulf %256, %257 : vector<2x8x8xf32>
    %cst_96 = arith.constant dense<0xFF800000> : vector<2x8xf32>
    %259 = vector.multi_reduction <maximumf>, %258, %cst_96 [2] : vector<2x8x8xf32> to vector<2x8xf32>
    %260 = vector.shape_cast %259 : vector<2x8xf32> to vector<2x8x1xf32>
    %261 = vector.broadcast %260 : vector<2x8x1xf32> to vector<2x8x8xf32>
    %262 = arith.subf %258, %261 : vector<2x8x8xf32>
    %263 = math.exp %262 : vector<2x8x8xf32>
    %cst_97 = arith.constant dense<0.000000e+00> : vector<2x8xf32>
    %264 = vector.multi_reduction <add>, %263, %cst_97 [2] : vector<2x8x8xf32> to vector<2x8xf32>
    %265 = vector.shape_cast %264 : vector<2x8xf32> to vector<2x8x1xf32>
    %266 = tpu.reciprocal %265 : vector<2x8x1xf32> -> vector<2x8x1xf32>
    %267 = vector.broadcast %266 : vector<2x8x1xf32> to vector<2x8x8xf32>
    %268 = arith.mulf %263, %267 : vector<2x8x8xf32>
    %269 = vector.extract_strided_slice %233 {offsets = [0, 0, 8], sizes = [2, 8, 8], strides = [1, 1, 1]} : vector<2x8x32xf32> to vector<2x8x8xf32>
    "tpu.trace_start"() <{level = 10 : i32, message = "bqk,bkd->bqd"}> : () -> ()
    %cst_98 = arith.constant dense<0.000000e+00> : vector<2x8x8xf32>
    %270 = tpu.matmul %268, %269, %cst_98 {dimension_numbers = #tpu.dot_dimension_numbers<[2], [1], [1], [2], [0, 0, 0, 1, 1, 2], [0], [0]>} : vector<2x8x8xf32>, vector<2x8x8xf32>, vector<2x8x8xf32> -> vector<2x8x8xf32>
    "tpu.trace_stop"() : () -> ()
    %271 = vector.shape_cast %270 : vector<2x8x8xf32> to vector<16x8xf32>
    %272 = vector.extract_strided_slice %220 {offsets = [8, 0], sizes = [8, 32], strides = [1, 1]} : vector<32x32xf32> to vector<8x32xf32>
    %cst_99 = arith.constant dense<0.000000e+00> : vector<16x32xf32>
    %273 = tpu.matmul %271, %272, %cst_99 {dimension_numbers = #tpu.dot_dimension_numbers<[1], [0], [0], [1], [0, 0, 1, 1], [], []>} : vector<16x8xf32>, vector<8x32xf32>, vector<16x32xf32> -> vector<16x32xf32>
    %274 = arith.addf %253, %273 : vector<16x32xf32>
    %275 = vector.extract_strided_slice %229 {offsets = [0, 0, 16], sizes = [2, 8, 8], strides = [1, 1, 1]} : vector<2x8x32xf32> to vector<2x8x8xf32>
    %276 = vector.extract_strided_slice %231 {offsets = [0, 0, 16], sizes = [2, 8, 8], strides = [1, 1, 1]} : vector<2x8x32xf32> to vector<2x8x8xf32>
    "tpu.trace_start"() <{level = 10 : i32, message = "bqd,bkd->bqk"}> : () -> ()
    %cst_100 = arith.constant dense<0.000000e+00> : vector<2x8x8xf32>
    %277 = tpu.matmul %275, %276, %cst_100 {dimension_numbers = #tpu.dot_dimension_numbers<[2], [2], [1], [1], [0, 0, 0, 1, 1, 1], [0], [0]>} : vector<2x8x8xf32>, vector<2x8x8xf32>, vector<2x8x8xf32> -> vector<2x8x8xf32>
    "tpu.trace_stop"() : () -> ()
    %cst_101 = arith.constant 0.353553385 : f32
    %278 = vector.broadcast %cst_101 : f32 to vector<2x8x8xf32>
    %279 = arith.mulf %277, %278 : vector<2x8x8xf32>
    %cst_102 = arith.constant dense<0xFF800000> : vector<2x8xf32>
    %280 = vector.multi_reduction <maximumf>, %279, %cst_102 [2] : vector<2x8x8xf32> to vector<2x8xf32>
    %281 = vector.shape_cast %280 : vector<2x8xf32> to vector<2x8x1xf32>
    %282 = vector.broadcast %281 : vector<2x8x1xf32> to vector<2x8x8xf32>
    %283 = arith.subf %279, %282 : vector<2x8x8xf32>
    %284 = math.exp %283 : vector<2x8x8xf32>
    %cst_103 = arith.constant dense<0.000000e+00> : vector<2x8xf32>
    %285 = vector.multi_reduction <add>, %284, %cst_103 [2] : vector<2x8x8xf32> to vector<2x8xf32>
    %286 = vector.shape_cast %285 : vector<2x8xf32> to vector<2x8x1xf32>
    %287 = tpu.reciprocal %286 : vector<2x8x1xf32> -> vector<2x8x1xf32>
    %288 = vector.broadcast %287 : vector<2x8x1xf32> to vector<2x8x8xf32>
    %289 = arith.mulf %284, %288 : vector<2x8x8xf32>
    %290 = vector.extract_strided_slice %233 {offsets = [0, 0, 16], sizes = [2, 8, 8], strides = [1, 1, 1]} : vector<2x8x32xf32> to vector<2x8x8xf32>
    "tpu.trace_start"() <{level = 10 : i32, message = "bqk,bkd->bqd"}> : () -> ()
    %cst_104 = arith.constant dense<0.000000e+00> : vector<2x8x8xf32>
    %291 = tpu.matmul %289, %290, %cst_104 {dimension_numbers = #tpu.dot_dimension_numbers<[2], [1], [1], [2], [0, 0, 0, 1, 1, 2], [0], [0]>} : vector<2x8x8xf32>, vector<2x8x8xf32>, vector<2x8x8xf32> -> vector<2x8x8xf32>
    "tpu.trace_stop"() : () -> ()
    %292 = vector.shape_cast %291 : vector<2x8x8xf32> to vector<16x8xf32>
    %293 = vector.extract_strided_slice %220 {offsets = [16, 0], sizes = [8, 32], strides = [1, 1]} : vector<32x32xf32> to vector<8x32xf32>
    %cst_105 = arith.constant dense<0.000000e+00> : vector<16x32xf32>
    %294 = tpu.matmul %292, %293, %cst_105 {dimension_numbers = #tpu.dot_dimension_numbers<[1], [0], [0], [1], [0, 0, 1, 1], [], []>} : vector<16x8xf32>, vector<8x32xf32>, vector<16x32xf32> -> vector<16x32xf32>
    %295 = arith.addf %274, %294 : vector<16x32xf32>
    %296 = vector.extract_strided_slice %229 {offsets = [0, 0, 24], sizes = [2, 8, 8], strides = [1, 1, 1]} : vector<2x8x32xf32> to vector<2x8x8xf32>
    %297 = vector.extract_strided_slice %231 {offsets = [0, 0, 24], sizes = [2, 8, 8], strides = [1, 1, 1]} : vector<2x8x32xf32> to vector<2x8x8xf32>
    "tpu.trace_start"() <{level = 10 : i32, message = "bqd,bkd->bqk"}> : () -> ()
    %cst_106 = arith.constant dense<0.000000e+00> : vector<2x8x8xf32>
    %298 = tpu.matmul %296, %297, %cst_106 {dimension_numbers = #tpu.dot_dimension_numbers<[2], [2], [1], [1], [0, 0, 0, 1, 1, 1], [0], [0]>} : vector<2x8x8xf32>, vector<2x8x8xf32>, vector<2x8x8xf32> -> vector<2x8x8xf32>
    "tpu.trace_stop"() : () -> ()
    %cst_107 = arith.constant 0.353553385 : f32
    %299 = vector.broadcast %cst_107 : f32 to vector<2x8x8xf32>
    %300 = arith.mulf %298, %299 : vector<2x8x8xf32>
    %cst_108 = arith.constant dense<0xFF800000> : vector<2x8xf32>
    %301 = vector.multi_reduction <maximumf>, %300, %cst_108 [2] : vector<2x8x8xf32> to vector<2x8xf32>
    %302 = vector.shape_cast %301 : vector<2x8xf32> to vector<2x8x1xf32>
    %303 = vector.broadcast %302 : vector<2x8x1xf32> to vector<2x8x8xf32>
    %304 = arith.subf %300, %303 : vector<2x8x8xf32>
    %305 = math.exp %304 : vector<2x8x8xf32>
    %cst_109 = arith.constant dense<0.000000e+00> : vector<2x8xf32>
    %306 = vector.multi_reduction <add>, %305, %cst_109 [2] : vector<2x8x8xf32> to vector<2x8xf32>
    %307 = vector.shape_cast %306 : vector<2x8xf32> to vector<2x8x1xf32>
    %308 = tpu.reciprocal %307 : vector<2x8x1xf32> -> vector<2x8x1xf32>
    %309 = vector.broadcast %308 : vector<2x8x1xf32> to vector<2x8x8xf32>
    %310 = arith.mulf %305, %309 : vector<2x8x8xf32>
    %311 = vector.extract_strided_slice %233 {offsets = [0, 0, 24], sizes = [2, 8, 8], strides = [1, 1, 1]} : vector<2x8x32xf32> to vector<2x8x8xf32>
    "tpu.trace_start"() <{level = 10 : i32, message = "bqk,bkd->bqd"}> : () -> ()
    %cst_110 = arith.constant dense<0.000000e+00> : vector<2x8x8xf32>
    %312 = tpu.matmul %310, %311, %cst_110 {dimension_numbers = #tpu.dot_dimension_numbers<[2], [1], [1], [2], [0, 0, 0, 1, 1, 2], [0], [0]>} : vector<2x8x8xf32>, vector<2x8x8xf32>, vector<2x8x8xf32> -> vector<2x8x8xf32>
    "tpu.trace_stop"() : () -> ()
    %313 = vector.shape_cast %312 : vector<2x8x8xf32> to vector<16x8xf32>
    %314 = vector.extract_strided_slice %220 {offsets = [24, 0], sizes = [8, 32], strides = [1, 1]} : vector<32x32xf32> to vector<8x32xf32>
    %cst_111 = arith.constant dense<0.000000e+00> : vector<16x32xf32>
    %315 = tpu.matmul %313, %314, %cst_111 {dimension_numbers = #tpu.dot_dimension_numbers<[1], [0], [0], [1], [0, 0, 1, 1], [], []>} : vector<16x8xf32>, vector<8x32xf32>, vector<16x32xf32> -> vector<16x32xf32>
    %316 = arith.addf %295, %315 : vector<16x32xf32>
    %317 = vector.extract_strided_slice %218 {offsets = [0, 0], sizes = [1, 32], strides = [1, 1]} : vector<6x32xf32> to vector<1x32xf32>
    %318 = vector.broadcast %317 : vector<1x32xf32> to vector<16x32xf32>
    %319 = arith.addf %316, %318 : vector<16x32xf32>
    %320 = arith.addf %216, %319 : vector<16x32xf32>
    %321 = vector.extract_strided_slice %218 {offsets = [1, 0], sizes = [1, 32], strides = [1, 1]} : vector<6x32xf32> to vector<1x32xf32>
    %322 = vector.extract_strided_slice %218 {offsets = [2, 0], sizes = [1, 32], strides = [1, 1]} : vector<6x32xf32> to vector<1x32xf32>
    %cst_112 = arith.constant dense<0.000000e+00> : vector<16xf32>
    %323 = vector.multi_reduction <add>, %320, %cst_112 [1] : vector<16x32xf32> to vector<16xf32>
    %324 = vector.shape_cast %323 : vector<16xf32> to vector<16x1xf32>
    %cst_113 = arith.constant 3.200000e+01 : f32
    %325 = vector.broadcast %cst_113 : f32 to vector<16x1xf32>
    %326 = arith.divf %324, %325 : vector<16x1xf32>
    %327 = arith.mulf %320, %320 : vector<16x32xf32>
    %cst_114 = arith.constant dense<0.000000e+00> : vector<16xf32>
    %328 = vector.multi_reduction <add>, %327, %cst_114 [1] : vector<16x32xf32> to vector<16xf32>
    %329 = vector.shape_cast %328 : vector<16xf32> to vector<16x1xf32>
    %cst_115 = arith.constant 3.200000e+01 : f32
    %330 = vector.broadcast %cst_115 : f32 to vector<16x1xf32>
    %331 = arith.divf %329, %330 : vector<16x1xf32>
    %332 = arith.mulf %326, %326 : vector<16x1xf32>
    %333 = arith.subf %331, %332 : vector<16x1xf32>
    %334 = vector.broadcast %326 : vector<16x1xf32> to vector<16x32xf32>
    %335 = arith.subf %320, %334 : vector<16x32xf32>
    %cst_116 = arith.constant 9.99999996E-13 : f32
    %336 = vector.broadcast %cst_116 : f32 to vector<16x1xf32>
    %337 = arith.addf %333, %336 : vector<16x1xf32>
    %338 = math.rsqrt %337 : vector<16x1xf32>
    %339 = vector.broadcast %338 : vector<16x1xf32> to vector<16x32xf32>
    %340 = arith.mulf %335, %339 : vector<16x32xf32>
    %341 = vector.broadcast %321 : vector<1x32xf32> to vector<16x32xf32>
    %342 = arith.mulf %340, %341 : vector<16x32xf32>
    %343 = vector.broadcast %322 : vector<1x32xf32> to vector<16x32xf32>
    %344 = arith.addf %342, %343 : vector<16x32xf32>
    %c1_117 = arith.constant 1 : index
    %c0_118 = arith.constant 0 : index
    %c0_119 = arith.constant 0 : index
    %345 = vector.load %arg7[%c1_117, %c0_118, %c0_119] : memref<2x32x64xf32, #tpu.memory_space<vmem>>, vector<1x32x64xf32>
    %346 = vector.shape_cast %345 : vector<1x32x64xf32> to vector<32x64xf32>
    %cst_120 = arith.constant dense<0.000000e+00> : vector<16x64xf32>
    %347 = tpu.matmul %344, %346, %cst_120 {dimension_numbers = #tpu.dot_dimension_numbers<[1], [0], [0], [1], [0, 0, 1, 1], [], []>} : vector<16x32xf32>, vector<32x64xf32>, vector<16x64xf32> -> vector<16x64xf32>
    %c1_121 = arith.constant 1 : index
    %c0_122 = arith.constant 0 : index
    %c0_123 = arith.constant 0 : index
    %348 = vector.load %arg10[%c1_121, %c0_122, %c0_123] : memref<2x1x64xf32, #tpu.memory_space<vmem>>, vector<1x1x64xf32>
    %349 = vector.shape_cast %348 : vector<1x1x64xf32> to vector<1x64xf32>
    %350 = vector.broadcast %349 : vector<1x64xf32> to vector<16x64xf32>
    %351 = arith.addf %347, %350 : vector<16x64xf32>
    %352 = arith.mulf %351, %351 : vector<16x64xf32>
    %353 = arith.mulf %351, %352 : vector<16x64xf32>
    %cst_124 = arith.constant 4.471500e-02 : f32
    %354 = vector.broadcast %cst_124 : f32 to vector<16x64xf32>
    %355 = arith.mulf %354, %353 : vector<16x64xf32>
    %356 = arith.addf %351, %355 : vector<16x64xf32>
    %cst_125 = arith.constant 0.797884583 : f32
    %357 = vector.broadcast %cst_125 : f32 to vector<16x64xf32>
    %358 = arith.mulf %357, %356 : vector<16x64xf32>
    %359 = math.tanh %358 : vector<16x64xf32>
    %cst_126 = arith.constant 1.000000e+00 : f32
    %360 = vector.broadcast %cst_126 : f32 to vector<16x64xf32>
    %361 = arith.addf %360, %359 : vector<16x64xf32>
    %cst_127 = arith.constant 5.000000e-01 : f32
    %362 = vector.broadcast %cst_127 : f32 to vector<16x64xf32>
    %363 = arith.mulf %362, %361 : vector<16x64xf32>
    %364 = arith.mulf %351, %363 : vector<16x64xf32>
    %c1_128 = arith.constant 1 : index
    %c0_129 = arith.constant 0 : index
    %c0_130 = arith.constant 0 : index
    %365 = vector.load %arg8[%c1_128, %c0_129, %c0_130] : memref<2x64x32xf32, #tpu.memory_space<vmem>>, vector<1x64x32xf32>
    %366 = vector.shape_cast %365 : vector<1x64x32xf32> to vector<64x32xf32>
    %cst_131 = arith.constant dense<0.000000e+00> : vector<16x32xf32>
    %367 = tpu.matmul %364, %366, %cst_131 {dimension_numbers = #tpu.dot_dimension_numbers<[1], [0], [0], [1], [0, 0, 1, 1], [], []>} : vector<16x64xf32>, vector<64x32xf32>, vector<16x32xf32> -> vector<16x32xf32>
    %368 = vector.extract_strided_slice %218 {offsets = [3, 0], sizes = [1, 32], strides = [1, 1]} : vector<6x32xf32> to vector<1x32xf32>
    %369 = vector.broadcast %368 : vector<1x32xf32> to vector<16x32xf32>
    %370 = arith.addf %367, %369 : vector<16x32xf32>
    %371 = arith.addf %344, %370 : vector<16x32xf32>
    %372 = vector.extract_strided_slice %218 {offsets = [4, 0], sizes = [1, 32], strides = [1, 1]} : vector<6x32xf32> to vector<1x32xf32>
    %373 = vector.extract_strided_slice %218 {offsets = [5, 0], sizes = [1, 32], strides = [1, 1]} : vector<6x32xf32> to vector<1x32xf32>
    %cst_132 = arith.constant dense<0.000000e+00> : vector<16xf32>
    %374 = vector.multi_reduction <add>, %371, %cst_132 [1] : vector<16x32xf32> to vector<16xf32>
    %375 = vector.shape_cast %374 : vector<16xf32> to vector<16x1xf32>
    %cst_133 = arith.constant 3.200000e+01 : f32
    %376 = vector.broadcast %cst_133 : f32 to vector<16x1xf32>
    %377 = arith.divf %375, %376 : vector<16x1xf32>
    %378 = arith.mulf %371, %371 : vector<16x32xf32>
    %cst_134 = arith.constant dense<0.000000e+00> : vector<16xf32>
    %379 = vector.multi_reduction <add>, %378, %cst_134 [1] : vector<16x32xf32> to vector<16xf32>
    %380 = vector.shape_cast %379 : vector<16xf32> to vector<16x1xf32>
    %cst_135 = arith.constant 3.200000e+01 : f32
    %381 = vector.broadcast %cst_135 : f32 to vector<16x1xf32>
    %382 = arith.divf %380, %381 : vector<16x1xf32>
    %383 = arith.mulf %377, %377 : vector<16x1xf32>
    %384 = arith.subf %382, %383 : vector<16x1xf32>
    %385 = vector.broadcast %377 : vector<16x1xf32> to vector<16x32xf32>
    %386 = arith.subf %371, %385 : vector<16x32xf32>
    %cst_136 = arith.constant 9.99999996E-13 : f32
    %387 = vector.broadcast %cst_136 : f32 to vector<16x1xf32>
    %388 = arith.addf %384, %387 : vector<16x1xf32>
    %389 = math.rsqrt %388 : vector<16x1xf32>
    %390 = vector.broadcast %389 : vector<16x1xf32> to vector<16x32xf32>
    %391 = arith.mulf %386, %390 : vector<16x32xf32>
    %392 = vector.broadcast %372 : vector<1x32xf32> to vector<16x32xf32>
    %393 = arith.mulf %391, %392 : vector<16x32xf32>
    %394 = vector.broadcast %373 : vector<1x32xf32> to vector<16x32xf32>
    %395 = arith.addf %393, %394 : vector<16x32xf32>
    %396 = vector.shape_cast %395 : vector<16x32xf32> to vector<2x8x32xf32>
    %cst_137 = arith.constant dense<0.000000e+00> : vector<2x32xf32>
    %397 = vector.multi_reduction <add>, %396, %cst_137 [1] : vector<2x8x32xf32> to vector<2x32xf32>
    %cst_138 = arith.constant 8.000000e+00 : f32
    %398 = vector.broadcast %cst_138 : f32 to vector<2x32xf32>
    %399 = arith.divf %397, %398 : vector<2x32xf32>
    %c0_139 = arith.constant 0 : index
    %c0_140 = arith.constant 0 : index
    %400 = vector.load %arg11[%c0_139, %c0_140] : memref<2x32xf32, #tpu.memory_space<vmem>>, vector<2x32xf32>
    tpu.vector_store %arg11[%c0_139, %c0_140], %399 {strides = array<i32>} : memref<2x32xf32, #tpu.memory_space<vmem>>, vector<2x32xf32>,
    return
  }
}

</mosaic_0001>

<llo_original>
// kernel: sentence_encoder_forward.1
$region0: #{sentence_encoder_forward.1}
  #allocation0 [shape = 'u32[]', space=smem, size = 0x4, offset = 0x4, fixed_abs, tag = 'smem constant byte address 0x4 - core index']
  #allocation1 [shape = 'u32[144,128]{1,0:T(1,128)}', space=vmem, size = 0x12000, scoped, tag = 'internal scratch']
  %s0 = inlined_call_operand.vmem [shape: s32[16,1], index: 0, kind: input, shape index: {}]
  %s1 = inlined_call_operand.vmem [shape: f32[128,32], index: 1, kind: input, shape index: {}]
  %s2 = inlined_call_operand.vmem [shape: f32[8,32], index: 2, kind: input, shape index: {}]
  %s3 = inlined_call_operand.vmem [shape: f32[2,32], index: 3, kind: input, shape index: {}]
  %s4 = inlined_call_operand.vmem [shape: f32[2,32,384], index: 4, kind: input, shape index: {}]
  %s5 = inlined_call_operand.vmem [shape: f32[2,1,384], index: 5, kind: input, shape index: {}]
  %s6 = inlined_call_operand.vmem [shape: f32[2,32,32], index: 6, kind: input, shape index: {}]
  %s7 = inlined_call_operand.vmem [shape: f32[2,32,64], index: 7, kind: input, shape index: {}]
  %s8 = inlined_call_operand.vmem [shape: f32[2,64,32], index: 8, kind: input, shape index: {}]
  %s9 = inlined_call_operand.vmem [shape: f32[2,6,32], index: 9, kind: input, shape index: {}]
  %s10 = inlined_call_operand.vmem [shape: f32[2,1,64], index: 10, kind: input, shape index: {}]
  %s11 = inlined_call_operand.hbm [shape: f32[2,32], index: 11, kind: output, shape index: {}]
  %s12 = sld [smem:[#allocation0]]
  $region54: #{sentence_encoder_forward.1} parent=0
    _
  %s14 = ssub.s32 1, %s12
  %s15 = scalar_select 0, %s14, %s12
  $region1: #{sentence_encoder_forward.1} parent=0
    #allocation2 [shape = 'u8[1024]{0}', space=vmem, size = 0x400, scoped, tag = 'output window, operand 0, single buffered']
    #allocation3 [shape = 's32[1]{0}', space=sflag, size = 0x4, scoped, tag = 'scoped memory for sentence_encoder_forward.1']
    %16 = vsyncpa [#allocation3], 0
    // Predicated region
    $region2: #{sentence_encoder_forward.1} parent=1 // pred_check
      _
    $region3: #{sentence_encoder_forward.1} parent=1 // pred_check_branch
      %18 = sbr.rel (0) target = $region5
    $region4: #{sentence_encoder_forward.1} parent=1 // pred_region
      _
    $region5: #{sentence_encoder_forward.1} parent=1 // pred_fallthru
      _
    // Predicated region
    $region6: #{sentence_encoder_forward.1} parent=1 // pred_check
      _
    $region7: #{sentence_encoder_forward.1} parent=1 // pred_check_branch
      %20 = sbr.rel (0) target = $region9
    $region8: #{sentence_encoder_forward.1} parent=1 // pred_region
      _
    $region9: #{sentence_encoder_forward.1} parent=1 // pred_fallthru
      _
    // Predicated region
    $region10: #{sentence_encoder_forward.1} parent=1 // pred_check
      _
    $region11: #{sentence_encoder_forward.1} parent=1 // pred_check_branch
      %22 = sbr.rel (0) target = $region13
    $region12: #{sentence_encoder_forward.1} parent=1 // pred_region
      _
    $region13: #{sentence_encoder_forward.1} parent=1 // pred_fallthru
      _
    // Predicated region
    $region14: #{sentence_encoder_forward.1} parent=1 // pred_check
      _
    $region15: #{sentence_encoder_forward.1} parent=1 // pred_check_branch
      %24 = sbr.rel (0) target = $region17
    $region16: #{sentence_encoder_forward.1} parent=1 // pred_region
      _
    $region17: #{sentence_encoder_forward.1} parent=1 // pred_fallthru
      _
    // Predicated region
    $region18: #{sentence_encoder_forward.1} parent=1 // pred_check
      _
    $region19: #{sentence_encoder_forward.1} parent=1 // pred_check_branch
      %26 = sbr.rel (0) target = $region21
    $region20: #{sentence_encoder_forward.1} parent=1 // pred_region
      _
    $region21: #{sentence_encoder_forward.1} parent=1 // pred_fallthru
      _
    // Predicated region
    $region22: #{sentence_encoder_forward.1} parent=1 // pred_check
      _
    $region23: #{sentence_encoder_forward.1} parent=1 // pred_check_branch
      %28 = sbr.rel (0) target = $region25
    $region24: #{sentence_encoder_forward.1} parent=1 // pred_region
      _
    $region25: #{sentence_encoder_forward.1} parent=1 // pred_fallthru
      _
    // Predicated region
    $region26: #{sentence_encoder_forward.1} parent=1 // pred_check
      _
    $region27: #{sentence_encoder_forward.1} parent=1 // pred_check_branch
      %30 = sbr.rel (0) target = $region29
    $region28: #{sentence_encoder_forward.1} parent=1 // pred_region
      _
    $region29: #{sentence_encoder_forward.1} parent=1 // pred_fallthru
      _
    // Predicated region
    $region30: #{sentence_encoder_forward.1} parent=1 // pred_check
      _
    $region31: #{sentence_encoder_forward.1} parent=1 // pred_check_branch
      %32 = sbr.rel (0) target = $region33
    $region32: #{sentence_encoder_forward.1} parent=1 // pred_region
      _
    $region33: #{sentence_encoder_forward.1} parent=1 // pred_fallthru
      _
    // Predicated region
    $region34: #{sentence_encoder_forward.1} parent=1 // pred_check
      _
    $region35: #{sentence_encoder_forward.1} parent=1 // pred_check_branch
      %34 = sbr.rel (0) target = $region37
    $region36: #{sentence_encoder_forward.1} parent=1 // pred_region
      _
    $region37: #{sentence_encoder_forward.1} parent=1 // pred_fallthru
      _
    // Predicated region
    $region38: #{sentence_encoder_forward.1} parent=1 // pred_check
      _
    $region39: #{sentence_encoder_forward.1} parent=1 // pred_check_branch
      %36 = sbr.rel (0) target = $region41
    $region40: #{sentence_encoder_forward.1} parent=1 // pred_region
      _
    $region41: #{sentence_encoder_forward.1} parent=1 // pred_fallthru
      _
    // Predicated region
    $region42: #{sentence_encoder_forward.1} parent=1 // pred_check
      _
    $region43: #{sentence_encoder_forward.1} parent=1 // pred_check_branch
      %38 = sbr.rel (0) target = $region45
    $region44: #{sentence_encoder_forward.1} parent=1 // pred_region
      _
    $region45: #{sentence_encoder_forward.1} parent=1 // pred_fallthru
      _
    %v39 = vld [vmem:[%s0] sm:$0xff]
    %v40 = vld [vmem:[%s0 + $0x8] sm:$0xff]
    %v41 = vlaneseq
    %v42 = vand.u32 %v41, 127
    %43 = vset.pattern.permute.xlu0 0
    %44 = vperm.xlu0 %43, %v39
    %v45 = vpop.permute.xlu0 %44
    %46 = vset.pattern.permute.xlu0 0
    %47 = vperm.xlu0 %46, %v40
    %v48 = vpop.permute.xlu0 %47
    %vm49 = vcmp.eq.s32.totalorder %v45, %v42
    %vm50 = vcmp.eq.s32.totalorder %v48, %v42
    %v51 = vsel %vm49, 1, 0
    %v52 = vsel %vm50, 1, 0
    %v53 = vcvt.s32.f32 %v51
    %v54 = vcvt.s32.f32 %v52
    %v55 = vld [vmem:[%s1] sm:$0xff]
    %v56 = vld [vmem:[%s1 + $0x8] sm:$0xff]
    %v57 = vld [vmem:[%s1 + $0x10] sm:$0xff]
    %v58 = vld [vmem:[%s1 + $0x18] sm:$0xff]
    %v59 = vld [vmem:[%s1 + $0x20] sm:$0xff]
    %v60 = vld [vmem:[%s1 + $0x28] sm:$0xff]
    %v61 = vld [vmem:[%s1 + $0x30] sm:$0xff]
    %v62 = vld [vmem:[%s1 + $0x38] sm:$0xff]
    %v63 = vld [vmem:[%s1 + $0x40] sm:$0xff]
    %v64 = vld [vmem:[%s1 + $0x48] sm:$0xff]
    %v65 = vld [vmem:[%s1 + $0x50] sm:$0xff]
    %v66 = vld [vmem:[%s1 + $0x58] sm:$0xff]
    %v67 = vld [vmem:[%s1 + $0x60] sm:$0xff]
    %v68 = vld [vmem:[%s1 + $0x68] sm:$0xff]
    %v69 = vld [vmem:[%s1 + $0x70] sm:$0xff]
    %v70 = vld [vmem:[%s1 + $0x78] sm:$0xff]
    %71 = vmatprep.subr.mxu0 0.0
    %72 = vmatpush1.msra.mxu0 %v55
    %73 = vmatprep.subr.mxu0 0.0
    %74 = vmatpush1.msra.mxu0 %v56
    %75 = vmatprep.subr.mxu0 0.0
    %76 = vmatpush1.msra.mxu0 %v57
    %77 = vmatprep.subr.mxu0 0.0
    %78 = vmatpush1.msra.mxu0 %v58
    %79 = vmatprep.subr.mxu0 0.0
    %80 = vmatpush1.msra.mxu0 %v59
    %81 = vmatprep.subr.mxu0 0.0
    %82 = vmatpush1.msra.mxu0 %v60
    %83 = vmatprep.subr.mxu0 0.0
    %84 = vmatpush1.msra.mxu0 %v61
    %85 = vmatprep.subr.mxu0 0.0
    %86 = vmatpush1.msra.mxu0 %v62
    %87 = vmatprep.subr.mxu0 0.0
    %88 = vmatpush1.msra.mxu0 %v63
    %89 = vmatprep.subr.mxu0 0.0
    %90 = vmatpush1.msra.mxu0 %v64
    %91 = vmatprep.subr.mxu0 0.0
    %92 = vmatpush1.msra.mxu0 %v65
    %93 = vmatprep.subr.mxu0 0.0
    %94 = vmatpush1.msra.mxu0 %v66
    %95 = vmatprep.subr.mxu0 0.0
    %96 = vmatpush1.msra.mxu0 %v67
    %97 = vmatprep.subr.mxu0 0.0
    %98 = vmatpush1.msra.mxu0 %v68
    %99 = vmatprep.subr.mxu0 0.0
    %100 = vmatpush1.msra.mxu0 %v69
    %101 = vmatprep.subr.mxu0 0.0
    %102 = vmatpush1.msra.mxu0 %v70
    %103 = vmatprep.subr.mxu0 0.0
    %104 = vmatpush1.msra.mxu0 0.0
    %105 = vmatprep.subr.mxu0 0.0
    %106 = vmatpush1.msra.mxu0 0.0
    %107 = vmatprep.subr.mxu0 0.0
    %108 = vmatpush1.msra.mxu0 0.0
    %109 = vmatprep.subr.mxu0 0.0
    %110 = vmatpush1.msra.mxu0 0.0
    %111 = vmatprep.subr.mxu0 0.0
    %112 = vmatpush1.msra.mxu0 0.0
    %113 = vmatprep.subr.mxu0 0.0
    %114 = vmatpush1.msra.mxu0 0.0
    %115 = vmatprep.subr.mxu0 0.0
    %116 = vmatpush1.msra.mxu0 0.0
    %117 = vmatprep.subr.mxu0 0.0
    %118 = vmatpush1.msra.mxu0 0.0
    %119 = vmatprep.subr.mxu0 0.0
    %120 = vmatpush1.msra.mxu0 0.0
    %121 = vmatprep.subr.mxu0 0.0
    %122 = vmatpush1.msra.mxu0 0.0
    %123 = vmatprep.subr.mxu0 0.0
    %124 = vmatpush1.msra.mxu0 0.0
    %125 = vmatprep.subr.mxu0 0.0
    %126 = vmatpush1.msra.mxu0 0.0
    %127 = vmatprep.subr.mxu0 0.0
    %128 = vmatpush1.msra.mxu0 0.0
    %129 = vmatprep.subr.mxu0 0.0
    %130 = vmatpush1.msra.mxu0 0.0
    %131 = vmatprep.subr.mxu0 0.0
    %132 = vmatpush1.msra.mxu0 0.0
    %133 = vmatprep.subr.mxu0 0.0
    %134 = vmatpush1.msra.mxu0 0.0
    %135 = vmatprep.mubr.f32.mxu0 0.0
    %136 = vmatmul.mubr.f32.gmra.mrb[0].mxu0 %v53
    %v137 = vpop.f32.mrb[0].mxu0
    %v138 = vadd.f32 0.0, %v137
    %v139 = vpop.f32.mrb[0].mxu0
    %140 = vmatprep.mubr.f32.mxu0 0.0
    %141 = vmatmul.mubr.f32.gmra.mrb[0].mxu0 %v54
    %v142 = vpop.f32.mrb[0].mxu0
    %v143 = vadd.f32 0.0, %v142
    %v144 = vpop.f32.mrb[0].mxu0
    %145 = vdwg.mxu0
    %v146 = vld [vmem:[%s2] sm:$0xff]
    %v147 = vadd.f32 %v138, %v146
    %v148 = vadd.f32 %v143, %v146
    %v149 = vld [vmem:[%s3] sm:$0x1]
    %v150 = vld [vmem:[%s3 + $0x1] sm:$0x1]
    %vm151 = vcmask 261120
    %v152 = vsel %vm151, %v147, 0.0
    %153 = vadd.xlane.f32.xlu0 %v152
    %v154 = vpop.xlane.xlu0 %153
    %v155 = vsel %vm151, %v148, 0.0
    %156 = vadd.xlane.f32.xlu0 %v155
    %v157 = vpop.xlane.xlu0 %156
    %v158 = vrcp.pop 32.0
    %v159 = vmul.f32 %v154, %v158
    %v160 = vmul.f32 %v157, %v158
    %v161 = vmul.f32 %v147, %v147
    %v162 = vmul.f32 %v148, %v148
    %v163 = vsel %vm151, %v161, 0.0
    %164 = vadd.xlane.f32.xlu0 %v163
    %v165 = vpop.xlane.xlu0 %164
    %v166 = vsel %vm151, %v162, 0.0
    %167 = vadd.xlane.f32.xlu0 %v166
    %v168 = vpop.xlane.xlu0 %167
    %v169 = vmul.f32 %v165, %v158
    %v170 = vmul.f32 %v168, %v158
    %v171 = vmul.f32 %v159, %v159
    %v172 = vmul.f32 %v160, %v160
    %v173 = vsub.f32 %v169, %v171
    %v174 = vsub.f32 %v170, %v172
    %v175 = vsub.f32 %v147, %v159
    %v176 = vsub.f32 %v148, %v160
    %v177 = vadd.f32 %v173, 1e-12
    %v178 = vadd.f32 %v174, 1e-12
    %v179 = vrsqrt.pop %v177
    %v180 = vrsqrt.pop %v178
    %v181 = vmul.f32 %v175, %v179
    %v182 = vmul.f32 %v176, %v180
    %v183 = vlaneseq
    %v184 = vshrl.u32 %v183, 7
    %v185 = vsub.s32 0, %v184
    %v186 = vrot.slane %v149, %v185
    %v187 = vmul.f32 %v181, %v186
    %v188 = vmul.f32 %v182, %v186
    %v189 = vlaneseq
    %v190 = vshrl.u32 %v189, 7
    %v191 = vsub.s32 0, %v190
    %v192 = vrot.slane %v150, %v191
    %v193 = vadd.f32 %v187, %v192
    %v194 = vadd.f32 %v188, %v192
    %v195 = vld [vmem:[%s9] sm:$0x3f]
    %v196 = vld [vmem:[%s6] sm:$0xff]
    %v197 = vld [vmem:[%s6 + $0x8] sm:$0xff]
    %v198 = vld [vmem:[%s6 + $0x10] sm:$0xff]
    %v199 = vld [vmem:[%s6 + $0x18] sm:$0xff]
    %v200 = vld [vmem:[%s4] sm:$0xff]
    %v201 = vld [vmem:[%s4 + $0x8] sm:$0xff]
    %v202 = vld [vmem:[%s4 + $0x10] sm:$0xff]
    %v203 = vld [vmem:[%s4 + $0x18] sm:$0xff]
    %v204 = vld [vmem:[%s4 + $0x20] sm:$0xff]
    %v205 = vld [vmem:[%s4 + $0x28] sm:$0xff]
    %v206 = vld [vmem:[%s4 + $0x30] sm:$0xff]
    %v207 = vld [vmem:[%s4 + $0x38] sm:$0xff]
    %v208 = vld [vmem:[%s4 + $0x40] sm:$0xff]
    %v209 = vld [vmem:[%s4 + $0x48] sm:$0xff]
    %v210 = vld [vmem:[%s4 + $0x50] sm:$0xff]
    %v211 = vld [vmem:[%s4 + $0x58] sm:$0xff]
    %v212 = vld [vmem:[%s5] sm:$0x7]
    %v214 = vlaneseq
    %v215 = vshrl.u32 %v214, 7
    %v216 = vsub.s32 0, %v215
    %v217 = vrot.slane %v212, %v216
    %v218 = vlaneseq
    %v219 = vshrl.u32 %v218, 7
    %v220 = vsub.s32 1, %v219
    %v221 = vrot.slane %v212, %v220
    %v222 = vlaneseq
    %v223 = vshrl.u32 %v222, 7
    %v224 = vsub.s32 2, %v223
    %v225 = vrot.slane %v212, %v224
    %v230 = vsel %vm151, %v193, 0
    %v233 = vsel %vm151, %v194, 0
    %235 = vmatprep.subr.mxu0 %v201
    %236 = vmatpush1.msra.mxu0 %v200
    %237 = vmatprep.subr.mxu0 %v204
    %238 = vmatpush1.msra.mxu0 %v203
    %239 = vmatprep.subr.mxu0 %v207
    %240 = vmatpush1.msra.mxu0 %v206
    %241 = vmatprep.subr.mxu0 %v210
    %242 = vmatpush1.msra.mxu0 %v209
    %243 = vmatprep.subr.mxu0 0.0
    %244 = vmatpush1.msra.mxu0 0.0
    %245 = vmatprep.subr.mxu0 0.0
    %246 = vmatpush1.msra.mxu0 0.0
    %247 = vmatprep.subr.mxu0 0.0
    %248 = vmatpush1.msra.mxu0 0.0
    %249 = vmatprep.subr.mxu0 0.0
    %250 = vmatpush1.msra.mxu0 0.0
    %251 = vmatprep.subr.mxu0 0.0
    %252 = vmatpush1.msra.mxu0 0.0
    %253 = vmatprep.subr.mxu0 0.0
    %254 = vmatpush1.msra.mxu0 0.0
    %255 = vmatprep.subr.mxu0 0.0
    %256 = vmatpush1.msra.mxu0 0.0
    %257 = vmatprep.subr.mxu0 0.0
    %258 = vmatpush1.msra.mxu0 0.0
    %259 = vmatprep.subr.mxu0 0.0
    %260 = vmatpush1.msra.mxu0 0.0
    %261 = vmatprep.subr.mxu0 0.0
    %262 = vmatpush1.msra.mxu0 0.0
    %263 = vmatprep.subr.mxu0 0.0
    %264 = vmatpush1.msra.mxu0 0.0
    %265 = vmatprep.subr.mxu0 0.0
    %266 = vmatpush1.msra.mxu0 0.0
    %267 = vmatprep.subr.mxu0 0.0
    %268 = vmatpush1.msra.mxu0 0.0
    %269 = vmatprep.subr.mxu0 0.0
    %270 = vmatpush1.msra.mxu0 0.0
    %271 = vmatprep.subr.mxu0 0.0
    %272 = vmatpush1.msra.mxu0 0.0
    %273 = vmatprep.subr.mxu0 0.0
    %274 = vmatpush1.msra.mxu0 0.0
    %275 = vmatprep.subr.mxu0 0.0
    %276 = vmatpush1.msra.mxu0 0.0
    %277 = vmatprep.subr.mxu0 0.0
    %278 = vmatpush1.msra.mxu0 0.0
    %279 = vmatprep.subr.mxu0 0.0
    %280 = vmatpush1.msra.mxu0 0.0
    %281 = vmatprep.subr.mxu0 0.0
    %282 = vmatpush1.msra.mxu0 0.0
    %283 = vmatprep.subr.mxu0 0.0
    %284 = vmatpush1.msra.mxu0 0.0
    %285 = vmatprep.subr.mxu0 0.0
    %286 = vmatpush1.msra.mxu0 0.0
    %287 = vmatprep.subr.mxu0 0.0
    %288 = vmatpush1.msra.mxu0 0.0
    %289 = vmatprep.subr.mxu0 0.0
    %290 = vmatpush1.msra.mxu0 0.0
    %291 = vmatprep.subr.mxu0 0.0
    %292 = vmatpush1.msra.mxu0 0.0
    %293 = vmatprep.subr.mxu0 0.0
    %294 = vmatpush1.msra.mxu0 0.0
    %295 = vmatprep.subr.mxu0 0.0
    %296 = vmatpush1.msra.mxu0 0.0
    %297 = vmatprep.subr.mxu0 0.0
    %298 = vmatpush1.msra.mxu0 0.0
    %299 = vmatprep.mubr.f32.mxu0 0.0
    %300 = vmatmul.mubr.f32.gmra.mrb[0].mxu0 %v230
    %v301 = vpop.f32.mrb[0].mxu0
    %v302 = vadd.f32 %v217, %v301
    %v303 = vpop.f32.mrb[0].mxu0
    %v304 = vadd.f32 %v221, %v303
    %305 = vmatprep.mubr.f32.mxu0 0.0
    %306 = vmatmul.mubr.f32.gmra.mrb[0].mxu0 %v233
    %v307 = vpop.f32.mrb[0].mxu0
    %v308 = vadd.f32 %v217, %v307
    %v309 = vpop.f32.mrb[0].mxu0
    %v310 = vadd.f32 %v221, %v309
    %311 = vdwg.mxu0
    %312 = vmatprep.subr.mxu0 0.0
    %313 = vmatpush1.msra.mxu0 %v202
    %314 = vmatprep.subr.mxu0 0.0
    %315 = vmatpush1.msra.mxu0 %v205
    %316 = vmatprep.subr.mxu0 0.0
    %317 = vmatpush1.msra.mxu0 %v208
    %318 = vmatprep.subr.mxu0 0.0
    %319 = vmatpush1.msra.mxu0 %v211
    %320 = vmatprep.subr.mxu0 0.0
    %321 = vmatpush1.msra.mxu0 0.0
    %322 = vmatprep.subr.mxu0 0.0
    %323 = vmatpush1.msra.mxu0 0.0
    %324 = vmatprep.subr.mxu0 0.0
    %325 = vmatpush1.msra.mxu0 0.0
    %326 = vmatprep.subr.mxu0 0.0
    %327 = vmatpush1.msra.mxu0 0.0
    %328 = vmatprep.subr.mxu0 0.0
    %329 = vmatpush1.msra.mxu0 0.0
    %330 = vmatprep.subr.mxu0 0.0
    %331 = vmatpush1.msra.mxu0 0.0
    %332 = vmatprep.subr.mxu0 0.0
    %333 = vmatpush1.msra.mxu0 0.0
    %334 = vmatprep.subr.mxu0 0.0
    %335 = vmatpush1.msra.mxu0 0.0
    %336 = vmatprep.subr.mxu0 0.0
    %337 = vmatpush1.msra.mxu0 0.0
    %338 = vmatprep.subr.mxu0 0.0
    %339 = vmatpush1.msra.mxu0 0.0
    %340 = vmatprep.subr.mxu0 0.0
    %341 = vmatpush1.msra.mxu0 0.0
    %342 = vmatprep.subr.mxu0 0.0
    %343 = vmatpush1.msra.mxu0 0.0
    %344 = vmatprep.subr.mxu0 0.0
    %345 = vmatpush1.msra.mxu0 0.0
    %346 = vmatprep.subr.mxu0 0.0
    %347 = vmatpush1.msra.mxu0 0.0
    %348 = vmatprep.subr.mxu0 0.0
    %349 = vmatpush1.msra.mxu0 0.0
    %350 = vmatprep.subr.mxu0 0.0
    %351 = vmatpush1.msra.mxu0 0.0
    %352 = vmatprep.subr.mxu0 0.0
    %353 = vmatpush1.msra.mxu0 0.0
    %354 = vmatprep.subr.mxu0 0.0
    %355 = vmatpush1.msra.mxu0 0.0
    %356 = vmatprep.subr.mxu0 0.0
    %357 = vmatpush1.msra.mxu0 0.0
    %358 = vmatprep.subr.mxu0 0.0
    %359 = vmatpush1.msra.mxu0 0.0
    %360 = vmatprep.subr.mxu0 0.0
    %361 = vmatpush1.msra.mxu0 0.0
    %362 = vmatprep.subr.mxu0 0.0
    %363 = vmatpush1.msra.mxu0 0.0
    %364 = vmatprep.subr.mxu0 0.0
    %365 = vmatpush1.msra.mxu0 0.0
    %366 = vmatprep.subr.mxu0 0.0
    %367 = vmatpush1.msra.mxu0 0.0
    %368 = vmatprep.subr.mxu0 0.0
    %369 = vmatpush1.msra.mxu0 0.0
    %370 = vmatprep.subr.mxu0 0.0
    %371 = vmatpush1.msra.mxu0 0.0
    %372 = vmatprep.subr.mxu0 0.0
    %373 = vmatpush1.msra.mxu0 0.0
    %374 = vmatprep.subr.mxu0 0.0
    %375 = vmatpush1.msra.mxu0 0.0
    %376 = vmatprep.mubr.f32.mxu0 0.0
    %377 = vmatmul.mubr.f32.gmra.mrb[0].mxu0 %v230
    %v378 = vpop.f32.mrb[0].mxu0
    %v379 = vadd.f32 %v225, %v378
    %v380 = vpop.f32.mrb[0].mxu0
    %381 = vmatprep.mubr.f32.mxu0 0.0
    %382 = vmatmul.mubr.f32.gmra.mrb[0].mxu0 %v233
    %v383 = vpop.f32.mrb[0].mxu0
    %v384 = vadd.f32 %v225, %v383
    %v385 = vpop.f32.mrb[0].mxu0
    %386 = vdwg.mxu0
    %vm387 = vcmask 64512
    %v389 = vsel %vm387, %v302, 0
    %v392 = vsel %vm387, %v304, 0
    %394 = vmatprep.subr.mxu0 0.0
    %395 = vmatpush1.xpose.msra.mxu0 %v392
    %396 = vmatprep.subr.mxu0 0.0
    %397 = vmatpush1.xpose.msra.mxu0 0.0
    %398 = vmatprep.subr.mxu0 0.0
    %399 = vmatpush1.xpose.msra.mxu0 0.0
    %400 = vmatprep.subr.mxu0 0.0
    %401 = vmatpush1.xpose.msra.mxu0 0.0
    %402 = vmatprep.subr.mxu0 0.0
    %403 = vmatpush1.xpose.msra.mxu0 0.0
    %404 = vmatprep.subr.mxu0 0.0
    %405 = vmatpush1.xpose.msra.mxu0 0.0
    %406 = vmatprep.subr.mxu0 0.0
    %407 = vmatpush1.xpose.msra.mxu0 0.0
    %408 = vmatprep.subr.mxu0 0.0
    %409 = vmatpush1.xpose.msra.mxu0 0.0
    %410 = vmatprep.subr.mxu0 0.0
    %411 = vmatpush1.xpose.msra.mxu0 0.0
    %412 = vmatprep.subr.mxu0 0.0
    %413 = vmatpush1.xpose.msra.mxu0 0.0
    %414 = vmatprep.subr.mxu0 0.0
    %415 = vmatpush1.xpose.msra.mxu0 0.0
    %416 = vmatprep.subr.mxu0 0.0
    %417 = vmatpush1.xpose.msra.mxu0 0.0
    %418 = vmatprep.subr.mxu0 0.0
    %419 = vmatpush1.xpose.msra.mxu0 0.0
    %420 = vmatprep.subr.mxu0 0.0
    %421 = vmatpush1.xpose.msra.mxu0 0.0
    %422 = vmatprep.subr.mxu0 0.0
    %423 = vmatpush1.xpose.msra.mxu0 0.0
    %424 = vmatprep.subr.mxu0 0.0
    %425 = vmatpush1.xpose.msra.mxu0 0.0
    %426 = vmatprep.subr.mxu0 0.0
    %427 = vmatpush1.xpose.msra.mxu0 0.0
    %428 = vmatprep.subr.mxu0 0.0
    %429 = vmatpush1.xpose.msra.mxu0 0.0
    %430 = vmatprep.subr.mxu0 0.0
    %431 = vmatpush1.xpose.msra.mxu0 0.0
    %432 = vmatprep.subr.mxu0 0.0
    %433 = vmatpush1.xpose.msra.mxu0 0.0
    %434 = vmatprep.subr.mxu0 0.0
    %435 = vmatpush1.xpose.msra.mxu0 0.0
    %436 = vmatprep.subr.mxu0 0.0
    %437 = vmatpush1.xpose.msra.mxu0 0.0
    %438 = vmatprep.subr.mxu0 0.0
    %439 = vmatpush1.xpose.msra.mxu0 0.0
    %440 = vmatprep.subr.mxu0 0.0
    %441 = vmatpush1.xpose.msra.mxu0 0.0
    %442 = vmatprep.subr.mxu0 0.0
    %443 = vmatpush1.xpose.msra.mxu0 0.0
    %444 = vmatprep.subr.mxu0 0.0
    %445 = vmatpush1.xpose.msra.mxu0 0.0
    %446 = vmatprep.subr.mxu0 0.0
    %447 = vmatpush1.xpose.msra.mxu0 0.0
    %448 = vmatprep.subr.mxu0 0.0
    %449 = vmatpush1.xpose.msra.mxu0 0.0
    %450 = vmatprep.subr.mxu0 0.0
    %451 = vmatpush1.xpose.msra.mxu0 0.0
    %452 = vmatprep.subr.mxu0 0.0
    %453 = vmatpush1.xpose.msra.mxu0 0.0
    %454 = vmatprep.subr.mxu0 0.0
    %455 = vmatpush1.xpose.msra.mxu0 0.0
    %456 = vmatprep.subr.mxu0 0.0
    %457 = vmatpush1.xpose.msra.mxu0 0.0
    %458 = vmatprep.mubr.f32.mxu0 0.0
    %459 = vmatmul.mubr.f32.gmra.mrb[0].mxu0 %v389
    %v460 = vpop.f32.mrb[0].mxu0
    %v461 = vadd.f32 0.0, %v460
    %v462 = vpop.f32.mrb[0].mxu0
    %463 = vdwg.mxu0
    %v465 = vsel %vm387, %v308, 0
    %v468 = vsel %vm387, %v310, 0
    %470 = vmatprep.subr.mxu0 0.0
    %471 = vmatpush1.xpose.msra.mxu0 %v468
    %472 = vmatprep.subr.mxu0 0.0
    %473 = vmatpush1.xpose.msra.mxu0 0.0
    %474 = vmatprep.subr.mxu0 0.0
    %475 = vmatpush1.xpose.msra.mxu0 0.0
    %476 = vmatprep.subr.mxu0 0.0
    %477 = vmatpush1.xpose.msra.mxu0 0.0
    %478 = vmatprep.subr.mxu0 0.0
    %479 = vmatpush1.xpose.msra.mxu0 0.0
    %480 = vmatprep.subr.mxu0 0.0
    %481 = vmatpush1.xpose.msra.mxu0 0.0
    %482 = vmatprep.subr.mxu0 0.0
    %483 = vmatpush1.xpose.msra.mxu0 0.0
    %484 = vmatprep.subr.mxu0 0.0
    %485 = vmatpush1.xpose.msra.mxu0 0.0
    %486 = vmatprep.subr.mxu0 0.0
    %487 = vmatpush1.xpose.msra.mxu0 0.0
    %488 = vmatprep.subr.mxu0 0.0
    %489 = vmatpush1.xpose.msra.mxu0 0.0
    %490 = vmatprep.subr.mxu0 0.0
    %491 = vmatpush1.xpose.msra.mxu0 0.0
    %492 = vmatprep.subr.mxu0 0.0
    %493 = vmatpush1.xpose.msra.mxu0 0.0
    %494 = vmatprep.subr.mxu0 0.0
    %495 = vmatpush1.xpose.msra.mxu0 0.0
    %496 = vmatprep.subr.mxu0 0.0
    %497 = vmatpush1.xpose.msra.mxu0 0.0
    %498 = vmatprep.subr.mxu0 0.0
    %499 = vmatpush1.xpose.msra.mxu0 0.0
    %500 = vmatprep.subr.mxu0 0.0
    %501 = vmatpush1.xpose.msra.mxu0 0.0
    %502 = vmatprep.subr.mxu0 0.0
    %503 = vmatpush1.xpose.msra.mxu0 0.0
    %504 = vmatprep.subr.mxu0 0.0
    %505 = vmatpush1.xpose.msra.mxu0 0.0
    %506 = vmatprep.subr.mxu0 0.0
    %507 = vmatpush1.xpose.msra.mxu0 0.0
    %508 = vmatprep.subr.mxu0 0.0
    %509 = vmatpush1.xpose.msra.mxu0 0.0
    %510 = vmatprep.subr.mxu0 0.0
    %511 = vmatpush1.xpose.msra.mxu0 0.0
    %512 = vmatprep.subr.mxu0 0.0
    %513 = vmatpush1.xpose.msra.mxu0 0.0
    %514 = vmatprep.subr.mxu0 0.0
    %515 = vmatpush1.xpose.msra.mxu0 0.0
    %516 = vmatprep.subr.mxu0 0.0
    %517 = vmatpush1.xpose.msra.mxu0 0.0
    %518 = vmatprep.subr.mxu0 0.0
    %519 = vmatpush1.xpose.msra.mxu0 0.0
    %520 = vmatprep.subr.mxu0 0.0
    %521 = vmatpush1.xpose.msra.mxu0 0.0
    %522 = vmatprep.subr.mxu0 0.0
    %523 = vmatpush1.xpose.msra.mxu0 0.0
    %524 = vmatprep.subr.mxu0 0.0
    %525 = vmatpush1.xpose.msra.mxu0 0.0
    %526 = vmatprep.subr.mxu0 0.0
    %527 = vmatpush1.xpose.msra.mxu0 0.0
    %528 = vmatprep.subr.mxu0 0.0
    %529 = vmatpush1.xpose.msra.mxu0 0.0
    %530 = vmatprep.subr.mxu0 0.0
    %531 = vmatpush1.xpose.msra.mxu0 0.0
    %532 = vmatprep.subr.mxu0 0.0
    %533 = vmatpush1.xpose.msra.mxu0 0.0
    %534 = vmatprep.mubr.f32.mxu0 0.0
    %535 = vmatmul.mubr.f32.gmra.mrb[0].mxu0 %v465
    %v536 = vpop.f32.mrb[0].mxu0
    %v537 = vadd.f32 0.0, %v536
    %v538 = vpop.f32.mrb[0].mxu0
    %539 = vdwg.mxu0
    %v540 = vmul.f32 %v461, 0.35355338
    %v541 = vmul.f32 %v537, 0.35355338
    %v542 = vsel %vm387, %v540, -inf
    %543 = vmax.xlane.f32.xlu0 %v542
    %v544 = vpop.xlane.xlu0 %543
    %v545 = vsel %vm387, %v541, -inf
    %546 = vmax.xlane.f32.xlu0 %v545
    %v547 = vpop.xlane.xlu0 %546
    %v548 = vsub.f32 %v540, %v544
    %v549 = vsub.f32 %v541, %v547
    %v550 = vmul.f32 %v548, 1.442695
    %v551 = vpow.pop %v550
    %v552 = vmul.f32 %v549, 1.442695
    %v553 = vpow.pop %v552
    %v554 = vsel %vm387, %v551, 0.0
    %555 = vadd.xlane.f32.xlu0 %v554
    %v556 = vpop.xlane.xlu0 %555
    %v557 = vsel %vm387, %v553, 0.0
    %558 = vadd.xlane.f32.xlu0 %v557
    %v559 = vpop.xlane.xlu0 %558
    %v560 = vrcp.pop %v556
    %v561 = vrcp.pop %v559
    %v562 = vmul.f32 %v551, %v560
    %v563 = vmul.f32 %v553, %v561
    %v565 = vsel %vm387, %v562, 0
    %567 = vmatprep.subr.mxu0 0.0
    %568 = vmatpush1.msra.mxu0 %v379
    %569 = vmatprep.subr.mxu0 0.0
    %570 = vmatpush1.msra.mxu0 0.0
    %571 = vmatprep.subr.mxu0 0.0
    %572 = vmatpush1.msra.mxu0 0.0
    %573 = vmatprep.subr.mxu0 0.0
    %574 = vmatpush1.msra.mxu0 0.0
    %575 = vmatprep.subr.mxu0 0.0
    %576 = vmatpush1.msra.mxu0 0.0
    %577 = vmatprep.subr.mxu0 0.0
    %578 = vmatpush1.msra.mxu0 0.0
    %579 = vmatprep.subr.mxu0 0.0
    %580 = vmatpush1.msra.mxu0 0.0
    %581 = vmatprep.subr.mxu0 0.0
    %582 = vmatpush1.msra.mxu0 0.0
    %583 = vmatprep.subr.mxu0 0.0
    %584 = vmatpush1.msra.mxu0 0.0
    %585 = vmatprep.subr.mxu0 0.0
    %586 = vmatpush1.msra.mxu0 0.0
    %587 = vmatprep.subr.mxu0 0.0
    %588 = vmatpush1.msra.mxu0 0.0
    %589 = vmatprep.subr.mxu0 0.0
    %590 = vmatpush1.msra.mxu0 0.0
    %591 = vmatprep.subr.mxu0 0.0
    %592 = vmatpush1.msra.mxu0 0.0
    %593 = vmatprep.subr.mxu0 0.0
    %594 = vmatpush1.msra.mxu0 0.0
    %595 = vmatprep.subr.mxu0 0.0
    %596 = vmatpush1.msra.mxu0 0.0
    %597 = vmatprep.subr.mxu0 0.0
    %598 = vmatpush1.msra.mxu0 0.0
    %599 = vmatprep.subr.mxu0 0.0
    %600 = vmatpush1.msra.mxu0 0.0
    %601 = vmatprep.subr.mxu0 0.0
    %602 = vmatpush1.msra.mxu0 0.0
    %603 = vmatprep.subr.mxu0 0.0
    %604 = vmatpush1.msra.mxu0 0.0
    %605 = vmatprep.subr.mxu0 0.0
    %606 = vmatpush1.msra.mxu0 0.0
    %607 = vmatprep.subr.mxu0 0.0
    %608 = vmatpush1.msra.mxu0 0.0
    %609 = vmatprep.subr.mxu0 0.0
    %610 = vmatpush1.msra.mxu0 0.0
    %611 = vmatprep.subr.mxu0 0.0
    %612 = vmatpush1.msra.mxu0 0.0
    %613 = vmatprep.subr.mxu0 0.0
    %614 = vmatpush1.msra.mxu0 0.0
    %615 = vmatprep.subr.mxu0 0.0
    %616 = vmatpush1.msra.mxu0 0.0
    %617 = vmatprep.subr.mxu0 0.0
    %618 = vmatpush1.msra.mxu0 0.0
    %619 = vmatprep.subr.mxu0 0.0
    %620 = vmatpush1.msra.mxu0 0.0
    %621 = vmatprep.subr.mxu0 0.0
    %622 = vmatpush1.msra.mxu0 0.0
    %623 = vmatprep.subr.mxu0 0.0
    %624 = vmatpush1.msra.mxu0 0.0
    %625 = vmatprep.subr.mxu0 0.0
    %626 = vmatpush1.msra.mxu0 0.0
    %627 = vmatprep.subr.mxu0 0.0
    %628 = vmatpush1.msra.mxu0 0.0
    %629 = vmatprep.subr.mxu0 0.0
    %630 = vmatpush1.msra.mxu0 0.0
    %631 = vmatprep.mubr.f32.mxu0 0.0
    %632 = vmatmul.mubr.f32.gmra.mrb[0].mxu0 %v565
    %v633 = vpop.f32.mrb[0].mxu0
    %v634 = vadd.f32 0.0, %v633
    %v635 = vpop.f32.mrb[0].mxu0
    %636 = vdwg.mxu0
    %v638 = vsel %vm387, %v563, 0
    %640 = vmatprep.subr.mxu0 0.0
    %641 = vmatpush1.msra.mxu0 %v384
    %642 = vmatprep.subr.mxu0 0.0
    %643 = vmatpush1.msra.mxu0 0.0
    %644 = vmatprep.subr.mxu0 0.0
    %645 = vmatpush1.msra.mxu0 0.0
    %646 = vmatprep.subr.mxu0 0.0
    %647 = vmatpush1.msra.mxu0 0.0
    %648 = vmatprep.subr.mxu0 0.0
    %649 = vmatpush1.msra.mxu0 0.0
    %650 = vmatprep.subr.mxu0 0.0
    %651 = vmatpush1.msra.mxu0 0.0
    %652 = vmatprep.subr.mxu0 0.0
    %653 = vmatpush1.msra.mxu0 0.0
    %654 = vmatprep.subr.mxu0 0.0
    %655 = vmatpush1.msra.mxu0 0.0
    %656 = vmatprep.subr.mxu0 0.0
    %657 = vmatpush1.msra.mxu0 0.0
    %658 = vmatprep.subr.mxu0 0.0
    %659 = vmatpush1.msra.mxu0 0.0
    %660 = vmatprep.subr.mxu0 0.0
    %661 = vmatpush1.msra.mxu0 0.0
    %662 = vmatprep.subr.mxu0 0.0
    %663 = vmatpush1.msra.mxu0 0.0
    %664 = vmatprep.subr.mxu0 0.0
    %665 = vmatpush1.msra.mxu0 0.0
    %666 = vmatprep.subr.mxu0 0.0
    %667 = vmatpush1.msra.mxu0 0.0
    %668 = vmatprep.subr.mxu0 0.0
    %669 = vmatpush1.msra.mxu0 0.0
    %670 = vmatprep.subr.mxu0 0.0
    %671 = vmatpush1.msra.mxu0 0.0
    %672 = vmatprep.subr.mxu0 0.0
    %673 = vmatpush1.msra.mxu0 0.0
    %674 = vmatprep.subr.mxu0 0.0
    %675 = vmatpush1.msra.mxu0 0.0
    %676 = vmatprep.subr.mxu0 0.0
    %677 = vmatpush1.msra.mxu0 0.0
    %678 = vmatprep.subr.mxu0 0.0
    %679 = vmatpush1.msra.mxu0 0.0
    %680 = vmatprep.subr.mxu0 0.0
    %681 = vmatpush1.msra.mxu0 0.0
    %682 = vmatprep.subr.mxu0 0.0
    %683 = vmatpush1.msra.mxu0 0.0
    %684 = vmatprep.subr.mxu0 0.0
    %685 = vmatpush1.msra.mxu0 0.0
    %686 = vmatprep.subr.mxu0 0.0
    %687 = vmatpush1.msra.mxu0 0.0
    %688 = vmatprep.subr.mxu0 0.0
    %689 = vmatpush1.msra.mxu0 0.0
    %690 = vmatprep.subr.mxu0 0.0
    %691 = vmatpush1.msra.mxu0 0.0
    %692 = vmatprep.subr.mxu0 0.0
    %693 = vmatpush1.msra.mxu0 0.0
    %694 = vmatprep.subr.mxu0 0.0
    %695 = vmatpush1.msra.mxu0 0.0
    %696 = vmatprep.subr.mxu0 0.0
    %697 = vmatpush1.msra.mxu0 0.0
    %698 = vmatprep.subr.mxu0 0.0
    %699 = vmatpush1.msra.mxu0 0.0
    %700 = vmatprep.subr.mxu0 0.0
    %701 = vmatpush1.msra.mxu0 0.0
    %702 = vmatprep.subr.mxu0 0.0
    %703 = vmatpush1.msra.mxu0 0.0
    %704 = vmatprep.mubr.f32.mxu0 0.0
    %705 = vmatmul.mubr.f32.gmra.mrb[0].mxu0 %v638
    %v706 = vpop.f32.mrb[0].mxu0
    %v707 = vadd.f32 0.0, %v706
    %v708 = vpop.f32.mrb[0].mxu0
    %709 = vdwg.mxu0
    %710 = vrot.lane.b32.xlu0 %v302, 120
    %v711 = vpop.permute.xlu0 %710
    %712 = vrot.lane.b32.xlu0 %v304, 120
    %v713 = vpop.permute.xlu0 %712
    %v714 = vsel %vm387, %v711, 0
    %v716 = vsel %vm387, %v713, 0
    %718 = vmatprep.subr.mxu0 0.0
    %719 = vmatpush1.xpose.msra.mxu0 %v716
    %720 = vmatprep.subr.mxu0 0.0
    %721 = vmatpush1.xpose.msra.mxu0 0.0
    %722 = vmatprep.subr.mxu0 0.0
    %723 = vmatpush1.xpose.msra.mxu0 0.0
    %724 = vmatprep.subr.mxu0 0.0
    %725 = vmatpush1.xpose.msra.mxu0 0.0
    %726 = vmatprep.subr.mxu0 0.0
    %727 = vmatpush1.xpose.msra.mxu0 0.0
    %728 = vmatprep.subr.mxu0 0.0
    %729 = vmatpush1.xpose.msra.mxu0 0.0
    %730 = vmatprep.subr.mxu0 0.0
    %731 = vmatpush1.xpose.msra.mxu0 0.0
    %732 = vmatprep.subr.mxu0 0.0
    %733 = vmatpush1.xpose.msra.mxu0 0.0
    %734 = vmatprep.subr.mxu0 0.0
    %735 = vmatpush1.xpose.msra.mxu0 0.0
    %736 = vmatprep.subr.mxu0 0.0
    %737 = vmatpush1.xpose.msra.mxu0 0.0
    %738 = vmatprep.subr.mxu0 0.0
    %739 = vmatpush1.xpose.msra.mxu0 0.0
    %740 = vmatprep.subr.mxu0 0.0
    %741 = vmatpush1.xpose.msra.mxu0 0.0
    %742 = vmatprep.subr.mxu0 0.0
    %743 = vmatpush1.xpose.msra.mxu0 0.0
    %744 = vmatprep.subr.mxu0 0.0
    %745 = vmatpush1.xpose.msra.mxu0 0.0
    %746 = vmatprep.subr.mxu0 0.0
    %747 = vmatpush1.xpose.msra.mxu0 0.0
    %748 = vmatprep.subr.mxu0 0.0
    %749 = vmatpush1.xpose.msra.mxu0 0.0
    %750 = vmatprep.subr.mxu0 0.0
    %751 = vmatpush1.xpose.msra.mxu0 0.0
    %752 = vmatprep.subr.mxu0 0.0
    %753 = vmatpush1.xpose.msra.mxu0 0.0
    %754 = vmatprep.subr.mxu0 0.0
    %755 = vmatpush1.xpose.msra.mxu0 0.0
    %756 = vmatprep.subr.mxu0 0.0
    %757 = vmatpush1.xpose.msra.mxu0 0.0
    %758 = vmatprep.subr.mxu0 0.0
    %759 = vmatpush1.xpose.msra.mxu0 0.0
    %760 = vmatprep.subr.mxu0 0.0
    %761 = vmatpush1.xpose.msra.mxu0 0.0
    %762 = vmatprep.subr.mxu0 0.0
    %763 = vmatpush1.xpose.msra.mxu0 0.0
    %764 = vmatprep.subr.mxu0 0.0
    %765 = vmatpush1.xpose.msra.mxu0 0.0
    %766 = vmatprep.subr.mxu0 0.0
    %767 = vmatpush1.xpose.msra.mxu0 0.0
    %768 = vmatprep.subr.mxu0 0.0
    %769 = vmatpush1.xpose.msra.mxu0 0.0
    %770 = vmatprep.subr.mxu0 0.0
    %771 = vmatpush1.xpose.msra.mxu0 0.0
    %772 = vmatprep.subr.mxu0 0.0
    %773 = vmatpush1.xpose.msra.mxu0 0.0
    %774 = vmatprep.subr.mxu0 0.0
    %775 = vmatpush1.xpose.msra.mxu0 0.0
    %776 = vmatprep.subr.mxu0 0.0
    %777 = vmatpush1.xpose.msra.mxu0 0.0
    %778 = vmatprep.subr.mxu0 0.0
    %779 = vmatpush1.xpose.msra.mxu0 0.0
    %780 = vmatprep.subr.mxu0 0.0
    %781 = vmatpush1.xpose.msra.mxu0 0.0
    %782 = vmatprep.mubr.f32.mxu0 0.0
    %783 = vmatmul.mubr.f32.gmra.mrb[0].mxu0 %v714
    %v784 = vpop.f32.mrb[0].mxu0
    %v785 = vadd.f32 0.0, %v784
    %v786 = vpop.f32.mrb[0].mxu0
    %787 = vdwg.mxu0
    %788 = vrot.lane.b32.xlu0 %v308, 120
    %v789 = vpop.permute.xlu0 %788
    %790 = vrot.lane.b32.xlu0 %v310, 120
    %v791 = vpop.permute.xlu0 %790
    %v792 = vsel %vm387, %v789, 0
    %v794 = vsel %vm387, %v791, 0
    %796 = vmatprep.subr.mxu0 0.0
    %797 = vmatpush1.xpose.msra.mxu0 %v794
    %798 = vmatprep.subr.mxu0 0.0
    %799 = vmatpush1.xpose.msra.mxu0 0.0
    %800 = vmatprep.subr.mxu0 0.0
    %801 = vmatpush1.xpose.msra.mxu0 0.0
    %802 = vmatprep.subr.mxu0 0.0
    %803 = vmatpush1.xpose.msra.mxu0 0.0
    %804 = vmatprep.subr.mxu0 0.0
    %805 = vmatpush1.xpose.msra.mxu0 0.0
    %806 = vmatprep.subr.mxu0 0.0
    %807 = vmatpush1.xpose.msra.mxu0 0.0
    %808 = vmatprep.subr.mxu0 0.0
    %809 = vmatpush1.xpose.msra.mxu0 0.0
    %810 = vmatprep.subr.mxu0 0.0
    %811 = vmatpush1.xpose.msra.mxu0 0.0
    %812 = vmatprep.subr.mxu0 0.0
    %813 = vmatpush1.xpose.msra.mxu0 0.0
    %814 = vmatprep.subr.mxu0 0.0
    %815 = vmatpush1.xpose.msra.mxu0 0.0
    %816 = vmatprep.subr.mxu0 0.0
    %817 = vmatpush1.xpose.msra.mxu0 0.0
    %818 = vmatprep.subr.mxu0 0.0
    %819 = vmatpush1.xpose.msra.mxu0 0.0
    %820 = vmatprep.subr.mxu0 0.0
    %821 = vmatpush1.xpose.msra.mxu0 0.0
    %822 = vmatprep.subr.mxu0 0.0
    %823 = vmatpush1.xpose.msra.mxu0 0.0
    %824 = vmatprep.subr.mxu0 0.0
    %825 = vmatpush1.xpose.msra.mxu0 0.0
    %826 = vmatprep.subr.mxu0 0.0
    %827 = vmatpush1.xpose.msra.mxu0 0.0
    %828 = vmatprep.subr.mxu0 0.0
    %829 = vmatpush1.xpose.msra.mxu0 0.0
    %830 = vmatprep.subr.mxu0 0.0
    %831 = vmatpush1.xpose.msra.mxu0 0.0
    %832 = vmatprep.subr.mxu0 0.0
    %833 = vmatpush1.xpose.msra.mxu0 0.0
    %834 = vmatprep.subr.mxu0 0.0
    %835 = vmatpush1.xpose.msra.mxu0 0.0
    %836 = vmatprep.subr.mxu0 0.0
    %837 = vmatpush1.xpose.msra.mxu0 0.0
    %838 = vmatprep.subr.mxu0 0.0
    %839 = vmatpush1.xpose.msra.mxu0 0.0
    %840 = vmatprep.subr.mxu0 0.0
    %841 = vmatpush1.xpose.msra.mxu0 0.0
    %842 = vmatprep.subr.mxu0 0.0
    %843 = vmatpush1.xpose.msra.mxu0 0.0
    %844 = vmatprep.subr.mxu0 0.0
    %845 = vmatpush1.xpose.msra.mxu0 0.0
    %846 = vmatprep.subr.mxu0 0.0
    %847 = vmatpush1.xpose.msra.mxu0 0.0
    %848 = vmatprep.subr.mxu0 0.0
    %849 = vmatpush1.xpose.msra.mxu0 0.0
    %850 = vmatprep.subr.mxu0 0.0
    %851 = vmatpush1.xpose.msra.mxu0 0.0
    %852 = vmatprep.subr.mxu0 0.0
    %853 = vmatpush1.xpose.msra.mxu0 0.0
    %854 = vmatprep.subr.mxu0 0.0
    %855 = vmatpush1.xpose.msra.mxu0 0.0
    %856 = vmatprep.subr.mxu0 0.0
    %857 = vmatpush1.xpose.msra.mxu0 0.0
    %858 = vmatprep.subr.mxu0 0.0
    %859 = vmatpush1.xpose.msra.mxu0 0.0
    %860 = vmatprep.mubr.f32.mxu0 0.0
    %861 = vmatmul.mubr.f32.gmra.mrb[0].mxu0 %v792
    %v862 = vpop.f32.mrb[0].mxu0
    %v863 = vadd.f32 0.0, %v862
    %v864 = vpop.f32.mrb[0].mxu0
    %865 = vdwg.mxu0
    %v866 = vmul.f32 %v785, 0.35355338
    %v867 = vmul.f32 %v863, 0.35355338
    %v868 = vsel %vm387, %v866, -inf
    %869 = vmax.xlane.f32.xlu0 %v868
    %v870 = vpop.xlane.xlu0 %869
    %v871 = vsel %vm387, %v867, -inf
    %872 = vmax.xlane.f32.xlu0 %v871
    %v873 = vpop.xlane.xlu0 %872
    %v874 = vsub.f32 %v866, %v870
    %v875 = vsub.f32 %v867, %v873
    %v876 = vmul.f32 %v874, 1.442695
    %v877 = vpow.pop %v876
    %v878 = vmul.f32 %v875, 1.442695
    %v879 = vpow.pop %v878
    %v880 = vsel %vm387, %v877, 0.0
    %881 = vadd.xlane.f32.xlu0 %v880
    %v882 = vpop.xlane.xlu0 %881
    %v883 = vsel %vm387, %v879, 0.0
    %884 = vadd.xlane.f32.xlu0 %v883
    %v885 = vpop.xlane.xlu0 %884
    %v886 = vrcp.pop %v882
    %v887 = vrcp.pop %v885
    %v888 = vmul.f32 %v877, %v886
    %v889 = vmul.f32 %v879, %v887
    %891 = vrot.lane.b32.xlu0 %v379, 120
    %v892 = vpop.permute.xlu0 %891
    %v895 = vsel %vm387, %v888, 0
    %897 = vmatprep.subr.mxu0 0.0
    %898 = vmatpush1.msra.mxu0 %v892
    %899 = vmatprep.subr.mxu0 0.0
    %900 = vmatpush1.msra.mxu0 0.0
    %901 = vmatprep.subr.mxu0 0.0
    %902 = vmatpush1.msra.mxu0 0.0
    %903 = vmatprep.subr.mxu0 0.0
    %904 = vmatpush1.msra.mxu0 0.0
    %905 = vmatprep.subr.mxu0 0.0
    %906 = vmatpush1.msra.mxu0 0.0
    %907 = vmatprep.subr.mxu0 0.0
    %908 = vmatpush1.msra.mxu0 0.0
    %909 = vmatprep.subr.mxu0 0.0
    %910 = vmatpush1.msra.mxu0 0.0
    %911 = vmatprep.subr.mxu0 0.0
    %912 = vmatpush1.msra.mxu0 0.0
    %913 = vmatprep.subr.mxu0 0.0
    %914 = vmatpush1.msra.mxu0 0.0
    %915 = vmatprep.subr.mxu0 0.0
    %916 = vmatpush1.msra.mxu0 0.0
    %917 = vmatprep.subr.mxu0 0.0
    %918 = vmatpush1.msra.mxu0 0.0
    %919 = vmatprep.subr.mxu0 0.0
    %920 = vmatpush1.msra.mxu0 0.0
    %921 = vmatprep.subr.mxu0 0.0
    %922 = vmatpush1.msra.mxu0 0.0
    %923 = vmatprep.subr.mxu0 0.0
    %924 = vmatpush1.msra.mxu0 0.0
    %925 = vmatprep.subr.mxu0 0.0
    %926 = vmatpush1.msra.mxu0 0.0
    %927 = vmatprep.subr.mxu0 0.0
    %928 = vmatpush1.msra.mxu0 0.0
    %929 = vmatprep.subr.mxu0 0.0
    %930 = vmatpush1.msra.mxu0 0.0
    %931 = vmatprep.subr.mxu0 0.0
    %932 = vmatpush1.msra.mxu0 0.0
    %933 = vmatprep.subr.mxu0 0.0
    %934 = vmatpush1.msra.mxu0 0.0
    %935 = vmatprep.subr.mxu0 0.0
    %936 = vmatpush1.msra.mxu0 0.0
    %937 = vmatprep.subr.mxu0 0.0
    %938 = vmatpush1.msra.mxu0 0.0
    %939 = vmatprep.subr.mxu0 0.0
    %940 = vmatpush1.msra.mxu0 0.0
    %941 = vmatprep.subr.mxu0 0.0
    %942 = vmatpush1.msra.mxu0 0.0
    %943 = vmatprep.subr.mxu0 0.0
    %944 = vmatpush1.msra.mxu0 0.0
    %945 = vmatprep.subr.mxu0 0.0
    %946 = vmatpush1.msra.mxu0 0.0
    %947 = vmatprep.subr.mxu0 0.0
    %948 = vmatpush1.msra.mxu0 0.0
    %949 = vmatprep.subr.mxu0 0.0
    %950 = vmatpush1.msra.mxu0 0.0
    %951 = vmatprep.subr.mxu0 0.0
    %952 = vmatpush1.msra.mxu0 0.0
    %953 = vmatprep.subr.mxu0 0.0
    %954 = vmatpush1.msra.mxu0 0.0
    %955 = vmatprep.subr.mxu0 0.0
    %956 = vmatpush1.msra.mxu0 0.0
    %957 = vmatprep.subr.mxu0 0.0
    %958 = vmatpush1.msra.mxu0 0.0
    %959 = vmatprep.subr.mxu0 0.0
    %960 = vmatpush1.msra.mxu0 0.0
    %961 = vmatprep.mubr.f32.mxu0 0.0
    %962 = vmatmul.mubr.f32.gmra.mrb[0].mxu0 %v895
    %v963 = vpop.f32.mrb[0].mxu0
    %v964 = vadd.f32 0.0, %v963
    %v965 = vpop.f32.mrb[0].mxu0
    %966 = vdwg.mxu0
    %968 = vrot.lane.b32.xlu0 %v384, 120
    %v969 = vpop.permute.xlu0 %968
    %v972 = vsel %vm387, %v889, 0
    %974 = vmatprep.subr.mxu0 0.0
    %975 = vmatpush1.msra.mxu0 %v969
    %976 = vmatprep.subr.mxu0 0.0
    %977 = vmatpush1.msra.mxu0 0.0
    %978 = vmatprep.subr.mxu0 0.0
    %979 = vmatpush1.msra.mxu0 0.0
    %980 = vmatprep.subr.mxu0 0.0
    %981 = vmatpush1.msra.mxu0 0.0
    %982 = vmatprep.subr.mxu0 0.0
    %983 = vmatpush1.msra.mxu0 0.0
    %984 = vmatprep.subr.mxu0 0.0
    %985 = vmatpush1.msra.mxu0 0.0
    %986 = vmatprep.subr.mxu0 0.0
    %987 = vmatpush1.msra.mxu0 0.0
    %988 = vmatprep.subr.mxu0 0.0
    %989 = vmatpush1.msra.mxu0 0.0
    %990 = vmatprep.subr.mxu0 0.0
    %991 = vmatpush1.msra.mxu0 0.0
    %992 = vmatprep.subr.mxu0 0.0
    %993 = vmatpush1.msra.mxu0 0.0
    %994 = vmatprep.subr.mxu0 0.0
    %995 = vmatpush1.msra.mxu0 0.0
    %996 = vmatprep.subr.mxu0 0.0
    %997 = vmatpush1.msra.mxu0 0.0
    %998 = vmatprep.subr.mxu0 0.0
    %999 = vmatpush1.msra.mxu0 0.0
    %1000 = vmatprep.subr.mxu0 0.0
    %1001 = vmatpush1.msra.mxu0 0.0
    %1002 = vmatprep.subr.mxu0 0.0
    %1003 = vmatpush1.msra.mxu0 0.0
    %1004 = vmatprep.subr.mxu0 0.0
    %1005 = vmatpush1.msra.mxu0 0.0
    %1006 = vmatprep.subr.mxu0 0.0
    %1007 = vmatpush1.msra.mxu0 0.0
    %1008 = vmatprep.subr.mxu0 0.0
    %1009 = vmatpush1.msra.mxu0 0.0
    %1010 = vmatprep.subr.mxu0 0.0
    %1011 = vmatpush1.msra.mxu0 0.0
    %1012 = vmatprep.subr.mxu0 0.0
    %1013 = vmatpush1.msra.mxu0 0.0
    %1014 = vmatprep.subr.mxu0 0.0
    %1015 = vmatpush1.msra.mxu0 0.0
    %1016 = vmatprep.subr.mxu0 0.0
    %1017 = vmatpush1.msra.mxu0 0.0
    %1018 = vmatprep.subr.mxu0 0.0
    %1019 = vmatpush1.msra.mxu0 0.0
    %1020 = vmatprep.subr.mxu0 0.0
    %1021 = vmatpush1.msra.mxu0 0.0
    %1022 = vmatprep.subr.mxu0 0.0
    %1023 = vmatpush1.msra.mxu0 0.0
    %1024 = vmatprep.subr.mxu0 0.0
    %1025 = vmatpush1.msra.mxu0 0.0
    %1026 = vmatprep.subr.mxu0 0.0
    %1027 = vmatpush1.msra.mxu0 0.0
    %1028 = vmatprep.subr.mxu0 0.0
    %1029 = vmatpush1.msra.mxu0 0.0
    %1030 = vmatprep.subr.mxu0 0.0
    %1031 = vmatpush1.msra.mxu0 0.0
    %1032 = vmatprep.subr.mxu0 0.0
    %1033 = vmatpush1.msra.mxu0 0.0
    %1034 = vmatprep.subr.mxu0 0.0
    %1035 = vmatpush1.msra.mxu0 0.0
    %1036 = vmatprep.subr.mxu0 0.0
    %1037 = vmatpush1.msra.mxu0 0.0
    %1038 = vmatprep.mubr.f32.mxu0 0.0
    %1039 = vmatmul.mubr.f32.gmra.mrb[0].mxu0 %v972
    %v1040 = vpop.f32.mrb[0].mxu0
    %v1041 = vadd.f32 0.0, %v1040
    %v1042 = vpop.f32.mrb[0].mxu0
    %1043 = vdwg.mxu0
    %v1045 = vsel %vm387, %v964, 0
    %v1048 = vsel %vm387, %v1041, 0
    %1050 = vmatprep.subr.mxu0 0.0
    %1051 = vmatpush1.msra.mxu0 %v197
    %1052 = vmatprep.subr.mxu0 0.0
    %1053 = vmatpush1.msra.mxu0 0.0
    %1054 = vmatprep.subr.mxu0 0.0
    %1055 = vmatpush1.msra.mxu0 0.0
    %1056 = vmatprep.subr.mxu0 0.0
    %1057 = vmatpush1.msra.mxu0 0.0
    %1058 = vmatprep.subr.mxu0 0.0
    %1059 = vmatpush1.msra.mxu0 0.0
    %1060 = vmatprep.subr.mxu0 0.0
    %1061 = vmatpush1.msra.mxu0 0.0
    %1062 = vmatprep.subr.mxu0 0.0
    %1063 = vmatpush1.msra.mxu0 0.0
    %1064 = vmatprep.subr.mxu0 0.0
    %1065 = vmatpush1.msra.mxu0 0.0
    %1066 = vmatprep.subr.mxu0 0.0
    %1067 = vmatpush1.msra.mxu0 0.0
    %1068 = vmatprep.subr.mxu0 0.0
    %1069 = vmatpush1.msra.mxu0 0.0
    %1070 = vmatprep.subr.mxu0 0.0
    %1071 = vmatpush1.msra.mxu0 0.0
    %1072 = vmatprep.subr.mxu0 0.0
    %1073 = vmatpush1.msra.mxu0 0.0
    %1074 = vmatprep.subr.mxu0 0.0
    %1075 = vmatpush1.msra.mxu0 0.0
    %1076 = vmatprep.subr.mxu0 0.0
    %1077 = vmatpush1.msra.mxu0 0.0
    %1078 = vmatprep.subr.mxu0 0.0
    %1079 = vmatpush1.msra.mxu0 0.0
    %1080 = vmatprep.subr.mxu0 0.0
    %1081 = vmatpush1.msra.mxu0 0.0
    %1082 = vmatprep.subr.mxu0 0.0
    %1083 = vmatpush1.msra.mxu0 0.0
    %1084 = vmatprep.subr.mxu0 0.0
    %1085 = vmatpush1.msra.mxu0 0.0
    %1086 = vmatprep.subr.mxu0 0.0
    %1087 = vmatpush1.msra.mxu0 0.0
    %1088 = vmatprep.subr.mxu0 0.0
    %1089 = vmatpush1.msra.mxu0 0.0
    %1090 = vmatprep.subr.mxu0 0.0
    %1091 = vmatpush1.msra.mxu0 0.0
    %1092 = vmatprep.subr.mxu0 0.0
    %1093 = vmatpush1.msra.mxu0 0.0
    %1094 = vmatprep.subr.mxu0 0.0
    %1095 = vmatpush1.msra.mxu0 0.0
    %1096 = vmatprep.subr.mxu0 0.0
    %1097 = vmatpush1.msra.mxu0 0.0
    %1098 = vmatprep.subr.mxu0 0.0
    %1099 = vmatpush1.msra.mxu0 0.0
    %1100 = vmatprep.subr.mxu0 0.0
    %1101 = vmatpush1.msra.mxu0 0.0
    %1102 = vmatprep.subr.mxu0 0.0
    %1103 = vmatpush1.msra.mxu0 0.0
    %1104 = vmatprep.subr.mxu0 0.0
    %1105 = vmatpush1.msra.mxu0 0.0
    %1106 = vmatprep.subr.mxu0 0.0
    %1107 = vmatpush1.msra.mxu0 0.0
    %1108 = vmatprep.subr.mxu0 0.0
    %1109 = vmatpush1.msra.mxu0 0.0
    %1110 = vmatprep.subr.mxu0 0.0
    %1111 = vmatpush1.msra.mxu0 0.0
    %1112 = vmatprep.subr.mxu0 0.0
    %1113 = vmatpush1.msra.mxu0 0.0
    %1114 = vmatprep.mubr.f32.mxu0 0.0
    %1115 = vmatmul.mubr.f32.gmra.mrb[0].mxu0 %v1045
    %v1116 = vpop.f32.mrb[0].mxu0
    %v1117 = vadd.f32 0.0, %v1116
    %v1118 = vpop.f32.mrb[0].mxu0
    %1119 = vmatprep.mubr.f32.mxu0 0.0
    %1120 = vmatmul.mubr.f32.gmra.mrb[0].mxu0 %v1048
    %v1121 = vpop.f32.mrb[0].mxu0
    %v1122 = vadd.f32 0.0, %v1121
    %v1123 = vpop.f32.mrb[0].mxu0
    %1124 = vdwg.mxu0
    %v1126 = vsel %vm387, %v634, 0
    %v1129 = vsel %vm387, %v707, 0
    %1131 = vmatprep.subr.mxu0 0.0
    %1132 = vmatpush1.msra.mxu0 %v196
    %1133 = vmatprep.subr.mxu0 0.0
    %1134 = vmatpush1.msra.mxu0 0.0
    %1135 = vmatprep.subr.mxu0 0.0
    %1136 = vmatpush1.msra.mxu0 0.0
    %1137 = vmatprep.subr.mxu0 0.0
    %1138 = vmatpush1.msra.mxu0 0.0
    %1139 = vmatprep.subr.mxu0 0.0
    %1140 = vmatpush1.msra.mxu0 0.0
    %1141 = vmatprep.subr.mxu0 0.0
    %1142 = vmatpush1.msra.mxu0 0.0
    %1143 = vmatprep.subr.mxu0 0.0
    %1144 = vmatpush1.msra.mxu0 0.0
    %1145 = vmatprep.subr.mxu0 0.0
    %1146 = vmatpush1.msra.mxu0 0.0
    %1147 = vmatprep.subr.mxu0 0.0
    %1148 = vmatpush1.msra.mxu0 0.0
    %1149 = vmatprep.subr.mxu0 0.0
    %1150 = vmatpush1.msra.mxu0 0.0
    %1151 = vmatprep.subr.mxu0 0.0
    %1152 = vmatpush1.msra.mxu0 0.0
    %1153 = vmatprep.subr.mxu0 0.0
    %1154 = vmatpush1.msra.mxu0 0.0
    %1155 = vmatprep.subr.mxu0 0.0
    %1156 = vmatpush1.msra.mxu0 0.0
    %1157 = vmatprep.subr.mxu0 0.0
    %1158 = vmatpush1.msra.mxu0 0.0
    %1159 = vmatprep.subr.mxu0 0.0
    %1160 = vmatpush1.msra.mxu0 0.0
    %1161 = vmatprep.subr.mxu0 0.0
    %1162 = vmatpush1.msra.mxu0 0.0
    %1163 = vmatprep.subr.mxu0 0.0
    %1164 = vmatpush1.msra.mxu0 0.0
    %1165 = vmatprep.subr.mxu0 0.0
    %1166 = vmatpush1.msra.mxu0 0.0
    %1167 = vmatprep.subr.mxu0 0.0
    %1168 = vmatpush1.msra.mxu0 0.0
    %1169 = vmatprep.subr.mxu0 0.0
    %1170 = vmatpush1.msra.mxu0 0.0
    %1171 = vmatprep.subr.mxu0 0.0
    %1172 = vmatpush1.msra.mxu0 0.0
    %1173 = vmatprep.subr.mxu0 0.0
    %1174 = vmatpush1.msra.mxu0 0.0
    %1175 = vmatprep.subr.mxu0 0.0
    %1176 = vmatpush1.msra.mxu0 0.0
    %1177 = vmatprep.subr.mxu0 0.0
    %1178 = vmatpush1.msra.mxu0 0.0
    %1179 = vmatprep.subr.mxu0 0.0
    %1180 = vmatpush1.msra.mxu0 0.0
    %1181 = vmatprep.subr.mxu0 0.0
    %1182 = vmatpush1.msra.mxu0 0.0
    %1183 = vmatprep.subr.mxu0 0.0
    %1184 = vmatpush1.msra.mxu0 0.0
    %1185 = vmatprep.subr.mxu0 0.0
    %1186 = vmatpush1.msra.mxu0 0.0
    %1187 = vmatprep.subr.mxu0 0.0
    %1188 = vmatpush1.msra.mxu0 0.0
    %1189 = vmatprep.subr.mxu0 0.0
    %1190 = vmatpush1.msra.mxu0 0.0
    %1191 = vmatprep.subr.mxu0 0.0
    %1192 = vmatpush1.msra.mxu0 0.0
    %1193 = vmatprep.subr.mxu0 0.0
    %1194 = vmatpush1.msra.mxu0 0.0
    %1195 = vmatprep.mubr.f32.mxu0 0.0
    %1196 = vmatmul.mubr.f32.gmra.mrb[0].mxu0 %v1126
    %v1197 = vpop.f32.mrb[0].mxu0
    %v1198 = vadd.f32 %v1117, %v1197
    %v1199 = vpop.f32.mrb[0].mxu0
    %1200 = vmatprep.mubr.f32.mxu0 0.0
    %1201 = vmatmul.mubr.f32.gmra.mrb[0].mxu0 %v1129
    %v1202 = vpop.f32.mrb[0].mxu0
    %v1203 = vadd.f32 %v1122, %v1202
    %v1204 = vpop.f32.mrb[0].mxu0
    %1205 = vdwg.mxu0
    %1206 = vrot.lane.b32.xlu0 %v302, 112
    %v1207 = vpop.permute.xlu0 %1206
    %1208 = vrot.lane.b32.xlu0 %v304, 112
    %v1209 = vpop.permute.xlu0 %1208
    %v1210 = vsel %vm387, %v1207, 0
    %v1212 = vsel %vm387, %v1209, 0
    %1214 = vmatprep.subr.mxu0 0.0
    %1215 = vmatpush1.xpose.msra.mxu0 %v1212
    %1216 = vmatprep.subr.mxu0 0.0
    %1217 = vmatpush1.xpose.msra.mxu0 0.0
    %1218 = vmatprep.subr.mxu0 0.0
    %1219 = vmatpush1.xpose.msra.mxu0 0.0
    %1220 = vmatprep.subr.mxu0 0.0
    %1221 = vmatpush1.xpose.msra.mxu0 0.0
    %1222 = vmatprep.subr.mxu0 0.0
    %1223 = vmatpush1.xpose.msra.mxu0 0.0
    %1224 = vmatprep.subr.mxu0 0.0
    %1225 = vmatpush1.xpose.msra.mxu0 0.0
    %1226 = vmatprep.subr.mxu0 0.0
    %1227 = vmatpush1.xpose.msra.mxu0 0.0
    %1228 = vmatprep.subr.mxu0 0.0
    %1229 = vmatpush1.xpose.msra.mxu0 0.0
    %1230 = vmatprep.subr.mxu0 0.0
    %1231 = vmatpush1.xpose.msra.mxu0 0.0
    %1232 = vmatprep.subr.mxu0 0.0
    %1233 = vmatpush1.xpose.msra.mxu0 0.0
    %1234 = vmatprep.subr.mxu0 0.0
    %1235 = vmatpush1.xpose.msra.mxu0 0.0
    %1236 = vmatprep.subr.mxu0 0.0
    %1237 = vmatpush1.xpose.msra.mxu0 0.0
    %1238 = vmatprep.subr.mxu0 0.0
    %1239 = vmatpush1.xpose.msra.mxu0 0.0
    %1240 = vmatprep.subr.mxu0 0.0
    %1241 = vmatpush1.xpose.msra.mxu0 0.0
    %1242 = vmatprep.subr.mxu0 0.0
    %1243 = vmatpush1.xpose.msra.mxu0 0.0
    %1244 = vmatprep.subr.mxu0 0.0
    %1245 = vmatpush1.xpose.msra.mxu0 0.0
    %1246 = vmatprep.subr.mxu0 0.0
    %1247 = vmatpush1.xpose.msra.mxu0 0.0
    %1248 = vmatprep.subr.mxu0 0.0
    %1249 = vmatpush1.xpose.msra.mxu0 0.0
    %1250 = vmatprep.subr.mxu0 0.0
    %1251 = vmatpush1.xpose.msra.mxu0 0.0
    %1252 = vmatprep.subr.mxu0 0.0
    %1253 = vmatpush1.xpose.msra.mxu0 0.0
    %1254 = vmatprep.subr.mxu0 0.0
    %1255 = vmatpush1.xpose.msra.mxu0 0.0
    %1256 = vmatprep.subr.mxu0 0.0
    %1257 = vmatpush1.xpose.msra.mxu0 0.0
    %1258 = vmatprep.subr.mxu0 0.0
    %1259 = vmatpush1.xpose.msra.mxu0 0.0
    %1260 = vmatprep.subr.mxu0 0.0
    %1261 = vmatpush1.xpose.msra.mxu0 0.0
    %1262 = vmatprep.subr.mxu0 0.0
    %1263 = vmatpush1.xpose.msra.mxu0 0.0
    %1264 = vmatprep.subr.mxu0 0.0
    %1265 = vmatpush1.xpose.msra.mxu0 0.0
    %1266 = vmatprep.subr.mxu0 0.0
    %1267 = vmatpush1.xpose.msra.mxu0 0.0
    %1268 = vmatprep.subr.mxu0 0.0
    %1269 = vmatpush1.xpose.msra.mxu0 0.0
    %1270 = vmatprep.subr.mxu0 0.0
    %1271 = vmatpush1.xpose.msra.mxu0 0.0
    %1272 = vmatprep.subr.mxu0 0.0
    %1273 = vmatpush1.xpose.msra.mxu0 0.0
    %1274 = vmatprep.subr.mxu0 0.0
    %1275 = vmatpush1.xpose.msra.mxu0 0.0
    %1276 = vmatprep.subr.mxu0 0.0
    %1277 = vmatpush1.xpose.msra.mxu0 0.0
    %1278 = vmatprep.mubr.f32.mxu0 0.0
    %1279 = vmatmul.mubr.f32.gmra.mrb[0].mxu0 %v1210
    %v1280 = vpop.f32.mrb[0].mxu0
    %v1281 = vadd.f32 0.0, %v1280
    %v1282 = vpop.f32.mrb[0].mxu0
    %1283 = vdwg.mxu0
    %1284 = vrot.lane.b32.xlu0 %v308, 112
    %v1285 = vpop.permute.xlu0 %1284
    %1286 = vrot.lane.b32.xlu0 %v310, 112
    %v1287 = vpop.permute.xlu0 %1286
    %v1288 = vsel %vm387, %v1285, 0
    %v1290 = vsel %vm387, %v1287, 0
    %1292 = vmatprep.subr.mxu0 0.0
    %1293 = vmatpush1.xpose.msra.mxu0 %v1290
    %1294 = vmatprep.subr.mxu0 0.0
    %1295 = vmatpush1.xpose.msra.mxu0 0.0
    %1296 = vmatprep.subr.mxu0 0.0
    %1297 = vmatpush1.xpose.msra.mxu0 0.0
    %1298 = vmatprep.subr.mxu0 0.0
    %1299 = vmatpush1.xpose.msra.mxu0 0.0
    %1300 = vmatprep.subr.mxu0 0.0
    %1301 = vmatpush1.xpose.msra.mxu0 0.0
    %1302 = vmatprep.subr.mxu0 0.0
    %1303 = vmatpush1.xpose.msra.mxu0 0.0
    %1304 = vmatprep.subr.mxu0 0.0
    %1305 = vmatpush1.xpose.msra.mxu0 0.0
    %1306 = vmatprep.subr.mxu0 0.0
    %1307 = vmatpush1.xpose.msra.mxu0 0.0
    %1308 = vmatprep.subr.mxu0 0.0
    %1309 = vmatpush1.xpose.msra.mxu0 0.0
    %1310 = vmatprep.subr.mxu0 0.0
    %1311 = vmatpush1.xpose.msra.mxu0 0.0
    %1312 = vmatprep.subr.mxu0 0.0
    %1313 = vmatpush1.xpose.msra.mxu0 0.0
    %1314 = vmatprep.subr.mxu0 0.0
    %1315 = vmatpush1.xpose.msra.mxu0 0.0
    %1316 = vmatprep.subr.mxu0 0.0
    %1317 = vmatpush1.xpose.msra.mxu0 0.0
    %1318 = vmatprep.subr.mxu0 0.0
    %1319 = vmatpush1.xpose.msra.mxu0 0.0
    %1320 = vmatprep.subr.mxu0 0.0
    %1321 = vmatpush1.xpose.msra.mxu0 0.0
    %1322 = vmatprep.subr.mxu0 0.0
    %1323 = vmatpush1.xpose.msra.mxu0 0.0
    %1324 = vmatprep.subr.mxu0 0.0
    %1325 = vmatpush1.xpose.msra.mxu0 0.0
    %1326 = vmatprep.subr.mxu0 0.0
    %1327 = vmatpush1.xpose.msra.mxu0 0.0
    %1328 = vmatprep.subr.mxu0 0.0
    %1329 = vmatpush1.xpose.msra.mxu0 0.0
    %1330 = vmatprep.subr.mxu0 0.0
    %1331 = vmatpush1.xpose.msra.mxu0 0.0
    %1332 = vmatprep.subr.mxu0 0.0
    %1333 = vmatpush1.xpose.msra.mxu0 0.0
    %1334 = vmatprep.subr.mxu0 0.0
    %1335 = vmatpush1.xpose.msra.mxu0 0.0
    %1336 = vmatprep.subr.mxu0 0.0
    %1337 = vmatpush1.xpose.msra.mxu0 0.0
    %1338 = vmatprep.subr.mxu0 0.0
    %1339 = vmatpush1.xpose.msra.mxu0 0.0
    %1340 = vmatprep.subr.mxu0 0.0
    %1341 = vmatpush1.xpose.msra.mxu0 0.0
    %1342 = vmatprep.subr.mxu0 0.0
    %1343 = vmatpush1.xpose.msra.mxu0 0.0
    %1344 = vmatprep.subr.mxu0 0.0
    %1345 = vmatpush1.xpose.msra.mxu0 0.0
    %1346 = vmatprep.subr.mxu0 0.0
    %1347 = vmatpush1.xpose.msra.mxu0 0.0
    %1348 = vmatprep.subr.mxu0 0.0
    %1349 = vmatpush1.xpose.msra.mxu0 0.0
    %1350 = vmatprep.subr.mxu0 0.0
    %1351 = vmatpush1.xpose.msra.mxu0 0.0
    %1352 = vmatprep.subr.mxu0 0.0
    %1353 = vmatpush1.xpose.msra.mxu0 0.0
    %1354 = vmatprep.subr.mxu0 0.0
    %1355 = vmatpush1.xpose.msra.mxu0 0.0
    %1356 = vmatprep.mubr.f32.mxu0 0.0
    %1357 = vmatmul.mubr.f32.gmra.mrb[0].mxu0 %v1288
    %v1358 = vpop.f32.mrb[0].mxu0
    %v1359 = vadd.f32 0.0, %v1358
    %v1360 = vpop.f32.mrb[0].mxu0
    %1361 = vdwg.mxu0
    %v1362 = vmul.f32 %v1281, 0.35355338
    %v1363 = vmul.f32 %v1359, 0.35355338
    %v1364 = vsel %vm387, %v1362, -inf
    %1365 = vmax.xlane.f32.xlu0 %v1364
    %v1366 = vpop.xlane.xlu0 %1365
    %v1367 = vsel %vm387, %v1363, -inf
    %1368 = vmax.xlane.f32.xlu0 %v1367
    %v1369 = vpop.xlane.xlu0 %1368
    %v1370 = vsub.f32 %v1362, %v1366
    %v1371 = vsub.f32 %v1363, %v1369
    %v1372 = vmul.f32 %v1370, 1.442695
    %v1373 = vpow.pop %v1372
    %v1374 = vmul.f32 %v1371, 1.442695
    %v1375 = vpow.pop %v1374
    %v1376 = vsel %vm387, %v1373, 0.0
    %1377 = vadd.xlane.f32.xlu0 %v1376
    %v1378 = vpop.xlane.xlu0 %1377
    %v1379 = vsel %vm387, %v1375, 0.0
    %1380 = vadd.xlane.f32.xlu0 %v1379
    %v1381 = vpop.xlane.xlu0 %1380
    %v1382 = vrcp.pop %v1378
    %v1383 = vrcp.pop %v1381
    %v1384 = vmul.f32 %v1373, %v1382
    %v1385 = vmul.f32 %v1375, %v1383
    %1386 = vrot.lane.b32.xlu0 %v379, 112
    %v1387 = vpop.permute.xlu0 %1386
    %v1390 = vsel %vm387, %v1384, 0
    %1392 = vmatprep.subr.mxu0 0.0
    %1393 = vmatpush1.msra.mxu0 %v1387
    %1394 = vmatprep.subr.mxu0 0.0
    %1395 = vmatpush1.msra.mxu0 0.0
    %1396 = vmatprep.subr.mxu0 0.0
    %1397 = vmatpush1.msra.mxu0 0.0
    %1398 = vmatprep.subr.mxu0 0.0
    %1399 = vmatpush1.msra.mxu0 0.0
    %1400 = vmatprep.subr.mxu0 0.0
    %1401 = vmatpush1.msra.mxu0 0.0
    %1402 = vmatprep.subr.mxu0 0.0
    %1403 = vmatpush1.msra.mxu0 0.0
    %1404 = vmatprep.subr.mxu0 0.0
    %1405 = vmatpush1.msra.mxu0 0.0
    %1406 = vmatprep.subr.mxu0 0.0
    %1407 = vmatpush1.msra.mxu0 0.0
    %1408 = vmatprep.subr.mxu0 0.0
    %1409 = vmatpush1.msra.mxu0 0.0
    %1410 = vmatprep.subr.mxu0 0.0
    %1411 = vmatpush1.msra.mxu0 0.0
    %1412 = vmatprep.subr.mxu0 0.0
    %1413 = vmatpush1.msra.mxu0 0.0
    %1414 = vmatprep.subr.mxu0 0.0
    %1415 = vmatpush1.msra.mxu0 0.0
    %1416 = vmatprep.subr.mxu0 0.0
    %1417 = vmatpush1.msra.mxu0 0.0
    %1418 = vmatprep.subr.mxu0 0.0
    %1419 = vmatpush1.msra.mxu0 0.0
    %1420 = vmatprep.subr.mxu0 0.0
    %1421 = vmatpush1.msra.mxu0 0.0
    %1422 = vmatprep.subr.mxu0 0.0
    %1423 = vmatpush1.msra.mxu0 0.0
    %1424 = vmatprep.subr.mxu0 0.0
    %1425 = vmatpush1.msra.mxu0 0.0
    %1426 = vmatprep.subr.mxu0 0.0
    %1427 = vmatpush1.msra.mxu0 0.0
    %1428 = vmatprep.subr.mxu0 0.0
    %1429 = vmatpush1.msra.mxu0 0.0
    %1430 = vmatprep.subr.mxu0 0.0
    %1431 = vmatpush1.msra.mxu0 0.0
    %1432 = vmatprep.subr.mxu0 0.0
    %1433 = vmatpush1.msra.mxu0 0.0
    %1434 = vmatprep.subr.mxu0 0.0
    %1435 = vmatpush1.msra.mxu0 0.0
    %1436 = vmatprep.subr.mxu0 0.0
    %1437 = vmatpush1.msra.mxu0 0.0
    %1438 = vmatprep.subr.mxu0 0.0
    %1439 = vmatpush1.msra.mxu0 0.0
    %1440 = vmatprep.subr.mxu0 0.0
    %1441 = vmatpush1.msra.mxu0 0.0
    %1442 = vmatprep.subr.mxu0 0.0
    %1443 = vmatpush1.msra.mxu0 0.0
    %1444 = vmatprep.subr.mxu0 0.0
    %1445 = vmatpush1.msra.mxu0 0.0
    %1446 = vmatprep.subr.mxu0 0.0
    %1447 = vmatpush1.msra.mxu0 0.0
    %1448 = vmatprep.subr.mxu0 0.0
    %1449 = vmatpush1.msra.mxu0 0.0
    %1450 = vmatprep.subr.mxu0 0.0
    %1451 = vmatpush1.msra.mxu0 0.0
    %1452 = vmatprep.subr.mxu0 0.0
    %1453 = vmatpush1.msra.mxu0 0.0
    %1454 = vmatprep.subr.mxu0 0.0
    %1455 = vmatpush1.msra.mxu0 0.0
    %1456 = vmatprep.mubr.f32.mxu0 0.0
    %1457 = vmatmul.mubr.f32.gmra.mrb[0].mxu0 %v1390
    %v1458 = vpop.f32.mrb[0].mxu0
    %v1459 = vadd.f32 0.0, %v1458
    %v1460 = vpop.f32.mrb[0].mxu0
    %1461 = vdwg.mxu0
    %1462 = vrot.lane.b32.xlu0 %v384, 112
    %v1463 = vpop.permute.xlu0 %1462
    %v1466 = vsel %vm387, %v1385, 0
    %1468 = vmatprep.subr.mxu0 0.0
    %1469 = vmatpush1.msra.mxu0 %v1463
    %1470 = vmatprep.subr.mxu0 0.0
    %1471 = vmatpush1.msra.mxu0 0.0
    %1472 = vmatprep.subr.mxu0 0.0
    %1473 = vmatpush1.msra.mxu0 0.0
    %1474 = vmatprep.subr.mxu0 0.0
    %1475 = vmatpush1.msra.mxu0 0.0
    %1476 = vmatprep.subr.mxu0 0.0
    %1477 = vmatpush1.msra.mxu0 0.0
    %1478 = vmatprep.subr.mxu0 0.0
    %1479 = vmatpush1.msra.mxu0 0.0
    %1480 = vmatprep.subr.mxu0 0.0
    %1481 = vmatpush1.msra.mxu0 0.0
    %1482 = vmatprep.subr.mxu0 0.0
    %1483 = vmatpush1.msra.mxu0 0.0
    %1484 = vmatprep.subr.mxu0 0.0
    %1485 = vmatpush1.msra.mxu0 0.0
    %1486 = vmatprep.subr.mxu0 0.0
    %1487 = vmatpush1.msra.mxu0 0.0
    %1488 = vmatprep.subr.mxu0 0.0
    %1489 = vmatpush1.msra.mxu0 0.0
    %1490 = vmatprep.subr.mxu0 0.0
    %1491 = vmatpush1.msra.mxu0 0.0
    %1492 = vmatprep.subr.mxu0 0.0
    %1493 = vmatpush1.msra.mxu0 0.0
    %1494 = vmatprep.subr.mxu0 0.0
    %1495 = vmatpush1.msra.mxu0 0.0
    %1496 = vmatprep.subr.mxu0 0.0
    %1497 = vmatpush1.msra.mxu0 0.0
    %1498 = vmatprep.subr.mxu0 0.0
    %1499 = vmatpush1.msra.mxu0 0.0
    %1500 = vmatprep.subr.mxu0 0.0
    %1501 = vmatpush1.msra.mxu0 0.0
    %1502 = vmatprep.subr.mxu0 0.0
    %1503 = vmatpush1.msra.mxu0 0.0
    %1504 = vmatprep.subr.mxu0 0.0
    %1505 = vmatpush1.msra.mxu0 0.0
    %1506 = vmatprep.subr.mxu0 0.0
    %1507 = vmatpush1.msra.mxu0 0.0
    %1508 = vmatprep.subr.mxu0 0.0
    %1509 = vmatpush1.msra.mxu0 0.0
    %1510 = vmatprep.subr.mxu0 0.0
    %1511 = vmatpush1.msra.mxu0 0.0
    %1512 = vmatprep.subr.mxu0 0.0
    %1513 = vmatpush1.msra.mxu0 0.0
    %1514 = vmatprep.subr.mxu0 0.0
    %1515 = vmatpush1.msra.mxu0 0.0
    %1516 = vmatprep.subr.mxu0 0.0
    %1517 = vmatpush1.msra.mxu0 0.0
    %1518 = vmatprep.subr.mxu0 0.0
    %1519 = vmatpush1.msra.mxu0 0.0
    %1520 = vmatprep.subr.mxu0 0.0
    %1521 = vmatpush1.msra.mxu0 0.0
    %1522 = vmatprep.subr.mxu0 0.0
    %1523 = vmatpush1.msra.mxu0 0.0
    %1524 = vmatprep.subr.mxu0 0.0
    %1525 = vmatpush1.msra.mxu0 0.0
    %1526 = vmatprep.subr.mxu0 0.0
    %1527 = vmatpush1.msra.mxu0 0.0
    %1528 = vmatprep.subr.mxu0 0.0
    %1529 = vmatpush1.msra.mxu0 0.0
    %1530 = vmatprep.subr.mxu0 0.0
    %1531 = vmatpush1.msra.mxu0 0.0
    %1532 = vmatprep.mubr.f32.mxu0 0.0
    %1533 = vmatmul.mubr.f32.gmra.mrb[0].mxu0 %v1466
    %v1534 = vpop.f32.mrb[0].mxu0
    %v1535 = vadd.f32 0.0, %v1534
    %v1536 = vpop.f32.mrb[0].mxu0
    %1537 = vdwg.mxu0
    %v1539 = vsel %vm387, %v1459, 0
    %v1542 = vsel %vm387, %v1535, 0
    %1544 = vmatprep.subr.mxu0 0.0
    %1545 = vmatpush1.msra.mxu0 %v198
    %1546 = vmatprep.subr.mxu0 0.0
    %1547 = vmatpush1.msra.mxu0 0.0
    %1548 = vmatprep.subr.mxu0 0.0
    %1549 = vmatpush1.msra.mxu0 0.0
    %1550 = vmatprep.subr.mxu0 0.0
    %1551 = vmatpush1.msra.mxu0 0.0
    %1552 = vmatprep.subr.mxu0 0.0
    %1553 = vmatpush1.msra.mxu0 0.0
    %1554 = vmatprep.subr.mxu0 0.0
    %1555 = vmatpush1.msra.mxu0 0.0
    %1556 = vmatprep.subr.mxu0 0.0
    %1557 = vmatpush1.msra.mxu0 0.0
    %1558 = vmatprep.subr.mxu0 0.0
    %1559 = vmatpush1.msra.mxu0 0.0
    %1560 = vmatprep.subr.mxu0 0.0
    %1561 = vmatpush1.msra.mxu0 0.0
    %1562 = vmatprep.subr.mxu0 0.0
    %1563 = vmatpush1.msra.mxu0 0.0
    %1564 = vmatprep.subr.mxu0 0.0
    %1565 = vmatpush1.msra.mxu0 0.0
    %1566 = vmatprep.subr.mxu0 0.0
    %1567 = vmatpush1.msra.mxu0 0.0
    %1568 = vmatprep.subr.mxu0 0.0
    %1569 = vmatpush1.msra.mxu0 0.0
    %1570 = vmatprep.subr.mxu0 0.0
    %1571 = vmatpush1.msra.mxu0 0.0
    %1572 = vmatprep.subr.mxu0 0.0
    %1573 = vmatpush1.msra.mxu0 0.0
    %1574 = vmatprep.subr.mxu0 0.0
    %1575 = vmatpush1.msra.mxu0 0.0
    %1576 = vmatprep.subr.mxu0 0.0
    %1577 = vmatpush1.msra.mxu0 0.0
    %1578 = vmatprep.subr.mxu0 0.0
    %1579 = vmatpush1.msra.mxu0 0.0
    %1580 = vmatprep.subr.mxu0 0.0
    %1581 = vmatpush1.msra.mxu0 0.0
    %1582 = vmatprep.subr.mxu0 0.0
    %1583 = vmatpush1.msra.mxu0 0.0
    %1584 = vmatprep.subr.mxu0 0.0
    %1585 = vmatpush1.msra.mxu0 0.0
    %1586 = vmatprep.subr.mxu0 0.0
    %1587 = vmatpush1.msra.mxu0 0.0
    %1588 = vmatprep.subr.mxu0 0.0
    %1589 = vmatpush1.msra.mxu0 0.0
    %1590 = vmatprep.subr.mxu0 0.0
    %1591 = vmatpush1.msra.mxu0 0.0
    %1592 = vmatprep.subr.mxu0 0.0
    %1593 = vmatpush1.msra.mxu0 0.0
    %1594 = vmatprep.subr.mxu0 0.0
    %1595 = vmatpush1.msra.mxu0 0.0
    %1596 = vmatprep.subr.mxu0 0.0
    %1597 = vmatpush1.msra.mxu0 0.0
    %1598 = vmatprep.subr.mxu0 0.0
    %1599 = vmatpush1.msra.mxu0 0.0
    %1600 = vmatprep.subr.mxu0 0.0
    %1601 = vmatpush1.msra.mxu0 0.0
    %1602 = vmatprep.subr.mxu0 0.0
    %1603 = vmatpush1.msra.mxu0 0.0
    %1604 = vmatprep.subr.mxu0 0.0
    %1605 = vmatpush1.msra.mxu0 0.0
    %1606 = vmatprep.subr.mxu0 0.0
    %1607 = vmatpush1.msra.mxu0 0.0
    %1608 = vmatprep.mubr.f32.mxu0 0.0
    %1609 = vmatmul.mubr.f32.gmra.mrb[0].mxu0 %v1539
    %v1610 = vpop.f32.mrb[0].mxu0
    %v1611 = vadd.f32 0.0, %v1610
    %v1612 = vpop.f32.mrb[0].mxu0
    %1613 = vmatprep.mubr.f32.mxu0 0.0
    %1614 = vmatmul.mubr.f32.gmra.mrb[0].mxu0 %v1542
    %v1615 = vpop.f32.mrb[0].mxu0
    %v1616 = vadd.f32 0.0, %v1615
    %v1617 = vpop.f32.mrb[0].mxu0
    %1618 = vdwg.mxu0
    %v1619 = vadd.f32 %v1198, %v1611
    %v1620 = vadd.f32 %v1203, %v1616
    %1621 = vrot.lane.b32.xlu0 %v302, 104
    %v1622 = vpop.permute.xlu0 %1621
    %1623 = vrot.lane.b32.xlu0 %v304, 104
    %v1624 = vpop.permute.xlu0 %1623
    %v1625 = vsel %vm387, %v1622, 0
    %v1627 = vsel %vm387, %v1624, 0
    %1629 = vmatprep.subr.mxu0 0.0
    %1630 = vmatpush1.xpose.msra.mxu0 %v1627
    %1631 = vmatprep.subr.mxu0 0.0
    %1632 = vmatpush1.xpose.msra.mxu0 0.0
    %1633 = vmatprep.subr.mxu0 0.0
    %1634 = vmatpush1.xpose.msra.mxu0 0.0
    %1635 = vmatprep.subr.mxu0 0.0
    %1636 = vmatpush1.xpose.msra.mxu0 0.0
    %1637 = vmatprep.subr.mxu0 0.0
    %1638 = vmatpush1.xpose.msra.mxu0 0.0
    %1639 = vmatprep.subr.mxu0 0.0
    %1640 = vmatpush1.xpose.msra.mxu0 0.0
    %1641 = vmatprep.subr.mxu0 0.0
    %1642 = vmatpush1.xpose.msra.mxu0 0.0
    %1643 = vmatprep.subr.mxu0 0.0
    %1644 = vmatpush1.xpose.msra.mxu0 0.0
    %1645 = vmatprep.subr.mxu0 0.0
    %1646 = vmatpush1.xpose.msra.mxu0 0.0
    %1647 = vmatprep.subr.mxu0 0.0
    %1648 = vmatpush1.xpose.msra.mxu0 0.0
    %1649 = vmatprep.subr.mxu0 0.0
    %1650 = vmatpush1.xpose.msra.mxu0 0.0
    %1651 = vmatprep.subr.mxu0 0.0
    %1652 = vmatpush1.xpose.msra.mxu0 0.0
    %1653 = vmatprep.subr.mxu0 0.0
    %1654 = vmatpush1.xpose.msra.mxu0 0.0
    %1655 = vmatprep.subr.mxu0 0.0
    %1656 = vmatpush1.xpose.msra.mxu0 0.0
    %1657 = vmatprep.subr.mxu0 0.0
    %1658 = vmatpush1.xpose.msra.mxu0 0.0
    %1659 = vmatprep.subr.mxu0 0.0
    %1660 = vmatpush1.xpose.msra.mxu0 0.0
    %1661 = vmatprep.subr.mxu0 0.0
    %1662 = vmatpush1.xpose.msra.mxu0 0.0
    %1663 = vmatprep.subr.mxu0 0.0
    %1664 = vmatpush1.xpose.msra.mxu0 0.0
    %1665 = vmatprep.subr.mxu0 0.0
    %1666 = vmatpush1.xpose.msra.mxu0 0.0
    %1667 = vmatprep.subr.mxu0 0.0
    %1668 = vmatpush1.xpose.msra.mxu0 0.0
    %1669 = vmatprep.subr.mxu0 0.0
    %1670 = vmatpush1.xpose.msra.mxu0 0.0
    %1671 = vmatprep.subr.mxu0 0.0
    %1672 = vmatpush1.xpose.msra.mxu0 0.0
    %1673 = vmatprep.subr.mxu0 0.0
    %1674 = vmatpush1.xpose.msra.mxu0 0.0
    %1675 = vmatprep.subr.mxu0 0.0
    %1676 = vmatpush1.xpose.msra.mxu0 0.0
    %1677 = vmatprep.subr.mxu0 0.0
    %1678 = vmatpush1.xpose.msra.mxu0 0.0
    %1679 = vmatprep.subr.mxu0 0.0
    %1680 = vmatpush1.xpose.msra.mxu0 0.0
    %1681 = vmatprep.subr.mxu0 0.0
    %1682 = vmatpush1.xpose.msra.mxu0 0.0
    %1683 = vmatprep.subr.mxu0 0.0
    %1684 = vmatpush1.xpose.msra.mxu0 0.0
    %1685 = vmatprep.subr.mxu0 0.0
    %1686 = vmatpush1.xpose.msra.mxu0 0.0
    %1687 = vmatprep.subr.mxu0 0.0
    %1688 = vmatpush1.xpose.msra.mxu0 0.0
    %1689 = vmatprep.subr.mxu0 0.0
    %1690 = vmatpush1.xpose.msra.mxu0 0.0
    %1691 = vmatprep.subr.mxu0 0.0
    %1692 = vmatpush1.xpose.msra.mxu0 0.0
    %1693 = vmatprep.mubr.f32.mxu0 0.0
    %1694 = vmatmul.mubr.f32.gmra.mrb[0].mxu0 %v1625
    %v1695 = vpop.f32.mrb[0].mxu0
    %v1696 = vadd.f32 0.0, %v1695
    %v1697 = vpop.f32.mrb[0].mxu0
    %1698 = vdwg.mxu0
    %1699 = vrot.lane.b32.xlu0 %v308, 104
    %v1700 = vpop.permute.xlu0 %1699
    %1701 = vrot.lane.b32.xlu0 %v310, 104
    %v1702 = vpop.permute.xlu0 %1701
    %v1703 = vsel %vm387, %v1700, 0
    %v1705 = vsel %vm387, %v1702, 0
    %1707 = vmatprep.subr.mxu0 0.0
    %1708 = vmatpush1.xpose.msra.mxu0 %v1705
    %1709 = vmatprep.subr.mxu0 0.0
    %1710 = vmatpush1.xpose.msra.mxu0 0.0
    %1711 = vmatprep.subr.mxu0 0.0
    %1712 = vmatpush1.xpose.msra.mxu0 0.0
    %1713 = vmatprep.subr.mxu0 0.0
    %1714 = vmatpush1.xpose.msra.mxu0 0.0
    %1715 = vmatprep.subr.mxu0 0.0
    %1716 = vmatpush1.xpose.msra.mxu0 0.0
    %1717 = vmatprep.subr.mxu0 0.0
    %1718 = vmatpush1.xpose.msra.mxu0 0.0
    %1719 = vmatprep.subr.mxu0 0.0
    %1720 = vmatpush1.xpose.msra.mxu0 0.0
    %1721 = vmatprep.subr.mxu0 0.0
    %1722 = vmatpush1.xpose.msra.mxu0 0.0
    %1723 = vmatprep.subr.mxu0 0.0
    %1724 = vmatpush1.xpose.msra.mxu0 0.0
    %1725 = vmatprep.subr.mxu0 0.0
    %1726 = vmatpush1.xpose.msra.mxu0 0.0
    %1727 = vmatprep.subr.mxu0 0.0
    %1728 = vmatpush1.xpose.msra.mxu0 0.0
    %1729 = vmatprep.subr.mxu0 0.0
    %1730 = vmatpush1.xpose.msra.mxu0 0.0
    %1731 = vmatprep.subr.mxu0 0.0
    %1732 = vmatpush1.xpose.msra.mxu0 0.0
    %1733 = vmatprep.subr.mxu0 0.0
    %1734 = vmatpush1.xpose.msra.mxu0 0.0
    %1735 = vmatprep.subr.mxu0 0.0
    %1736 = vmatpush1.xpose.msra.mxu0 0.0
    %1737 = vmatprep.subr.mxu0 0.0
    %1738 = vmatpush1.xpose.msra.mxu0 0.0
    %1739 = vmatprep.subr.mxu0 0.0
    %1740 = vmatpush1.xpose.msra.mxu0 0.0
    %1741 = vmatprep.subr.mxu0 0.0
    %1742 = vmatpush1.xpose.msra.mxu0 0.0
    %1743 = vmatprep.subr.mxu0 0.0
    %1744 = vmatpush1.xpose.msra.mxu0 0.0
    %1745 = vmatprep.subr.mxu0 0.0
    %1746 = vmatpush1.xpose.msra.mxu0 0.0
    %1747 = vmatprep.subr.mxu0 0.0
    %1748 = vmatpush1.xpose.msra.mxu0 0.0
    %1749 = vmatprep.subr.mxu0 0.0
    %1750 = vmatpush1.xpose.msra.mxu0 0.0
    %1751 = vmatprep.subr.mxu0 0.0
    %1752 = vmatpush1.xpose.msra.mxu0 0.0
    %1753 = vmatprep.subr.mxu0 0.0
    %1754 = vmatpush1.xpose.msra.mxu0 0.0
    %1755 = vmatprep.subr.mxu0 0.0
    %1756 = vmatpush1.xpose.msra.mxu0 0.0
    %1757 = vmatprep.subr.mxu0 0.0
    %1758 = vmatpush1.xpose.msra.mxu0 0.0
    %1759 = vmatprep.subr.mxu0 0.0
    %1760 = vmatpush1.xpose.msra.mxu0 0.0
    %1761 = vmatprep.subr.mxu0 0.0
    %1762 = vmatpush1.xpose.msra.mxu0 0.0
    %1763 = vmatprep.subr.mxu0 0.0
    %1764 = vmatpush1.xpose.msra.mxu0 0.0
    %1765 = vmatprep.subr.mxu0 0.0
    %1766 = vmatpush1.xpose.msra.mxu0 0.0
    %1767 = vmatprep.subr.mxu0 0.0
    %1768 = vmatpush1.xpose.msra.mxu0 0.0
    %1769 = vmatprep.subr.mxu0 0.0
    %1770 = vmatpush1.xpose.msra.mxu0 0.0
    %1771 = vmatprep.mubr.f32.mxu0 0.0
    %1772 = vmatmul.mubr.f32.gmra.mrb[0].mxu0 %v1703
    %v1773 = vpop.f32.mrb[0].mxu0
    %v1774 = vadd.f32 0.0, %v1773
    %v1775 = vpop.f32.mrb[0].mxu0
    %1776 = vdwg.mxu0
    %v1777 = vmul.f32 %v1696, 0.35355338
    %v1778 = vmul.f32 %v1774, 0.35355338
    %v1779 = vsel %vm387, %v1777, -inf
    %1780 = vmax.xlane.f32.xlu0 %v1779
    %v1781 = vpop.xlane.xlu0 %1780
    %v1782 = vsel %vm387, %v1778, -inf
    %1783 = vmax.xlane.f32.xlu0 %v1782
    %v1784 = vpop.xlane.xlu0 %1783
    %v1785 = vsub.f32 %v1777, %v1781
    %v1786 = vsub.f32 %v1778, %v1784
    %v1787 = vmul.f32 %v1785, 1.442695
    %v1788 = vpow.pop %v1787
    %v1789 = vmul.f32 %v1786, 1.442695
    %v1790 = vpow.pop %v1789
    %v1791 = vsel %vm387, %v1788, 0.0
    %1792 = vadd.xlane.f32.xlu0 %v1791
    %v1793 = vpop.xlane.xlu0 %1792
    %v1794 = vsel %vm387, %v1790, 0.0
    %1795 = vadd.xlane.f32.xlu0 %v1794
    %v1796 = vpop.xlane.xlu0 %1795
    %v1797 = vrcp.pop %v1793
    %v1798 = vrcp.pop %v1796
    %v1799 = vmul.f32 %v1788, %v1797
    %v1800 = vmul.f32 %v1790, %v1798
    %1801 = vrot.lane.b32.xlu0 %v379, 104
    %v1802 = vpop.permute.xlu0 %1801
    %v1805 = vsel %vm387, %v1799, 0
    %1807 = vmatprep.subr.mxu0 0.0
    %1808 = vmatpush1.msra.mxu0 %v1802
    %1809 = vmatprep.subr.mxu0 0.0
    %1810 = vmatpush1.msra.mxu0 0.0
    %1811 = vmatprep.subr.mxu0 0.0
    %1812 = vmatpush1.msra.mxu0 0.0
    %1813 = vmatprep.subr.mxu0 0.0
    %1814 = vmatpush1.msra.mxu0 0.0
    %1815 = vmatprep.subr.mxu0 0.0
    %1816 = vmatpush1.msra.mxu0 0.0
    %1817 = vmatprep.subr.mxu0 0.0
    %1818 = vmatpush1.msra.mxu0 0.0
    %1819 = vmatprep.subr.mxu0 0.0
    %1820 = vmatpush1.msra.mxu0 0.0
    %1821 = vmatprep.subr.mxu0 0.0
    %1822 = vmatpush1.msra.mxu0 0.0
    %1823 = vmatprep.subr.mxu0 0.0
    %1824 = vmatpush1.msra.mxu0 0.0
    %1825 = vmatprep.subr.mxu0 0.0
    %1826 = vmatpush1.msra.mxu0 0.0
    %1827 = vmatprep.subr.mxu0 0.0
    %1828 = vmatpush1.msra.mxu0 0.0
    %1829 = vmatprep.subr.mxu0 0.0
    %1830 = vmatpush1.msra.mxu0 0.0
    %1831 = vmatprep.subr.mxu0 0.0
    %1832 = vmatpush1.msra.mxu0 0.0
    %1833 = vmatprep.subr.mxu0 0.0
    %1834 = vmatpush1.msra.mxu0 0.0
    %1835 = vmatprep.subr.mxu0 0.0
    %1836 = vmatpush1.msra.mxu0 0.0
    %1837 = vmatprep.subr.mxu0 0.0
    %1838 = vmatpush1.msra.mxu0 0.0
    %1839 = vmatprep.subr.mxu0 0.0
    %1840 = vmatpush1.msra.mxu0 0.0
    %1841 = vmatprep.subr.mxu0 0.0
    %1842 = vmatpush1.msra.mxu0 0.0
    %1843 = vmatprep.subr.mxu0 0.0
    %1844 = vmatpush1.msra.mxu0 0.0
    %1845 = vmatprep.subr.mxu0 0.0
    %1846 = vmatpush1.msra.mxu0 0.0
    %1847 = vmatprep.subr.mxu0 0.0
    %1848 = vmatpush1.msra.mxu0 0.0
    %1849 = vmatprep.subr.mxu0 0.0
    %1850 = vmatpush1.msra.mxu0 0.0
    %1851 = vmatprep.subr.mxu0 0.0
    %1852 = vmatpush1.msra.mxu0 0.0
    %1853 = vmatprep.subr.mxu0 0.0
    %1854 = vmatpush1.msra.mxu0 0.0
    %1855 = vmatprep.subr.mxu0 0.0
    %1856 = vmatpush1.msra.mxu0 0.0
    %1857 = vmatprep.subr.mxu0 0.0
    %1858 = vmatpush1.msra.mxu0 0.0
    %1859 = vmatprep.subr.mxu0 0.0
    %1860 = vmatpush1.msra.mxu0 0.0
    %1861 = vmatprep.subr.mxu0 0.0
    %1862 = vmatpush1.msra.mxu0 0.0
    %1863 = vmatprep.subr.mxu0 0.0
    %1864 = vmatpush1.msra.mxu0 0.0
    %1865 = vmatprep.subr.mxu0 0.0
    %1866 = vmatpush1.msra.mxu0 0.0
    %1867 = vmatprep.subr.mxu0 0.0
    %1868 = vmatpush1.msra.mxu0 0.0
    %1869 = vmatprep.subr.mxu0 0.0
    %1870 = vmatpush1.msra.mxu0 0.0
    %1871 = vmatprep.mubr.f32.mxu0 0.0
    %1872 = vmatmul.mubr.f32.gmra.mrb[0].mxu0 %v1805
    %v1873 = vpop.f32.mrb[0].mxu0
    %v1874 = vadd.f32 0.0, %v1873
    %v1875 = vpop.f32.mrb[0].mxu0
    %1876 = vdwg.mxu0
    %1877 = vrot.lane.b32.xlu0 %v384, 104
    %v1878 = vpop.permute.xlu0 %1877
    %v1881 = vsel %vm387, %v1800, 0
    %1883 = vmatprep.subr.mxu0 0.0
    %1884 = vmatpush1.msra.mxu0 %v1878
    %1885 = vmatprep.subr.mxu0 0.0
    %1886 = vmatpush1.msra.mxu0 0.0
    %1887 = vmatprep.subr.mxu0 0.0
    %1888 = vmatpush1.msra.mxu0 0.0
    %1889 = vmatprep.subr.mxu0 0.0
    %1890 = vmatpush1.msra.mxu0 0.0
    %1891 = vmatprep.subr.mxu0 0.0
    %1892 = vmatpush1.msra.mxu0 0.0
    %1893 = vmatprep.subr.mxu0 0.0
    %1894 = vmatpush1.msra.mxu0 0.0
    %1895 = vmatprep.subr.mxu0 0.0
    %1896 = vmatpush1.msra.mxu0 0.0
    %1897 = vmatprep.subr.mxu0 0.0
    %1898 = vmatpush1.msra.mxu0 0.0
    %1899 = vmatprep.subr.mxu0 0.0
    %1900 = vmatpush1.msra.mxu0 0.0
    %1901 = vmatprep.subr.mxu0 0.0
    %1902 = vmatpush1.msra.mxu0 0.0
    %1903 = vmatprep.subr.mxu0 0.0
    %1904 = vmatpush1.msra.mxu0 0.0
    %1905 = vmatprep.subr.mxu0 0.0
    %1906 = vmatpush1.msra.mxu0 0.0
    %1907 = vmatprep.subr.mxu0 0.0
    %1908 = vmatpush1.msra.mxu0 0.0
    %1909 = vmatprep.subr.mxu0 0.0
    %1910 = vmatpush1.msra.mxu0 0.0
    %1911 = vmatprep.subr.mxu0 0.0
    %1912 = vmatpush1.msra.mxu0 0.0
    %1913 = vmatprep.subr.mxu0 0.0
    %1914 = vmatpush1.msra.mxu0 0.0
    %1915 = vmatprep.subr.mxu0 0.0
    %1916 = vmatpush1.msra.mxu0 0.0
    %1917 = vmatprep.subr.mxu0 0.0
    %1918 = vmatpush1.msra.mxu0 0.0
    %1919 = vmatprep.subr.mxu0 0.0
    %1920 = vmatpush1.msra.mxu0 0.0
    %1921 = vmatprep.subr.mxu0 0.0
    %1922 = vmatpush1.msra.mxu0 0.0
    %1923 = vmatprep.subr.mxu0 0.0
    %1924 = vmatpush1.msra.mxu0 0.0
    %1925 = vmatprep.subr.mxu0 0.0
    %1926 = vmatpush1.msra.mxu0 0.0
    %1927 = vmatprep.subr.mxu0 0.0
    %1928 = vmatpush1.msra.mxu0 0.0
    %1929 = vmatprep.subr.mxu0 0.0
    %1930 = vmatpush1.msra.mxu0 0.0
    %1931 = vmatprep.subr.mxu0 0.0
    %1932 = vmatpush1.msra.mxu0 0.0
    %1933 = vmatprep.subr.mxu0 0.0
    %1934 = vmatpush1.msra.mxu0 0.0
    %1935 = vmatprep.subr.mxu0 0.0
    %1936 = vmatpush1.msra.mxu0 0.0
    %1937 = vmatprep.subr.mxu0 0.0
    %1938 = vmatpush1.msra.mxu0 0.0
    %1939 = vmatprep.subr.mxu0 0.0
    %1940 = vmatpush1.msra.mxu0 0.0
    %1941 = vmatprep.subr.mxu0 0.0
    %1942 = vmatpush1.msra.mxu0 0.0
    %1943 = vmatprep.subr.mxu0 0.0
    %1944 = vmatpush1.msra.mxu0 0.0
    %1945 = vmatprep.subr.mxu0 0.0
    %1946 = vmatpush1.msra.mxu0 0.0
    %1947 = vmatprep.mubr.f32.mxu0 0.0
    %1948 = vmatmul.mubr.f32.gmra.mrb[0].mxu0 %v1881
    %v1949 = vpop.f32.mrb[0].mxu0
    %v1950 = vadd.f32 0.0, %v1949
    %v1951 = vpop.f32.mrb[0].mxu0
    %1952 = vdwg.mxu0
    %v1954 = vsel %vm387, %v1874, 0
    %v1957 = vsel %vm387, %v1950, 0
    %1959 = vmatprep.subr.mxu0 0.0
    %1960 = vmatpush1.msra.mxu0 %v199
    %1961 = vmatprep.subr.mxu0 0.0
    %1962 = vmatpush1.msra.mxu0 0.0
    %1963 = vmatprep.subr.mxu0 0.0
    %1964 = vmatpush1.msra.mxu0 0.0
    %1965 = vmatprep.subr.mxu0 0.0
    %1966 = vmatpush1.msra.mxu0 0.0
    %1967 = vmatprep.subr.mxu0 0.0
    %1968 = vmatpush1.msra.mxu0 0.0
    %1969 = vmatprep.subr.mxu0 0.0
    %1970 = vmatpush1.msra.mxu0 0.0
    %1971 = vmatprep.subr.mxu0 0.0
    %1972 = vmatpush1.msra.mxu0 0.0
    %1973 = vmatprep.subr.mxu0 0.0
    %1974 = vmatpush1.msra.mxu0 0.0
    %1975 = vmatprep.subr.mxu0 0.0
    %1976 = vmatpush1.msra.mxu0 0.0
    %1977 = vmatprep.subr.mxu0 0.0
    %1978 = vmatpush1.msra.mxu0 0.0
    %1979 = vmatprep.subr.mxu0 0.0
    %1980 = vmatpush1.msra.mxu0 0.0
    %1981 = vmatprep.subr.mxu0 0.0
    %1982 = vmatpush1.msra.mxu0 0.0
    %1983 = vmatprep.subr.mxu0 0.0
    %1984 = vmatpush1.msra.mxu0 0.0
    %1985 = vmatprep.subr.mxu0 0.0
    %1986 = vmatpush1.msra.mxu0 0.0
    %1987 = vmatprep.subr.mxu0 0.0
    %1988 = vmatpush1.msra.mxu0 0.0
    %1989 = vmatprep.subr.mxu0 0.0
    %1990 = vmatpush1.msra.mxu0 0.0
    %1991 = vmatprep.subr.mxu0 0.0
    %1992 = vmatpush1.msra.mxu0 0.0
    %1993 = vmatprep.subr.mxu0 0.0
    %1994 = vmatpush1.msra.mxu0 0.0
    %1995 = vmatprep.subr.mxu0 0.0
    %1996 = vmatpush1.msra.mxu0 0.0
    %1997 = vmatprep.subr.mxu0 0.0
    %1998 = vmatpush1.msra.mxu0 0.0
    %1999 = vmatprep.subr.mxu0 0.0
    %2000 = vmatpush1.msra.mxu0 0.0
    %2001 = vmatprep.subr.mxu0 0.0
    %2002 = vmatpush1.msra.mxu0 0.0
    %2003 = vmatprep.subr.mxu0 0.0
    %2004 = vmatpush1.msra.mxu0 0.0
    %2005 = vmatprep.subr.mxu0 0.0
    %2006 = vmatpush1.msra.mxu0 0.0
    %2007 = vmatprep.subr.mxu0 0.0
    %2008 = vmatpush1.msra.mxu0 0.0
    %2009 = vmatprep.subr.mxu0 0.0
    %2010 = vmatpush1.msra.mxu0 0.0
    %2011 = vmatprep.subr.mxu0 0.0
    %2012 = vmatpush1.msra.mxu0 0.0
    %2013 = vmatprep.subr.mxu0 0.0
    %2014 = vmatpush1.msra.mxu0 0.0
    %2015 = vmatprep.subr.mxu0 0.0
    %2016 = vmatpush1.msra.mxu0 0.0
    %2017 = vmatprep.subr.mxu0 0.0
    %2018 = vmatpush1.msra.mxu0 0.0
    %2019 = vmatprep.subr.mxu0 0.0
    %2020 = vmatpush1.msra.mxu0 0.0
    %2021 = vmatprep.subr.mxu0 0.0
    %2022 = vmatpush1.msra.mxu0 0.0
    %2023 = vmatprep.mubr.f32.mxu0 0.0
    %2024 = vmatmul.mubr.f32.gmra.mrb[0].mxu0 %v1954
    %v2025 = vpop.f32.mrb[0].mxu0
    %v2026 = vadd.f32 0.0, %v2025
    %v2027 = vpop.f32.mrb[0].mxu0
    %2028 = vmatprep.mubr.f32.mxu0 0.0
    %2029 = vmatmul.mubr.f32.gmra.mrb[0].mxu0 %v1957
    %v2030 = vpop.f32.mrb[0].mxu0
    %v2031 = vadd.f32 0.0, %v2030
    %v2032 = vpop.f32.mrb[0].mxu0
    %2033 = vdwg.mxu0
    %v2034 = vadd.f32 %v1619, %v2026
    %v2035 = vadd.f32 %v1620, %v2031
    %v2036 = vlaneseq
    %v2037 = vshrl.u32 %v2036, 7
    %v2038 = vsub.s32 0, %v2037
    %v2039 = vrot.slane %v195, %v2038
    %v2040 = vadd.f32 %v2034, %v2039
    %v2041 = vadd.f32 %v2035, %v2039
    %v2042 = vadd.f32 %v193, %v2040
    %v2043 = vadd.f32 %v194, %v2041
    %v2044 = vsel %vm151, %v2042, 0.0
    %2045 = vadd.xlane.f32.xlu0 %v2044
    %v2046 = vpop.xlane.xlu0 %2045
    %v2047 = vsel %vm151, %v2043, 0.0
    %2048 = vadd.xlane.f32.xlu0 %v2047
    %v2049 = vpop.xlane.xlu0 %2048
    %v2050 = vmul.f32 %v2046, %v158
    %v2051 = vmul.f32 %v2049, %v158
    %v2052 = vmul.f32 %v2042, %v2042
    %v2053 = vmul.f32 %v2043, %v2043
    %v2054 = vsel %vm151, %v2052, 0.0
    %2055 = vadd.xlane.f32.xlu0 %v2054
    %v2056 = vpop.xlane.xlu0 %2055
    %v2057 = vsel %vm151, %v2053, 0.0
    %2058 = vadd.xlane.f32.xlu0 %v2057
    %v2059 = vpop.xlane.xlu0 %2058
    %v2060 = vmul.f32 %v2056, %v158
    %v2061 = vmul.f32 %v2059, %v158
    %v2062 = vmul.f32 %v2050, %v2050
    %v2063 = vmul.f32 %v2051, %v2051
    %v2064 = vsub.f32 %v2060, %v2062
    %v2065 = vsub.f32 %v2061, %v2063
    %v2066 = vsub.f32 %v2042, %v2050
    %v2067 = vsub.f32 %v2043, %v2051
    %v2068 = vadd.f32 %v2064, 1e-12
    %v2069 = vadd.f32 %v2065, 1e-12
    %v2070 = vrsqrt.pop %v2068
    %v2071 = vrsqrt.pop %v2069
    %v2072 = vmul.f32 %v2066, %v2070
    %v2073 = vmul.f32 %v2067, %v2071
    %v2074 = vlaneseq
    %v2075 = vshrl.u32 %v2074, 7
    %v2076 = vsub.s32 1, %v2075
    %v2077 = vrot.slane %v195, %v2076
    %v2078 = vmul.f32 %v2072, %v2077
    %v2079 = vmul.f32 %v2073, %v2077
    %v2080 = vlaneseq
    %v2081 = vshrl.u32 %v2080, 7
    %v2082 = vsub.s32 2, %v2081
    %v2083 = vrot.slane %v195, %v2082
    %v2084 = vadd.f32 %v2078, %v2083
    %v2085 = vadd.f32 %v2079, %v2083
    %v2086 = vld [vmem:[%s7] sm:$0xff]
    %v2087 = vld [vmem:[%s7 + $0x8] sm:$0xff]
    %v2088 = vld [vmem:[%s7 + $0x10] sm:$0xff]
    %v2089 = vld [vmem:[%s7 + $0x18] sm:$0xff]
    %v2090 = vld [vmem:[%s10] sm:$0x1]
    %v2092 = vlaneseq
    %v2093 = vshrl.u32 %v2092, 7
    %v2094 = vsub.s32 0, %v2093
    %v2095 = vrot.slane %v2090, %v2094
    %v2098 = vsel %vm151, %v2084, 0
    %v2101 = vsel %vm151, %v2085, 0
    %2103 = vmatprep.subr.mxu0 0.0
    %2104 = vmatpush1.msra.mxu0 %v2086
    %2105 = vmatprep.subr.mxu0 0.0
    %2106 = vmatpush1.msra.mxu0 %v2087
    %2107 = vmatprep.subr.mxu0 0.0
    %2108 = vmatpush1.msra.mxu0 %v2088
    %2109 = vmatprep.subr.mxu0 0.0
    %2110 = vmatpush1.msra.mxu0 %v2089
    %2111 = vmatprep.subr.mxu0 0.0
    %2112 = vmatpush1.msra.mxu0 0.0
    %2113 = vmatprep.subr.mxu0 0.0
    %2114 = vmatpush1.msra.mxu0 0.0
    %2115 = vmatprep.subr.mxu0 0.0
    %2116 = vmatpush1.msra.mxu0 0.0
    %2117 = vmatprep.subr.mxu0 0.0
    %2118 = vmatpush1.msra.mxu0 0.0
    %2119 = vmatprep.subr.mxu0 0.0
    %2120 = vmatpush1.msra.mxu0 0.0
    %2121 = vmatprep.subr.mxu0 0.0
    %2122 = vmatpush1.msra.mxu0 0.0
    %2123 = vmatprep.subr.mxu0 0.0
    %2124 = vmatpush1.msra.mxu0 0.0
    %2125 = vmatprep.subr.mxu0 0.0
    %2126 = vmatpush1.msra.mxu0 0.0
    %2127 = vmatprep.subr.mxu0 0.0
    %2128 = vmatpush1.msra.mxu0 0.0
    %2129 = vmatprep.subr.mxu0 0.0
    %2130 = vmatpush1.msra.mxu0 0.0
    %2131 = vmatprep.subr.mxu0 0.0
    %2132 = vmatpush1.msra.mxu0 0.0
    %2133 = vmatprep.subr.mxu0 0.0
    %2134 = vmatpush1.msra.mxu0 0.0
    %2135 = vmatprep.subr.mxu0 0.0
    %2136 = vmatpush1.msra.mxu0 0.0
    %2137 = vmatprep.subr.mxu0 0.0
    %2138 = vmatpush1.msra.mxu0 0.0
    %2139 = vmatprep.subr.mxu0 0.0
    %2140 = vmatpush1.msra.mxu0 0.0
    %2141 = vmatprep.subr.mxu0 0.0
    %2142 = vmatpush1.msra.mxu0 0.0
    %2143 = vmatprep.subr.mxu0 0.0
    %2144 = vmatpush1.msra.mxu0 0.0
    %2145 = vmatprep.subr.mxu0 0.0
    %2146 = vmatpush1.msra.mxu0 0.0
    %2147 = vmatprep.subr.mxu0 0.0
    %2148 = vmatpush1.msra.mxu0 0.0
    %2149 = vmatprep.subr.mxu0 0.0
    %2150 = vmatpush1.msra.mxu0 0.0
    %2151 = vmatprep.subr.mxu0 0.0
    %2152 = vmatpush1.msra.mxu0 0.0
    %2153 = vmatprep.subr.mxu0 0.0
    %2154 = vmatpush1.msra.mxu0 0.0
    %2155 = vmatprep.subr.mxu0 0.0
    %2156 = vmatpush1.msra.mxu0 0.0
    %2157 = vmatprep.subr.mxu0 0.0
    %2158 = vmatpush1.msra.mxu0 0.0
    %2159 = vmatprep.subr.mxu0 0.0
    %2160 = vmatpush1.msra.mxu0 0.0
    %2161 = vmatprep.subr.mxu0 0.0
    %2162 = vmatpush1.msra.mxu0 0.0
    %2163 = vmatprep.subr.mxu0 0.0
    %2164 = vmatpush1.msra.mxu0 0.0
    %2165 = vmatprep.subr.mxu0 0.0
    %2166 = vmatpush1.msra.mxu0 0.0
    %2167 = vmatprep.mubr.f32.mxu0 0.0
    %2168 = vmatmul.mubr.f32.gmra.mrb[0].mxu0 %v2098
    %v2169 = vpop.f32.mrb[0].mxu0
    %v2170 = vadd.f32 %v2095, %v2169
    %v2171 = vpop.f32.mrb[0].mxu0
    %2172 = vmatprep.mubr.f32.mxu0 0.0
    %2173 = vmatmul.mubr.f32.gmra.mrb[0].mxu0 %v2101
    %v2174 = vpop.f32.mrb[0].mxu0
    %v2175 = vadd.f32 %v2095, %v2174
    %v2176 = vpop.f32.mrb[0].mxu0
    %2177 = vdwg.mxu0
    %v2178 = vmul.f32 %v2170, %v2170
    %v2179 = vmul.f32 %v2175, %v2175
    %v2180 = vmul.f32 %v2170, %v2178
    %v2181 = vmul.f32 %v2175, %v2179
    %v2182 = vmul.f32 %v2180, 0.044715
    %v2183 = vmul.f32 %v2181, 0.044715
    %v2184 = vadd.f32 %v2170, %v2182
    %v2185 = vadd.f32 %v2175, %v2183
    %v2186 = vmul.f32 %v2184, 0.7978846
    %v2187 = vmul.f32 %v2185, 0.7978846
    %v2188 = vtanh.pop %v2186
    %v2189 = vtanh.pop %v2187
    %v2190 = vadd.f32 %v2188, 1.0
    %v2191 = vadd.f32 %v2189, 1.0
    %v2192 = vmul.f32 %v2190, 0.5
    %v2193 = vmul.f32 %v2191, 0.5
    %v2194 = vmul.f32 %v2170, %v2192
    %v2195 = vmul.f32 %v2175, %v2193
    %v2196 = vld [vmem:[%s8] sm:$0xff]
    %v2197 = vld [vmem:[%s8 + $0x8] sm:$0xff]
    %v2198 = vld [vmem:[%s8 + $0x10] sm:$0xff]
    %v2199 = vld [vmem:[%s8 + $0x18] sm:$0xff]
    %v2200 = vld [vmem:[%s8 + $0x20] sm:$0xff]
    %v2201 = vld [vmem:[%s8 + $0x28] sm:$0xff]
    %v2202 = vld [vmem:[%s8 + $0x30] sm:$0xff]
    %v2203 = vld [vmem:[%s8 + $0x38] sm:$0xff]
    %v2204 = vlaneseq
    %v2205 = vshrl.u32 %v2204, 7
    %v2206 = vsub.s32 3, %v2205
    %v2207 = vrot.slane %v195, %v2206
    %vm2208 = vcmask 523264
    %v2210 = vsel %vm2208, %v2194, 0
    %v2213 = vsel %vm2208, %v2195, 0
    %2215 = vmatprep.subr.mxu0 0.0
    %2216 = vmatpush1.msra.mxu0 %v2196
    %2217 = vmatprep.subr.mxu0 0.0
    %2218 = vmatpush1.msra.mxu0 %v2197
    %2219 = vmatprep.subr.mxu0 0.0
    %2220 = vmatpush1.msra.mxu0 %v2198
    %2221 = vmatprep.subr.mxu0 0.0
    %2222 = vmatpush1.msra.mxu0 %v2199
    %2223 = vmatprep.subr.mxu0 0.0
    %2224 = vmatpush1.msra.mxu0 %v2200
    %2225 = vmatprep.subr.mxu0 0.0
    %2226 = vmatpush1.msra.mxu0 %v2201
    %2227 = vmatprep.subr.mxu0 0.0
    %2228 = vmatpush1.msra.mxu0 %v2202
    %2229 = vmatprep.subr.mxu0 0.0
    %2230 = vmatpush1.msra.mxu0 %v2203
    %2231 = vmatprep.subr.mxu0 0.0
    %2232 = vmatpush1.msra.mxu0 0.0
    %2233 = vmatprep.subr.mxu0 0.0
    %2234 = vmatpush1.msra.mxu0 0.0
    %2235 = vmatprep.subr.mxu0 0.0
    %2236 = vmatpush1.msra.mxu0 0.0
    %2237 = vmatprep.subr.mxu0 0.0
    %2238 = vmatpush1.msra.mxu0 0.0
    %2239 = vmatprep.subr.mxu0 0.0
    %2240 = vmatpush1.msra.mxu0 0.0
    %2241 = vmatprep.subr.mxu0 0.0
    %2242 = vmatpush1.msra.mxu0 0.0
    %2243 = vmatprep.subr.mxu0 0.0
    %2244 = vmatpush1.msra.mxu0 0.0
    %2245 = vmatprep.subr.mxu0 0.0
    %2246 = vmatpush1.msra.mxu0 0.0
    %2247 = vmatprep.subr.mxu0 0.0
    %2248 = vmatpush1.msra.mxu0 0.0
    %2249 = vmatprep.subr.mxu0 0.0
    %2250 = vmatpush1.msra.mxu0 0.0
    %2251 = vmatprep.subr.mxu0 0.0
    %2252 = vmatpush1.msra.mxu0 0.0
    %2253 = vmatprep.subr.mxu0 0.0
    %2254 = vmatpush1.msra.mxu0 0.0
    %2255 = vmatprep.subr.mxu0 0.0
    %2256 = vmatpush1.msra.mxu0 0.0
    %2257 = vmatprep.subr.mxu0 0.0
    %2258 = vmatpush1.msra.mxu0 0.0
    %2259 = vmatprep.subr.mxu0 0.0
    %2260 = vmatpush1.msra.mxu0 0.0
    %2261 = vmatprep.subr.mxu0 0.0
    %2262 = vmatpush1.msra.mxu0 0.0
    %2263 = vmatprep.subr.mxu0 0.0
    %2264 = vmatpush1.msra.mxu0 0.0
    %2265 = vmatprep.subr.mxu0 0.0
    %2266 = vmatpush1.msra.mxu0 0.0
    %2267 = vmatprep.subr.mxu0 0.0
    %2268 = vmatpush1.msra.mxu0 0.0
    %2269 = vmatprep.subr.mxu0 0.0
    %2270 = vmatpush1.msra.mxu0 0.0
    %2271 = vmatprep.subr.mxu0 0.0
    %2272 = vmatpush1.msra.mxu0 0.0
    %2273 = vmatprep.subr.mxu0 0.0
    %2274 = vmatpush1.msra.mxu0 0.0
    %2275 = vmatprep.subr.mxu0 0.0
    %2276 = vmatpush1.msra.mxu0 0.0
    %2277 = vmatprep.subr.mxu0 0.0
    %2278 = vmatpush1.msra.mxu0 0.0
    %2279 = vmatprep.mubr.f32.mxu0 0.0
    %2280 = vmatmul.mubr.f32.gmra.mrb[0].mxu0 %v2210
    %v2281 = vpop.f32.mrb[0].mxu0
    %v2282 = vadd.f32 %v2207, %v2281
    %v2283 = vpop.f32.mrb[0].mxu0
    %2284 = vmatprep.mubr.f32.mxu0 0.0
    %2285 = vmatmul.mubr.f32.gmra.mrb[0].mxu0 %v2213
    %v2286 = vpop.f32.mrb[0].mxu0
    %v2287 = vadd.f32 %v2207, %v2286
    %v2288 = vpop.f32.mrb[0].mxu0
    %2289 = vdwg.mxu0
    %v2290 = vadd.f32 %v2084, %v2282
    %v2291 = vadd.f32 %v2085, %v2287
    %v2292 = vsel %vm151, %v2290, 0.0
    %2293 = vadd.xlane.f32.xlu0 %v2292
    %v2294 = vpop.xlane.xlu0 %2293
    %v2295 = vsel %vm151, %v2291, 0.0
    %2296 = vadd.xlane.f32.xlu0 %v2295
    %v2297 = vpop.xlane.xlu0 %2296
    %v2298 = vmul.f32 %v2294, %v158
    %v2299 = vmul.f32 %v2297, %v158
    %v2300 = vmul.f32 %v2290, %v2290
    %v2301 = vmul.f32 %v2291, %v2291
    %v2302 = vsel %vm151, %v2300, 0.0
    %2303 = vadd.xlane.f32.xlu0 %v2302
    %v2304 = vpop.xlane.xlu0 %2303
    %v2305 = vsel %vm151, %v2301, 0.0
    %2306 = vadd.xlane.f32.xlu0 %v2305
    %v2307 = vpop.xlane.xlu0 %2306
    %v2308 = vmul.f32 %v2304, %v158
    %v2309 = vmul.f32 %v2307, %v158
    %v2310 = vmul.f32 %v2298, %v2298
    %v2311 = vmul.f32 %v2299, %v2299
    %v2312 = vsub.f32 %v2308, %v2310
    %v2313 = vsub.f32 %v2309, %v2311
    %v2314 = vsub.f32 %v2290, %v2298
    %v2315 = vsub.f32 %v2291, %v2299
    %v2316 = vadd.f32 %v2312, 1e-12
    %v2317 = vadd.f32 %v2313, 1e-12
    %v2318 = vrsqrt.pop %v2316
    %v2319 = vrsqrt.pop %v2317
    %v2320 = vmul.f32 %v2314, %v2318
    %v2321 = vmul.f32 %v2315, %v2319
    %v2322 = vlaneseq
    %v2323 = vshrl.u32 %v2322, 7
    %v2324 = vsub.s32 4, %v2323
    %v2325 = vrot.slane %v195, %v2324
    %v2326 = vmul.f32 %v2320, %v2325
    %v2327 = vmul.f32 %v2321, %v2325
    %v2328 = vlaneseq
    %v2329 = vshrl.u32 %v2328, 7
    %v2330 = vsub.s32 5, %v2329
    %v2331 = vrot.slane %v195, %v2330
    %v2332 = vadd.f32 %v2326, %v2331
    %v2333 = vadd.f32 %v2327, %v2331
    %s2334 = scalar_lea.vmem %s9, 8
    %v2335 = vld [vmem:[%s2334] sm:$0x3f]
    %s2336 = scalar_lea.vmem %s6, 32
    %v2337 = vld [vmem:[%s2336] sm:$0xff]
    %v2338 = vld [vmem:[%s2336 + $0x8] sm:$0xff]
    %v2339 = vld [vmem:[%s2336 + $0x10] sm:$0xff]
    %v2340 = vld [vmem:[%s2336 + $0x18] sm:$0xff]
    %s2341 = scalar_lea.vmem %s4, 96
    %v2342 = vld [vmem:[%s2341] sm:$0xff]
    %v2343 = vld [vmem:[%s2341 + $0x8] sm:$0xff]
    %v2344 = vld [vmem:[%s2341 + $0x10] sm:$0xff]
    %v2345 = vld [vmem:[%s2341 + $0x18] sm:$0xff]
    %v2346 = vld [vmem:[%s2341 + $0x20] sm:$0xff]
    %v2347 = vld [vmem:[%s2341 + $0x28] sm:$0xff]
    %v2348 = vld [vmem:[%s2341 + $0x30] sm:$0xff]
    %v2349 = vld [vmem:[%s2341 + $0x38] sm:$0xff]
    %v2350 = vld [vmem:[%s2341 + $0x40] sm:$0xff]
    %v2351 = vld [vmem:[%s2341 + $0x48] sm:$0xff]
    %v2352 = vld [vmem:[%s2341 + $0x50] sm:$0xff]
    %v2353 = vld [vmem:[%s2341 + $0x58] sm:$0xff]
    %s2354 = scalar_lea.vmem %s5, 3
    %v2355 = vld [vmem:[%s2354] sm:$0x7]
    %v2357 = vlaneseq
    %v2358 = vshrl.u32 %v2357, 7
    %v2359 = vsub.s32 0, %v2358
    %v2360 = vrot.slane %v2355, %v2359
    %v2361 = vlaneseq
    %v2362 = vshrl.u32 %v2361, 7
    %v2363 = vsub.s32 1, %v2362
    %v2364 = vrot.slane %v2355, %v2363
    %v2365 = vlaneseq
    %v2366 = vshrl.u32 %v2365, 7
    %v2367 = vsub.s32 2, %v2366
    %v2368 = vrot.slane %v2355, %v2367
    %v2373 = vsel %vm151, %v2332, 0
    %v2376 = vsel %vm151, %v2333, 0
    %2378 = vmatprep.subr.mxu0 %v2343
    %2379 = vmatpush1.msra.mxu0 %v2342
    %2380 = vmatprep.subr.mxu0 %v2346
    %2381 = vmatpush1.msra.mxu0 %v2345
    %2382 = vmatprep.subr.mxu0 %v2349
    %2383 = vmatpush1.msra.mxu0 %v2348
    %2384 = vmatprep.subr.mxu0 %v2352
    %2385 = vmatpush1.msra.mxu0 %v2351
    %2386 = vmatprep.subr.mxu0 0.0
    %2387 = vmatpush1.msra.mxu0 0.0
    %2388 = vmatprep.subr.mxu0 0.0
    %2389 = vmatpush1.msra.mxu0 0.0
    %2390 = vmatprep.subr.mxu0 0.0
    %2391 = vmatpush1.msra.mxu0 0.0
    %2392 = vmatprep.subr.mxu0 0.0
    %2393 = vmatpush1.msra.mxu0 0.0
    %2394 = vmatprep.subr.mxu0 0.0
    %2395 = vmatpush1.msra.mxu0 0.0
    %2396 = vmatprep.subr.mxu0 0.0
    %2397 = vmatpush1.msra.mxu0 0.0
    %2398 = vmatprep.subr.mxu0 0.0
    %2399 = vmatpush1.msra.mxu0 0.0
    %2400 = vmatprep.subr.mxu0 0.0
    %2401 = vmatpush1.msra.mxu0 0.0
    %2402 = vmatprep.subr.mxu0 0.0
    %2403 = vmatpush1.msra.mxu0 0.0
    %2404 = vmatprep.subr.mxu0 0.0
    %2405 = vmatpush1.msra.mxu0 0.0
    %2406 = vmatprep.subr.mxu0 0.0
    %2407 = vmatpush1.msra.mxu0 0.0
    %2408 = vmatprep.subr.mxu0 0.0
    %2409 = vmatpush1.msra.mxu0 0.0
    %2410 = vmatprep.subr.mxu0 0.0
    %2411 = vmatpush1.msra.mxu0 0.0
    %2412 = vmatprep.subr.mxu0 0.0
    %2413 = vmatpush1.msra.mxu0 0.0
    %2414 = vmatprep.subr.mxu0 0.0
    %2415 = vmatpush1.msra.mxu0 0.0
    %2416 = vmatprep.subr.mxu0 0.0
    %2417 = vmatpush1.msra.mxu0 0.0
    %2418 = vmatprep.subr.mxu0 0.0
    %2419 = vmatpush1.msra.mxu0 0.0
    %2420 = vmatprep.subr.mxu0 0.0
    %2421 = vmatpush1.msra.mxu0 0.0
    %2422 = vmatprep.subr.mxu0 0.0
    %2423 = vmatpush1.msra.mxu0 0.0
    %2424 = vmatprep.subr.mxu0 0.0
    %2425 = vmatpush1.msra.mxu0 0.0
    %2426 = vmatprep.subr.mxu0 0.0
    %2427 = vmatpush1.msra.mxu0 0.0
    %2428 = vmatprep.subr.mxu0 0.0
    %2429 = vmatpush1.msra.mxu0 0.0
    %2430 = vmatprep.subr.mxu0 0.0
    %2431 = vmatpush1.msra.mxu0 0.0
    %2432 = vmatprep.subr.mxu0 0.0
    %2433 = vmatpush1.msra.mxu0 0.0
    %2434 = vmatprep.subr.mxu0 0.0
    %2435 = vmatpush1.msra.mxu0 0.0
    %2436 = vmatprep.subr.mxu0 0.0
    %2437 = vmatpush1.msra.mxu0 0.0
    %2438 = vmatprep.subr.mxu0 0.0
    %2439 = vmatpush1.msra.mxu0 0.0
    %2440 = vmatprep.subr.mxu0 0.0
    %2441 = vmatpush1.msra.mxu0 0.0
    %2442 = vmatprep.mubr.f32.mxu0 0.0
    %2443 = vmatmul.mubr.f32.gmra.mrb[0].mxu0 %v2373
    %v2444 = vpop.f32.mrb[0].mxu0
    %v2445 = vadd.f32 %v2360, %v2444
    %v2446 = vpop.f32.mrb[0].mxu0
    %v2447 = vadd.f32 %v2364, %v2446
    %2448 = vmatprep.mubr.f32.mxu0 0.0
    %2449 = vmatmul.mubr.f32.gmra.mrb[0].mxu0 %v2376
    %v2450 = vpop.f32.mrb[0].mxu0
    %v2451 = vadd.f32 %v2360, %v2450
    %v2452 = vpop.f32.mrb[0].mxu0
    %v2453 = vadd.f32 %v2364, %v2452
    %2454 = vdwg.mxu0
    %2455 = vmatprep.subr.mxu0 0.0
    %2456 = vmatpush1.msra.mxu0 %v2344
    %2457 = vmatprep.subr.mxu0 0.0
    %2458 = vmatpush1.msra.mxu0 %v2347
    %2459 = vmatprep.subr.mxu0 0.0
    %2460 = vmatpush1.msra.mxu0 %v2350
    %2461 = vmatprep.subr.mxu0 0.0
    %2462 = vmatpush1.msra.mxu0 %v2353
    %2463 = vmatprep.subr.mxu0 0.0
    %2464 = vmatpush1.msra.mxu0 0.0
    %2465 = vmatprep.subr.mxu0 0.0
    %2466 = vmatpush1.msra.mxu0 0.0
    %2467 = vmatprep.subr.mxu0 0.0
    %2468 = vmatpush1.msra.mxu0 0.0
    %2469 = vmatprep.subr.mxu0 0.0
    %2470 = vmatpush1.msra.mxu0 0.0
    %2471 = vmatprep.subr.mxu0 0.0
    %2472 = vmatpush1.msra.mxu0 0.0
    %2473 = vmatprep.subr.mxu0 0.0
    %2474 = vmatpush1.msra.mxu0 0.0
    %2475 = vmatprep.subr.mxu0 0.0
    %2476 = vmatpush1.msra.mxu0 0.0
    %2477 = vmatprep.subr.mxu0 0.0
    %2478 = vmatpush1.msra.mxu0 0.0
    %2479 = vmatprep.subr.mxu0 0.0
    %2480 = vmatpush1.msra.mxu0 0.0
    %2481 = vmatprep.subr.mxu0 0.0
    %2482 = vmatpush1.msra.mxu0 0.0
    %2483 = vmatprep.subr.mxu0 0.0
    %2484 = vmatpush1.msra.mxu0 0.0
    %2485 = vmatprep.subr.mxu0 0.0
    %2486 = vmatpush1.msra.mxu0 0.0
    %2487 = vmatprep.subr.mxu0 0.0
    %2488 = vmatpush1.msra.mxu0 0.0
    %2489 = vmatprep.subr.mxu0 0.0
    %2490 = vmatpush1.msra.mxu0 0.0
    %2491 = vmatprep.subr.mxu0 0.0
    %2492 = vmatpush1.msra.mxu0 0.0
    %2493 = vmatprep.subr.mxu0 0.0
    %2494 = vmatpush1.msra.mxu0 0.0
    %2495 = vmatprep.subr.mxu0 0.0
    %2496 = vmatpush1.msra.mxu0 0.0
    %2497 = vmatprep.subr.mxu0 0.0
    %2498 = vmatpush1.msra.mxu0 0.0
    %2499 = vmatprep.subr.mxu0 0.0
    %2500 = vmatpush1.msra.mxu0 0.0
    %2501 = vmatprep.subr.mxu0 0.0
    %2502 = vmatpush1.msra.mxu0 0.0
    %2503 = vmatprep.subr.mxu0 0.0
    %2504 = vmatpush1.msra.mxu0 0.0
    %2505 = vmatprep.subr.mxu0 0.0
    %2506 = vmatpush1.msra.mxu0 0.0
    %2507 = vmatprep.subr.mxu0 0.0
    %2508 = vmatpush1.msra.mxu0 0.0
    %2509 = vmatprep.subr.mxu0 0.0
    %2510 = vmatpush1.msra.mxu0 0.0
    %2511 = vmatprep.subr.mxu0 0.0
    %2512 = vmatpush1.msra.mxu0 0.0
    %2513 = vmatprep.subr.mxu0 0.0
    %2514 = vmatpush1.msra.mxu0 0.0
    %2515 = vmatprep.subr.mxu0 0.0
    %2516 = vmatpush1.msra.mxu0 0.0
    %2517 = vmatprep.subr.mxu0 0.0
    %2518 = vmatpush1.msra.mxu0 0.0
    %2519 = vmatprep.mubr.f32.mxu0 0.0
    %2520 = vmatmul.mubr.f32.gmra.mrb[0].mxu0 %v2373
    %v2521 = vpop.f32.mrb[0].mxu0
    %v2522 = vadd.f32 %v2368, %v2521
    %v2523 = vpop.f32.mrb[0].mxu0
    %2524 = vmatprep.mubr.f32.mxu0 0.0
    %2525 = vmatmul.mubr.f32.gmra.mrb[0].mxu0 %v2376
    %v2526 = vpop.f32.mrb[0].mxu0
    %v2527 = vadd.f32 %v2368, %v2526
    %v2528 = vpop.f32.mrb[0].mxu0
    %2529 = vdwg.mxu0
    %v2531 = vsel %vm387, %v2445, 0
    %v2534 = vsel %vm387, %v2447, 0
    %2536 = vmatprep.subr.mxu0 0.0
    %2537 = vmatpush1.xpose.msra.mxu0 %v2534
    %2538 = vmatprep.subr.mxu0 0.0
    %2539 = vmatpush1.xpose.msra.mxu0 0.0
    %2540 = vmatprep.subr.mxu0 0.0
    %2541 = vmatpush1.xpose.msra.mxu0 0.0
    %2542 = vmatprep.subr.mxu0 0.0
    %2543 = vmatpush1.xpose.msra.mxu0 0.0
    %2544 = vmatprep.subr.mxu0 0.0
    %2545 = vmatpush1.xpose.msra.mxu0 0.0
    %2546 = vmatprep.subr.mxu0 0.0
    %2547 = vmatpush1.xpose.msra.mxu0 0.0
    %2548 = vmatprep.subr.mxu0 0.0
    %2549 = vmatpush1.xpose.msra.mxu0 0.0
    %2550 = vmatprep.subr.mxu0 0.0
    %2551 = vmatpush1.xpose.msra.mxu0 0.0
    %2552 = vmatprep.subr.mxu0 0.0
    %2553 = vmatpush1.xpose.msra.mxu0 0.0
    %2554 = vmatprep.subr.mxu0 0.0
    %2555 = vmatpush1.xpose.msra.mxu0 0.0
    %2556 = vmatprep.subr.mxu0 0.0
    %2557 = vmatpush1.xpose.msra.mxu0 0.0
    %2558 = vmatprep.subr.mxu0 0.0
    %2559 = vmatpush1.xpose.msra.mxu0 0.0
    %2560 = vmatprep.subr.mxu0 0.0
    %2561 = vmatpush1.xpose.msra.mxu0 0.0
    %2562 = vmatprep.subr.mxu0 0.0
    %2563 = vmatpush1.xpose.msra.mxu0 0.0
    %2564 = vmatprep.subr.mxu0 0.0
    %2565 = vmatpush1.xpose.msra.mxu0 0.0
    %2566 = vmatprep.subr.mxu0 0.0
    %2567 = vmatpush1.xpose.msra.mxu0 0.0
    %2568 = vmatprep.subr.mxu0 0.0
    %2569 = vmatpush1.xpose.msra.mxu0 0.0
    %2570 = vmatprep.subr.mxu0 0.0
    %2571 = vmatpush1.xpose.msra.mxu0 0.0
    %2572 = vmatprep.subr.mxu0 0.0
    %2573 = vmatpush1.xpose.msra.mxu0 0.0
    %2574 = vmatprep.subr.mxu0 0.0
    %2575 = vmatpush1.xpose.msra.mxu0 0.0
    %2576 = vmatprep.subr.mxu0 0.0
    %2577 = vmatpush1.xpose.msra.mxu0 0.0
    %2578 = vmatprep.subr.mxu0 0.0
    %2579 = vmatpush1.xpose.msra.mxu0 0.0
    %2580 = vmatprep.subr.mxu0 0.0
    %2581 = vmatpush1.xpose.msra.mxu0 0.0
    %2582 = vmatprep.subr.mxu0 0.0
    %2583 = vmatpush1.xpose.msra.mxu0 0.0
    %2584 = vmatprep.subr.mxu0 0.0
    %2585 = vmatpush1.xpose.msra.mxu0 0.0
    %2586 = vmatprep.subr.mxu0 0.0
    %2587 = vmatpush1.xpose.msra.mxu0 0.0
    %2588 = vmatprep.subr.mxu0 0.0
    %2589 = vmatpush1.xpose.msra.mxu0 0.0
    %2590 = vmatprep.subr.mxu0 0.0
    %2591 = vmatpush1.xpose.msra.mxu0 0.0
    %2592 = vmatprep.subr.mxu0 0.0
    %2593 = vmatpush1.xpose.msra.mxu0 0.0
    %2594 = vmatprep.subr.mxu0 0.0
    %2595 = vmatpush1.xpose.msra.mxu0 0.0
    %2596 = vmatprep.subr.mxu0 0.0
    %2597 = vmatpush1.xpose.msra.mxu0 0.0
    %2598 = vmatprep.subr.mxu0 0.0
    %2599 = vmatpush1.xpose.msra.mxu0 0.0
    %2600 = vmatprep.mubr.f32.mxu0 0.0
    %2601 = vmatmul.mubr.f32.gmra.mrb[0].mxu0 %v2531
    %v2602 = vpop.f32.mrb[0].mxu0
    %v2603 = vadd.f32 0.0, %v2602
    %v2604 = vpop.f32.mrb[0].mxu0
    %2605 = vdwg.mxu0
    %v2607 = vsel %vm387, %v2451, 0
    %v2610 = vsel %vm387, %v2453, 0
    %2612 = vmatprep.subr.mxu0 0.0
    %2613 = vmatpush1.xpose.msra.mxu0 %v2610
    %2614 = vmatprep.subr.mxu0 0.0
    %2615 = vmatpush1.xpose.msra.mxu0 0.0
    %2616 = vmatprep.subr.mxu0 0.0
    %2617 = vmatpush1.xpose.msra.mxu0 0.0
    %2618 = vmatprep.subr.mxu0 0.0
    %2619 = vmatpush1.xpose.msra.mxu0 0.0
    %2620 = vmatprep.subr.mxu0 0.0
    %2621 = vmatpush1.xpose.msra.mxu0 0.0
    %2622 = vmatprep.subr.mxu0 0.0
    %2623 = vmatpush1.xpose.msra.mxu0 0.0
    %2624 = vmatprep.subr.mxu0 0.0
    %2625 = vmatpush1.xpose.msra.mxu0 0.0
    %2626 = vmatprep.subr.mxu0 0.0
    %2627 = vmatpush1.xpose.msra.mxu0 0.0
    %2628 = vmatprep.subr.mxu0 0.0
    %2629 = vmatpush1.xpose.msra.mxu0 0.0
    %2630 = vmatprep.subr.mxu0 0.0
    %2631 = vmatpush1.xpose.msra.mxu0 0.0
    %2632 = vmatprep.subr.mxu0 0.0
    %2633 = vmatpush1.xpose.msra.mxu0 0.0
    %2634 = vmatprep.subr.mxu0 0.0
    %2635 = vmatpush1.xpose.msra.mxu0 0.0
    %2636 = vmatprep.subr.mxu0 0.0
    %2637 = vmatpush1.xpose.msra.mxu0 0.0
    %2638 = vmatprep.subr.mxu0 0.0
    %2639 = vmatpush1.xpose.msra.mxu0 0.0
    %2640 = vmatprep.subr.mxu0 0.0
    %2641 = vmatpush1.xpose.msra.mxu0 0.0
    %2642 = vmatprep.subr.mxu0 0.0
    %2643 = vmatpush1.xpose.msra.mxu0 0.0
    %2644 = vmatprep.subr.mxu0 0.0
    %2645 = vmatpush1.xpose.msra.mxu0 0.0
    %2646 = vmatprep.subr.mxu0 0.0
    %2647 = vmatpush1.xpose.msra.mxu0 0.0
    %2648 = vmatprep.subr.mxu0 0.0
    %2649 = vmatpush1.xpose.msra.mxu0 0.0
    %2650 = vmatprep.subr.mxu0 0.0
    %2651 = vmatpush1.xpose.msra.mxu0 0.0
    %2652 = vmatprep.subr.mxu0 0.0
    %2653 = vmatpush1.xpose.msra.mxu0 0.0
    %2654 = vmatprep.subr.mxu0 0.0
    %2655 = vmatpush1.xpose.msra.mxu0 0.0
    %2656 = vmatprep.subr.mxu0 0.0
    %2657 = vmatpush1.xpose.msra.mxu0 0.0
    %2658 = vmatprep.subr.mxu0 0.0
    %2659 = vmatpush1.xpose.msra.mxu0 0.0
    %2660 = vmatprep.subr.mxu0 0.0
    %2661 = vmatpush1.xpose.msra.mxu0 0.0
    %2662 = vmatprep.subr.mxu0 0.0
    %2663 = vmatpush1.xpose.msra.mxu0 0.0
    %2664 = vmatprep.subr.mxu0 0.0
    %2665 = vmatpush1.xpose.msra.mxu0 0.0
    %2666 = vmatprep.subr.mxu0 0.0
    %2667 = vmatpush1.xpose.msra.mxu0 0.0
    %2668 = vmatprep.subr.mxu0 0.0
    %2669 = vmatpush1.xpose.msra.mxu0 0.0
    %2670 = vmatprep.subr.mxu0 0.0
    %2671 = vmatpush1.xpose.msra.mxu0 0.0
    %2672 = vmatprep.subr.mxu0 0.0
    %2673 = vmatpush1.xpose.msra.mxu0 0.0
    %2674 = vmatprep.subr.mxu0 0.0
    %2675 = vmatpush1.xpose.msra.mxu0 0.0
    %2676 = vmatprep.mubr.f32.mxu0 0.0
    %2677 = vmatmul.mubr.f32.gmra.mrb[0].mxu0 %v2607
    %v2678 = vpop.f32.mrb[0].mxu0
    %v2679 = vadd.f32 0.0, %v2678
    %v2680 = vpop.f32.mrb[0].mxu0
    %2681 = vdwg.mxu0
    %v2682 = vmul.f32 %v2603, 0.35355338
    %v2683 = vmul.f32 %v2679, 0.35355338
    %v2684 = vsel %vm387, %v2682, -inf
    %2685 = vmax.xlane.f32.xlu0 %v2684
    %v2686 = vpop.xlane.xlu0 %2685
    %v2687 = vsel %vm387, %v2683, -inf
    %2688 = vmax.xlane.f32.xlu0 %v2687
    %v2689 = vpop.xlane.xlu0 %2688
    %v2690 = vsub.f32 %v2682, %v2686
    %v2691 = vsub.f32 %v2683, %v2689
    %v2692 = vmul.f32 %v2690, 1.442695
    %v2693 = vpow.pop %v2692
    %v2694 = vmul.f32 %v2691, 1.442695
    %v2695 = vpow.pop %v2694
    %v2696 = vsel %vm387, %v2693, 0.0
    %2697 = vadd.xlane.f32.xlu0 %v2696
    %v2698 = vpop.xlane.xlu0 %2697
    %v2699 = vsel %vm387, %v2695, 0.0
    %2700 = vadd.xlane.f32.xlu0 %v2699
    %v2701 = vpop.xlane.xlu0 %2700
    %v2702 = vrcp.pop %v2698
    %v2703 = vrcp.pop %v2701
    %v2704 = vmul.f32 %v2693, %v2702
    %v2705 = vmul.f32 %v2695, %v2703
    %v2707 = vsel %vm387, %v2704, 0
    %2709 = vmatprep.subr.mxu0 0.0
    %2710 = vmatpush1.msra.mxu0 %v2522
    %2711 = vmatprep.subr.mxu0 0.0
    %2712 = vmatpush1.msra.mxu0 0.0
    %2713 = vmatprep.subr.mxu0 0.0
    %2714 = vmatpush1.msra.mxu0 0.0
    %2715 = vmatprep.subr.mxu0 0.0
    %2716 = vmatpush1.msra.mxu0 0.0
    %2717 = vmatprep.subr.mxu0 0.0
    %2718 = vmatpush1.msra.mxu0 0.0
    %2719 = vmatprep.subr.mxu0 0.0
    %2720 = vmatpush1.msra.mxu0 0.0
    %2721 = vmatprep.subr.mxu0 0.0
    %2722 = vmatpush1.msra.mxu0 0.0
    %2723 = vmatprep.subr.mxu0 0.0
    %2724 = vmatpush1.msra.mxu0 0.0
    %2725 = vmatprep.subr.mxu0 0.0
    %2726 = vmatpush1.msra.mxu0 0.0
    %2727 = vmatprep.subr.mxu0 0.0
    %2728 = vmatpush1.msra.mxu0 0.0
    %2729 = vmatprep.subr.mxu0 0.0
    %2730 = vmatpush1.msra.mxu0 0.0
    %2731 = vmatprep.subr.mxu0 0.0
    %2732 = vmatpush1.msra.mxu0 0.0
    %2733 = vmatprep.subr.mxu0 0.0
    %2734 = vmatpush1.msra.mxu0 0.0
    %2735 = vmatprep.subr.mxu0 0.0
    %2736 = vmatpush1.msra.mxu0 0.0
    %2737 = vmatprep.subr.mxu0 0.0
    %2738 = vmatpush1.msra.mxu0 0.0
    %2739 = vmatprep.subr.mxu0 0.0
    %2740 = vmatpush1.msra.mxu0 0.0
    %2741 = vmatprep.subr.mxu0 0.0
    %2742 = vmatpush1.msra.mxu0 0.0
    %2743 = vmatprep.subr.mxu0 0.0
    %2744 = vmatpush1.msra.mxu0 0.0
    %2745 = vmatprep.subr.mxu0 0.0
    %2746 = vmatpush1.msra.mxu0 0.0
    %2747 = vmatprep.subr.mxu0 0.0
    %2748 = vmatpush1.msra.mxu0 0.0
    %2749 = vmatprep.subr.mxu0 0.0
    %2750 = vmatpush1.msra.mxu0 0.0
    %2751 = vmatprep.subr.mxu0 0.0
    %2752 = vmatpush1.msra.mxu0 0.0
    %2753 = vmatprep.subr.mxu0 0.0
    %2754 = vmatpush1.msra.mxu0 0.0
    %2755 = vmatprep.subr.mxu0 0.0
    %2756 = vmatpush1.msra.mxu0 0.0
    %2757 = vmatprep.subr.mxu0 0.0
    %2758 = vmatpush1.msra.mxu0 0.0
    %2759 = vmatprep.subr.mxu0 0.0
    %2760 = vmatpush1.msra.mxu0 0.0
    %2761 = vmatprep.subr.mxu0 0.0
    %2762 = vmatpush1.msra.mxu0 0.0
    %2763 = vmatprep.subr.mxu0 0.0
    %2764 = vmatpush1.msra.mxu0 0.0
    %2765 = vmatprep.subr.mxu0 0.0
    %2766 = vmatpush1.msra.mxu0 0.0
    %2767 = vmatprep.subr.mxu0 0.0
    %2768 = vmatpush1.msra.mxu0 0.0
    %2769 = vmatprep.subr.mxu0 0.0
    %2770 = vmatpush1.msra.mxu0 0.0
    %2771 = vmatprep.subr.mxu0 0.0
    %2772 = vmatpush1.msra.mxu0 0.0
    %2773 = vmatprep.mubr.f32.mxu0 0.0
    %2774 = vmatmul.mubr.f32.gmra.mrb[0].mxu0 %v2707
    %v2775 = vpop.f32.mrb[0].mxu0
    %v2776 = vadd.f32 0.0, %v2775
    %v2777 = vpop.f32.mrb[0].mxu0
    %2778 = vdwg.mxu0
    %v2780 = vsel %vm387, %v2705, 0
    %2782 = vmatprep.subr.mxu0 0.0
    %2783 = vmatpush1.msra.mxu0 %v2527
    %2784 = vmatprep.subr.mxu0 0.0
    %2785 = vmatpush1.msra.mxu0 0.0
    %2786 = vmatprep.subr.mxu0 0.0
    %2787 = vmatpush1.msra.mxu0 0.0
    %2788 = vmatprep.subr.mxu0 0.0
    %2789 = vmatpush1.msra.mxu0 0.0
    %2790 = vmatprep.subr.mxu0 0.0
    %2791 = vmatpush1.msra.mxu0 0.0
    %2792 = vmatprep.subr.mxu0 0.0
    %2793 = vmatpush1.msra.mxu0 0.0
    %2794 = vmatprep.subr.mxu0 0.0
    %2795 = vmatpush1.msra.mxu0 0.0
    %2796 = vmatprep.subr.mxu0 0.0
    %2797 = vmatpush1.msra.mxu0 0.0
    %2798 = vmatprep.subr.mxu0 0.0
    %2799 = vmatpush1.msra.mxu0 0.0
    %2800 = vmatprep.subr.mxu0 0.0
    %2801 = vmatpush1.msra.mxu0 0.0
    %2802 = vmatprep.subr.mxu0 0.0
    %2803 = vmatpush1.msra.mxu0 0.0
    %2804 = vmatprep.subr.mxu0 0.0
    %2805 = vmatpush1.msra.mxu0 0.0
    %2806 = vmatprep.subr.mxu0 0.0
    %2807 = vmatpush1.msra.mxu0 0.0
    %2808 = vmatprep.subr.mxu0 0.0
    %2809 = vmatpush1.msra.mxu0 0.0
    %2810 = vmatprep.subr.mxu0 0.0
    %2811 = vmatpush1.msra.mxu0 0.0
    %2812 = vmatprep.subr.mxu0 0.0
    %2813 = vmatpush1.msra.mxu0 0.0
    %2814 = vmatprep.subr.mxu0 0.0
    %2815 = vmatpush1.msra.mxu0 0.0
    %2816 = vmatprep.subr.mxu0 0.0
    %2817 = vmatpush1.msra.mxu0 0.0
    %2818 = vmatprep.subr.mxu0 0.0
    %2819 = vmatpush1.msra.mxu0 0.0
    %2820 = vmatprep.subr.mxu0 0.0
    %2821 = vmatpush1.msra.mxu0 0.0
    %2822 = vmatprep.subr.mxu0 0.0
    %2823 = vmatpush1.msra.mxu0 0.0
    %2824 = vmatprep.subr.mxu0 0.0
    %2825 = vmatpush1.msra.mxu0 0.0
    %2826 = vmatprep.subr.mxu0 0.0
    %2827 = vmatpush1.msra.mxu0 0.0
    %2828 = vmatprep.subr.mxu0 0.0
    %2829 = vmatpush1.msra.mxu0 0.0
    %2830 = vmatprep.subr.mxu0 0.0
    %2831 = vmatpush1.msra.mxu0 0.0
    %2832 = vmatprep.subr.mxu0 0.0
    %2833 = vmatpush1.msra.mxu0 0.0
    %2834 = vmatprep.subr.mxu0 0.0
    %2835 = vmatpush1.msra.mxu0 0.0
    %2836 = vmatprep.subr.mxu0 0.0
    %2837 = vmatpush1.msra.mxu0 0.0
    %2838 = vmatprep.subr.mxu0 0.0
    %2839 = vmatpush1.msra.mxu0 0.0
    %2840 = vmatprep.subr.mxu0 0.0
    %2841 = vmatpush1.msra.mxu0 0.0
    %2842 = vmatprep.subr.mxu0 0.0
    %2843 = vmatpush1.msra.mxu0 0.0
    %2844 = vmatprep.subr.mxu0 0.0
    %2845 = vmatpush1.msra.mxu0 0.0
    %2846 = vmatprep.mubr.f32.mxu0 0.0
    %2847 = vmatmul.mubr.f32.gmra.mrb[0].mxu0 %v2780
    %v2848 = vpop.f32.mrb[0].mxu0
    %v2849 = vadd.f32 0.0, %v2848
    %v2850 = vpop.f32.mrb[0].mxu0
    %2851 = vdwg.mxu0
    %2852 = vrot.lane.b32.xlu0 %v2445, 120
    %v2853 = vpop.permute.xlu0 %2852
    %2854 = vrot.lane.b32.xlu0 %v2447, 120
    %v2855 = vpop.permute.xlu0 %2854
    %v2856 = vsel %vm387, %v2853, 0
    %v2858 = vsel %vm387, %v2855, 0
    %2860 = vmatprep.subr.mxu0 0.0
    %2861 = vmatpush1.xpose.msra.mxu0 %v2858
    %2862 = vmatprep.subr.mxu0 0.0
    %2863 = vmatpush1.xpose.msra.mxu0 0.0
    %2864 = vmatprep.subr.mxu0 0.0
    %2865 = vmatpush1.xpose.msra.mxu0 0.0
    %2866 = vmatprep.subr.mxu0 0.0
    %2867 = vmatpush1.xpose.msra.mxu0 0.0
    %2868 = vmatprep.subr.mxu0 0.0
    %2869 = vmatpush1.xpose.msra.mxu0 0.0
    %2870 = vmatprep.subr.mxu0 0.0
    %2871 = vmatpush1.xpose.msra.mxu0 0.0
    %2872 = vmatprep.subr.mxu0 0.0
    %2873 = vmatpush1.xpose.msra.mxu0 0.0
    %2874 = vmatprep.subr.mxu0 0.0
    %2875 = vmatpush1.xpose.msra.mxu0 0.0
    %2876 = vmatprep.subr.mxu0 0.0
    %2877 = vmatpush1.xpose.msra.mxu0 0.0
    %2878 = vmatprep.subr.mxu0 0.0
    %2879 = vmatpush1.xpose.msra.mxu0 0.0
    %2880 = vmatprep.subr.mxu0 0.0
    %2881 = vmatpush1.xpose.msra.mxu0 0.0
    %2882 = vmatprep.subr.mxu0 0.0
    %2883 = vmatpush1.xpose.msra.mxu0 0.0
    %2884 = vmatprep.subr.mxu0 0.0
    %2885 = vmatpush1.xpose.msra.mxu0 0.0
    %2886 = vmatprep.subr.mxu0 0.0
    %2887 = vmatpush1.xpose.msra.mxu0 0.0
    %2888 = vmatprep.subr.mxu0 0.0
    %2889 = vmatpush1.xpose.msra.mxu0 0.0
    %2890 = vmatprep.subr.mxu0 0.0
    %2891 = vmatpush1.xpose.msra.mxu0 0.0
    %2892 = vmatprep.subr.mxu0 0.0
    %2893 = vmatpush1.xpose.msra.mxu0 0.0
    %2894 = vmatprep.subr.mxu0 0.0
    %2895 = vmatpush1.xpose.msra.mxu0 0.0
    %2896 = vmatprep.subr.mxu0 0.0
    %2897 = vmatpush1.xpose.msra.mxu0 0.0
    %2898 = vmatprep.subr.mxu0 0.0
    %2899 = vmatpush1.xpose.msra.mxu0 0.0
    %2900 = vmatprep.subr.mxu0 0.0
    %2901 = vmatpush1.xpose.msra.mxu0 0.0
    %2902 = vmatprep.subr.mxu0 0.0
    %2903 = vmatpush1.xpose.msra.mxu0 0.0
    %2904 = vmatprep.subr.mxu0 0.0
    %2905 = vmatpush1.xpose.msra.mxu0 0.0
    %2906 = vmatprep.subr.mxu0 0.0
    %2907 = vmatpush1.xpose.msra.mxu0 0.0
    %2908 = vmatprep.subr.mxu0 0.0
    %2909 = vmatpush1.xpose.msra.mxu0 0.0
    %2910 = vmatprep.subr.mxu0 0.0
    %2911 = vmatpush1.xpose.msra.mxu0 0.0
    %2912 = vmatprep.subr.mxu0 0.0
    %2913 = vmatpush1.xpose.msra.mxu0 0.0
    %2914 = vmatprep.subr.mxu0 0.0
    %2915 = vmatpush1.xpose.msra.mxu0 0.0
    %2916 = vmatprep.subr.mxu0 0.0
    %2917 = vmatpush1.xpose.msra.mxu0 0.0
    %2918 = vmatprep.subr.mxu0 0.0
    %2919 = vmatpush1.xpose.msra.mxu0 0.0
    %2920 = vmatprep.subr.mxu0 0.0
    %2921 = vmatpush1.xpose.msra.mxu0 0.0
    %2922 = vmatprep.subr.mxu0 0.0
    %2923 = vmatpush1.xpose.msra.mxu0 0.0
    %2924 = vmatprep.mubr.f32.mxu0 0.0
    %2925 = vmatmul.mubr.f32.gmra.mrb[0].mxu0 %v2856
    %v2926 = vpop.f32.mrb[0].mxu0
    %v2927 = vadd.f32 0.0, %v2926
    %v2928 = vpop.f32.mrb[0].mxu0
    %2929 = vdwg.mxu0
    %2930 = vrot.lane.b32.xlu0 %v2451, 120
    %v2931 = vpop.permute.xlu0 %2930
    %2932 = vrot.lane.b32.xlu0 %v2453, 120
    %v2933 = vpop.permute.xlu0 %2932
    %v2934 = vsel %vm387, %v2931, 0
    %v2936 = vsel %vm387, %v2933, 0
    %2938 = vmatprep.subr.mxu0 0.0
    %2939 = vmatpush1.xpose.msra.mxu0 %v2936
    %2940 = vmatprep.subr.mxu0 0.0
    %2941 = vmatpush1.xpose.msra.mxu0 0.0
    %2942 = vmatprep.subr.mxu0 0.0
    %2943 = vmatpush1.xpose.msra.mxu0 0.0
    %2944 = vmatprep.subr.mxu0 0.0
    %2945 = vmatpush1.xpose.msra.mxu0 0.0
    %2946 = vmatprep.subr.mxu0 0.0
    %2947 = vmatpush1.xpose.msra.mxu0 0.0
    %2948 = vmatprep.subr.mxu0 0.0
    %2949 = vmatpush1.xpose.msra.mxu0 0.0
    %2950 = vmatprep.subr.mxu0 0.0
    %2951 = vmatpush1.xpose.msra.mxu0 0.0
    %2952 = vmatprep.subr.mxu0 0.0
    %2953 = vmatpush1.xpose.msra.mxu0 0.0
    %2954 = vmatprep.subr.mxu0 0.0
    %2955 = vmatpush1.xpose.msra.mxu0 0.0
    %2956 = vmatprep.subr.mxu0 0.0
    %2957 = vmatpush1.xpose.msra.mxu0 0.0
    %2958 = vmatprep.subr.mxu0 0.0
    %2959 = vmatpush1.xpose.msra.mxu0 0.0
    %2960 = vmatprep.subr.mxu0 0.0
    %2961 = vmatpush1.xpose.msra.mxu0 0.0
    %2962 = vmatprep.subr.mxu0 0.0
    %2963 = vmatpush1.xpose.msra.mxu0 0.0
    %2964 = vmatprep.subr.mxu0 0.0
    %2965 = vmatpush1.xpose.msra.mxu0 0.0
    %2966 = vmatprep.subr.mxu0 0.0
    %2967 = vmatpush1.xpose.msra.mxu0 0.0
    %2968 = vmatprep.subr.mxu0 0.0
    %2969 = vmatpush1.xpose.msra.mxu0 0.0
    %2970 = vmatprep.subr.mxu0 0.0
    %2971 = vmatpush1.xpose.msra.mxu0 0.0
    %2972 = vmatprep.subr.mxu0 0.0
    %2973 = vmatpush1.xpose.msra.mxu0 0.0
    %2974 = vmatprep.subr.mxu0 0.0
    %2975 = vmatpush1.xpose.msra.mxu0 0.0
    %2976 = vmatprep.subr.mxu0 0.0
    %2977 = vmatpush1.xpose.msra.mxu0 0.0
    %2978 = vmatprep.subr.mxu0 0.0
    %2979 = vmatpush1.xpose.msra.mxu0 0.0
    %2980 = vmatprep.subr.mxu0 0.0
    %2981 = vmatpush1.xpose.msra.mxu0 0.0
    %2982 = vmatprep.subr.mxu0 0.0
    %2983 = vmatpush1.xpose.msra.mxu0 0.0
    %2984 = vmatprep.subr.mxu0 0.0
    %2985 = vmatpush1.xpose.msra.mxu0 0.0
    %2986 = vmatprep.subr.mxu0 0.0
    %2987 = vmatpush1.xpose.msra.mxu0 0.0
    %2988 = vmatprep.subr.mxu0 0.0
    %2989 = vmatpush1.xpose.msra.mxu0 0.0
    %2990 = vmatprep.subr.mxu0 0.0
    %2991 = vmatpush1.xpose.msra.mxu0 0.0
    %2992 = vmatprep.subr.mxu0 0.0
    %2993 = vmatpush1.xpose.msra.mxu0 0.0
    %2994 = vmatprep.subr.mxu0 0.0
    %2995 = vmatpush1.xpose.msra.mxu0 0.0
    %2996 = vmatprep.subr.mxu0 0.0
    %2997 = vmatpush1.xpose.msra.mxu0 0.0
    %2998 = vmatprep.subr.mxu0 0.0
    %2999 = vmatpush1.xpose.msra.mxu0 0.0
    %3000 = vmatprep.subr.mxu0 0.0
    %3001 = vmatpush1.xpose.msra.mxu0 0.0
    %3002 = vmatprep.mubr.f32.mxu0 0.0
    %3003 = vmatmul.mubr.f32.gmra.mrb[0].mxu0 %v2934
    %v3004 = vpop.f32.mrb[0].mxu0
    %v3005 = vadd.f32 0.0, %v3004
    %v3006 = vpop.f32.mrb[0].mxu0
    %3007 = vdwg.mxu0
    %v3008 = vmul.f32 %v2927, 0.35355338
    %v3009 = vmul.f32 %v3005, 0.35355338
    %v3010 = vsel %vm387, %v3008, -inf
    %3011 = vmax.xlane.f32.xlu0 %v3010
    %v3012 = vpop.xlane.xlu0 %3011
    %v3013 = vsel %vm387, %v3009, -inf
    %3014 = vmax.xlane.f32.xlu0 %v3013
    %v3015 = vpop.xlane.xlu0 %3014
    %v3016 = vsub.f32 %v3008, %v3012
    %v3017 = vsub.f32 %v3009, %v3015
    %v3018 = vmul.f32 %v3016, 1.442695
    %v3019 = vpow.pop %v3018
    %v3020 = vmul.f32 %v3017, 1.442695
    %v3021 = vpow.pop %v3020
    %v3022 = vsel %vm387, %v3019, 0.0
    %3023 = vadd.xlane.f32.xlu0 %v3022
    %v3024 = vpop.xlane.xlu0 %3023
    %v3025 = vsel %vm387, %v3021, 0.0
    %3026 = vadd.xlane.f32.xlu0 %v3025
    %v3027 = vpop.xlane.xlu0 %3026
    %v3028 = vrcp.pop %v3024
    %v3029 = vrcp.pop %v3027
    %v3030 = vmul.f32 %v3019, %v3028
    %v3031 = vmul.f32 %v3021, %v3029
    %3033 = vrot.lane.b32.xlu0 %v2522, 120
    %v3034 = vpop.permute.xlu0 %3033
    %v3037 = vsel %vm387, %v3030, 0
    %3039 = vmatprep.subr.mxu0 0.0
    %3040 = vmatpush1.msra.mxu0 %v3034
    %3041 = vmatprep.subr.mxu0 0.0
    %3042 = vmatpush1.msra.mxu0 0.0
    %3043 = vmatprep.subr.mxu0 0.0
    %3044 = vmatpush1.msra.mxu0 0.0
    %3045 = vmatprep.subr.mxu0 0.0
    %3046 = vmatpush1.msra.mxu0 0.0
    %3047 = vmatprep.subr.mxu0 0.0
    %3048 = vmatpush1.msra.mxu0 0.0
    %3049 = vmatprep.subr.mxu0 0.0
    %3050 = vmatpush1.msra.mxu0 0.0
    %3051 = vmatprep.subr.mxu0 0.0
    %3052 = vmatpush1.msra.mxu0 0.0
    %3053 = vmatprep.subr.mxu0 0.0
    %3054 = vmatpush1.msra.mxu0 0.0
    %3055 = vmatprep.subr.mxu0 0.0
    %3056 = vmatpush1.msra.mxu0 0.0
    %3057 = vmatprep.subr.mxu0 0.0
    %3058 = vmatpush1.msra.mxu0 0.0
    %3059 = vmatprep.subr.mxu0 0.0
    %3060 = vmatpush1.msra.mxu0 0.0
    %3061 = vmatprep.subr.mxu0 0.0
    %3062 = vmatpush1.msra.mxu0 0.0
    %3063 = vmatprep.subr.mxu0 0.0
    %3064 = vmatpush1.msra.mxu0 0.0
    %3065 = vmatprep.subr.mxu0 0.0
    %3066 = vmatpush1.msra.mxu0 0.0
    %3067 = vmatprep.subr.mxu0 0.0
    %3068 = vmatpush1.msra.mxu0 0.0
    %3069 = vmatprep.subr.mxu0 0.0
    %3070 = vmatpush1.msra.mxu0 0.0
    %3071 = vmatprep.subr.mxu0 0.0
    %3072 = vmatpush1.msra.mxu0 0.0
    %3073 = vmatprep.subr.mxu0 0.0
    %3074 = vmatpush1.msra.mxu0 0.0
    %3075 = vmatprep.subr.mxu0 0.0
    %3076 = vmatpush1.msra.mxu0 0.0
    %3077 = vmatprep.subr.mxu0 0.0
    %3078 = vmatpush1.msra.mxu0 0.0
    %3079 = vmatprep.subr.mxu0 0.0
    %3080 = vmatpush1.msra.mxu0 0.0
    %3081 = vmatprep.subr.mxu0 0.0
    %3082 = vmatpush1.msra.mxu0 0.0
    %3083 = vmatprep.subr.mxu0 0.0
    %3084 = vmatpush1.msra.mxu0 0.0
    %3085 = vmatprep.subr.mxu0 0.0
    %3086 = vmatpush1.msra.mxu0 0.0
    %3087 = vmatprep.subr.mxu0 0.0
    %3088 = vmatpush1.msra.mxu0 0.0
    %3089 = vmatprep.subr.mxu0 0.0
    %3090 = vmatpush1.msra.mxu0 0.0
    %3091 = vmatprep.subr.mxu0 0.0
    %3092 = vmatpush1.msra.mxu0 0.0
    %3093 = vmatprep.subr.mxu0 0.0
    %3094 = vmatpush1.msra.mxu0 0.0
    %3095 = vmatprep.subr.mxu0 0.0
    %3096 = vmatpush1.msra.mxu0 0.0
    %3097 = vmatprep.subr.mxu0 0.0
    %3098 = vmatpush1.msra.mxu0 0.0
    %3099 = vmatprep.subr.mxu0 0.0
    %3100 = vmatpush1.msra.mxu0 0.0
    %3101 = vmatprep.subr.mxu0 0.0
    %3102 = vmatpush1.msra.mxu0 0.0
    %3103 = vmatprep.mubr.f32.mxu0 0.0
    %3104 = vmatmul.mubr.f32.gmra.mrb[0].mxu0 %v3037
    %v3105 = vpop.f32.mrb[0].mxu0
    %v3106 = vadd.f32 0.0, %v3105
    %v3107 = vpop.f32.mrb[0].mxu0
    %3108 = vdwg.mxu0
    %3110 = vrot.lane.b32.xlu0 %v2527, 120
    %v3111 = vpop.permute.xlu0 %3110
    %v3114 = vsel %vm387, %v3031, 0
    %3116 = vmatprep.subr.mxu0 0.0
    %3117 = vmatpush1.msra.mxu0 %v3111
    %3118 = vmatprep.subr.mxu0 0.0
    %3119 = vmatpush1.msra.mxu0 0.0
    %3120 = vmatprep.subr.mxu0 0.0
    %3121 = vmatpush1.msra.mxu0 0.0
    %3122 = vmatprep.subr.mxu0 0.0
    %3123 = vmatpush1.msra.mxu0 0.0
    %3124 = vmatprep.subr.mxu0 0.0
    %3125 = vmatpush1.msra.mxu0 0.0
    %3126 = vmatprep.subr.mxu0 0.0
    %3127 = vmatpush1.msra.mxu0 0.0
    %3128 = vmatprep.subr.mxu0 0.0
    %3129 = vmatpush1.msra.mxu0 0.0
    %3130 = vmatprep.subr.mxu0 0.0
    %3131 = vmatpush1.msra.mxu0 0.0
    %3132 = vmatprep.subr.mxu0 0.0
    %3133 = vmatpush1.msra.mxu0 0.0
    %3134 = vmatprep.subr.mxu0 0.0
    %3135 = vmatpush1.msra.mxu0 0.0
    %3136 = vmatprep.subr.mxu0 0.0
    %3137 = vmatpush1.msra.mxu0 0.0
    %3138 = vmatprep.subr.mxu0 0.0
    %3139 = vmatpush1.msra.mxu0 0.0
    %3140 = vmatprep.subr.mxu0 0.0
    %3141 = vmatpush1.msra.mxu0 0.0
    %3142 = vmatprep.subr.mxu0 0.0
    %3143 = vmatpush1.msra.mxu0 0.0
    %3144 = vmatprep.subr.mxu0 0.0
    %3145 = vmatpush1.msra.mxu0 0.0
    %3146 = vmatprep.subr.mxu0 0.0
    %3147 = vmatpush1.msra.mxu0 0.0
    %3148 = vmatprep.subr.mxu0 0.0
    %3149 = vmatpush1.msra.mxu0 0.0
    %3150 = vmatprep.subr.mxu0 0.0
    %3151 = vmatpush1.msra.mxu0 0.0
    %3152 = vmatprep.subr.mxu0 0.0
    %3153 = vmatpush1.msra.mxu0 0.0
    %3154 = vmatprep.subr.mxu0 0.0
    %3155 = vmatpush1.msra.mxu0 0.0
    %3156 = vmatprep.subr.mxu0 0.0
    %3157 = vmatpush1.msra.mxu0 0.0
    %3158 = vmatprep.subr.mxu0 0.0
    %3159 = vmatpush1.msra.mxu0 0.0
    %3160 = vmatprep.subr.mxu0 0.0
    %3161 = vmatpush1.msra.mxu0 0.0
    %3162 = vmatprep.subr.mxu0 0.0
    %3163 = vmatpush1.msra.mxu0 0.0
    %3164 = vmatprep.subr.mxu0 0.0
    %3165 = vmatpush1.msra.mxu0 0.0
    %3166 = vmatprep.subr.mxu0 0.0
    %3167 = vmatpush1.msra.mxu0 0.0
    %3168 = vmatprep.subr.mxu0 0.0
    %3169 = vmatpush1.msra.mxu0 0.0
    %3170 = vmatprep.subr.mxu0 0.0
    %3171 = vmatpush1.msra.mxu0 0.0
    %3172 = vmatprep.subr.mxu0 0.0
    %3173 = vmatpush1.msra.mxu0 0.0
    %3174 = vmatprep.subr.mxu0 0.0
    %3175 = vmatpush1.msra.mxu0 0.0
    %3176 = vmatprep.subr.mxu0 0.0
    %3177 = vmatpush1.msra.mxu0 0.0
    %3178 = vmatprep.subr.mxu0 0.0
    %3179 = vmatpush1.msra.mxu0 0.0
    %3180 = vmatprep.mubr.f32.mxu0 0.0
    %3181 = vmatmul.mubr.f32.gmra.mrb[0].mxu0 %v3114
    %v3182 = vpop.f32.mrb[0].mxu0
    %v3183 = vadd.f32 0.0, %v3182
    %v3184 = vpop.f32.mrb[0].mxu0
    %3185 = vdwg.mxu0
    %v3187 = vsel %vm387, %v3106, 0
    %v3190 = vsel %vm387, %v3183, 0
    %3192 = vmatprep.subr.mxu0 0.0
    %3193 = vmatpush1.msra.mxu0 %v2338
    %3194 = vmatprep.subr.mxu0 0.0
    %3195 = vmatpush1.msra.mxu0 0.0
    %3196 = vmatprep.subr.mxu0 0.0
    %3197 = vmatpush1.msra.mxu0 0.0
    %3198 = vmatprep.subr.mxu0 0.0
    %3199 = vmatpush1.msra.mxu0 0.0
    %3200 = vmatprep.subr.mxu0 0.0
    %3201 = vmatpush1.msra.mxu0 0.0
    %3202 = vmatprep.subr.mxu0 0.0
    %3203 = vmatpush1.msra.mxu0 0.0
    %3204 = vmatprep.subr.mxu0 0.0
    %3205 = vmatpush1.msra.mxu0 0.0
    %3206 = vmatprep.subr.mxu0 0.0
    %3207 = vmatpush1.msra.mxu0 0.0
    %3208 = vmatprep.subr.mxu0 0.0
    %3209 = vmatpush1.msra.mxu0 0.0
    %3210 = vmatprep.subr.mxu0 0.0
    %3211 = vmatpush1.msra.mxu0 0.0
    %3212 = vmatprep.subr.mxu0 0.0
    %3213 = vmatpush1.msra.mxu0 0.0
    %3214 = vmatprep.subr.mxu0 0.0
    %3215 = vmatpush1.msra.mxu0 0.0
    %3216 = vmatprep.subr.mxu0 0.0
    %3217 = vmatpush1.msra.mxu0 0.0
    %3218 = vmatprep.subr.mxu0 0.0
    %3219 = vmatpush1.msra.mxu0 0.0
    %3220 = vmatprep.subr.mxu0 0.0
    %3221 = vmatpush1.msra.mxu0 0.0
    %3222 = vmatprep.subr.mxu0 0.0
    %3223 = vmatpush1.msra.mxu0 0.0
    %3224 = vmatprep.subr.mxu0 0.0
    %3225 = vmatpush1.msra.mxu0 0.0
    %3226 = vmatprep.subr.mxu0 0.0
    %3227 = vmatpush1.msra.mxu0 0.0
    %3228 = vmatprep.subr.mxu0 0.0
    %3229 = vmatpush1.msra.mxu0 0.0
    %3230 = vmatprep.subr.mxu0 0.0
    %3231 = vmatpush1.msra.mxu0 0.0
    %3232 = vmatprep.subr.mxu0 0.0
    %3233 = vmatpush1.msra.mxu0 0.0
    %3234 = vmatprep.subr.mxu0 0.0
    %3235 = vmatpush1.msra.mxu0 0.0
    %3236 = vmatprep.subr.mxu0 0.0
    %3237 = vmatpush1.msra.mxu0 0.0
    %3238 = vmatprep.subr.mxu0 0.0
    %3239 = vmatpush1.msra.mxu0 0.0
    %3240 = vmatprep.subr.mxu0 0.0
    %3241 = vmatpush1.msra.mxu0 0.0
    %3242 = vmatprep.subr.mxu0 0.0
    %3243 = vmatpush1.msra.mxu0 0.0
    %3244 = vmatprep.subr.mxu0 0.0
    %3245 = vmatpush1.msra.mxu0 0.0
    %3246 = vmatprep.subr.mxu0 0.0
    %3247 = vmatpush1.msra.mxu0 0.0
    %3248 = vmatprep.subr.mxu0 0.0
    %3249 = vmatpush1.msra.mxu0 0.0
    %3250 = vmatprep.subr.mxu0 0.0
    %3251 = vmatpush1.msra.mxu0 0.0
    %3252 = vmatprep.subr.mxu0 0.0
    %3253 = vmatpush1.msra.mxu0 0.0
    %3254 = vmatprep.subr.mxu0 0.0
    %3255 = vmatpush1.msra.mxu0 0.0
    %3256 = vmatprep.mubr.f32.mxu0 0.0
    %3257 = vmatmul.mubr.f32.gmra.mrb[0].mxu0 %v3187
    %v3258 = vpop.f32.mrb[0].mxu0
    %v3259 = vadd.f32 0.0, %v3258
    %v3260 = vpop.f32.mrb[0].mxu0
    %3261 = vmatprep.mubr.f32.mxu0 0.0
    %3262 = vmatmul.mubr.f32.gmra.mrb[0].mxu0 %v3190
    %v3263 = vpop.f32.mrb[0].mxu0
    %v3264 = vadd.f32 0.0, %v3263
    %v3265 = vpop.f32.mrb[0].mxu0
    %3266 = vdwg.mxu0
    %v3268 = vsel %vm387, %v2776, 0
    %v3271 = vsel %vm387, %v2849, 0
    %3273 = vmatprep.subr.mxu0 0.0
    %3274 = vmatpush1.msra.mxu0 %v2337
    %3275 = vmatprep.subr.mxu0 0.0
    %3276 = vmatpush1.msra.mxu0 0.0
    %3277 = vmatprep.subr.mxu0 0.0
    %3278 = vmatpush1.msra.mxu0 0.0
    %3279 = vmatprep.subr.mxu0 0.0
    %3280 = vmatpush1.msra.mxu0 0.0
    %3281 = vmatprep.subr.mxu0 0.0
    %3282 = vmatpush1.msra.mxu0 0.0
    %3283 = vmatprep.subr.mxu0 0.0
    %3284 = vmatpush1.msra.mxu0 0.0
    %3285 = vmatprep.subr.mxu0 0.0
    %3286 = vmatpush1.msra.mxu0 0.0
    %3287 = vmatprep.subr.mxu0 0.0
    %3288 = vmatpush1.msra.mxu0 0.0
    %3289 = vmatprep.subr.mxu0 0.0
    %3290 = vmatpush1.msra.mxu0 0.0
    %3291 = vmatprep.subr.mxu0 0.0
    %3292 = vmatpush1.msra.mxu0 0.0
    %3293 = vmatprep.subr.mxu0 0.0
    %3294 = vmatpush1.msra.mxu0 0.0
    %3295 = vmatprep.subr.mxu0 0.0
    %3296 = vmatpush1.msra.mxu0 0.0
    %3297 = vmatprep.subr.mxu0 0.0
    %3298 = vmatpush1.msra.mxu0 0.0
    %3299 = vmatprep.subr.mxu0 0.0
    %3300 = vmatpush1.msra.mxu0 0.0
    %3301 = vmatprep.subr.mxu0 0.0
    %3302 = vmatpush1.msra.mxu0 0.0
    %3303 = vmatprep.subr.mxu0 0.0
    %3304 = vmatpush1.msra.mxu0 0.0
    %3305 = vmatprep.subr.mxu0 0.0
    %3306 = vmatpush1.msra.mxu0 0.0
    %3307 = vmatprep.subr.mxu0 0.0
    %3308 = vmatpush1.msra.mxu0 0.0
    %3309 = vmatprep.subr.mxu0 0.0
    %3310 = vmatpush1.msra.mxu0 0.0
    %3311 = vmatprep.subr.mxu0 0.0
    %3312 = vmatpush1.msra.mxu0 0.0
    %3313 = vmatprep.subr.mxu0 0.0
    %3314 = vmatpush1.msra.mxu0 0.0
    %3315 = vmatprep.subr.mxu0 0.0
    %3316 = vmatpush1.msra.mxu0 0.0
    %3317 = vmatprep.subr.mxu0 0.0
    %3318 = vmatpush1.msra.mxu0 0.0
    %3319 = vmatprep.subr.mxu0 0.0
    %3320 = vmatpush1.msra.mxu0 0.0
    %3321 = vmatprep.subr.mxu0 0.0
    %3322 = vmatpush1.msra.mxu0 0.0
    %3323 = vmatprep.subr.mxu0 0.0
    %3324 = vmatpush1.msra.mxu0 0.0
    %3325 = vmatprep.subr.mxu0 0.0
    %3326 = vmatpush1.msra.mxu0 0.0
    %3327 = vmatprep.subr.mxu0 0.0
    %3328 = vmatpush1.msra.mxu0 0.0
    %3329 = vmatprep.subr.mxu0 0.0
    %3330 = vmatpush1.msra.mxu0 0.0
    %3331 = vmatprep.subr.mxu0 0.0
    %3332 = vmatpush1.msra.mxu0 0.0
    %3333 = vmatprep.subr.mxu0 0.0
    %3334 = vmatpush1.msra.mxu0 0.0
    %3335 = vmatprep.subr.mxu0 0.0
    %3336 = vmatpush1.msra.mxu0 0.0
    %3337 = vmatprep.mubr.f32.mxu0 0.0
    %3338 = vmatmul.mubr.f32.gmra.mrb[0].mxu0 %v3268
    %v3339 = vpop.f32.mrb[0].mxu0
    %v3340 = vadd.f32 %v3259, %v3339
    %v3341 = vpop.f32.mrb[0].mxu0
    %3342 = vmatprep.mubr.f32.mxu0 0.0
    %3343 = vmatmul.mubr.f32.gmra.mrb[0].mxu0 %v3271
    %v3344 = vpop.f32.mrb[0].mxu0
    %v3345 = vadd.f32 %v3264, %v3344
    %v3346 = vpop.f32.mrb[0].mxu0
    %3347 = vdwg.mxu0
    %3348 = vrot.lane.b32.xlu0 %v2445, 112
    %v3349 = vpop.permute.xlu0 %3348
    %3350 = vrot.lane.b32.xlu0 %v2447, 112
    %v3351 = vpop.permute.xlu0 %3350
    %v3352 = vsel %vm387, %v3349, 0
    %v3354 = vsel %vm387, %v3351, 0
    %3356 = vmatprep.subr.mxu0 0.0
    %3357 = vmatpush1.xpose.msra.mxu0 %v3354
    %3358 = vmatprep.subr.mxu0 0.0
    %3359 = vmatpush1.xpose.msra.mxu0 0.0
    %3360 = vmatprep.subr.mxu0 0.0
    %3361 = vmatpush1.xpose.msra.mxu0 0.0
    %3362 = vmatprep.subr.mxu0 0.0
    %3363 = vmatpush1.xpose.msra.mxu0 0.0
    %3364 = vmatprep.subr.mxu0 0.0
    %3365 = vmatpush1.xpose.msra.mxu0 0.0
    %3366 = vmatprep.subr.mxu0 0.0
    %3367 = vmatpush1.xpose.msra.mxu0 0.0
    %3368 = vmatprep.subr.mxu0 0.0
    %3369 = vmatpush1.xpose.msra.mxu0 0.0
    %3370 = vmatprep.subr.mxu0 0.0
    %3371 = vmatpush1.xpose.msra.mxu0 0.0
    %3372 = vmatprep.subr.mxu0 0.0
    %3373 = vmatpush1.xpose.msra.mxu0 0.0
    %3374 = vmatprep.subr.mxu0 0.0
    %3375 = vmatpush1.xpose.msra.mxu0 0.0
    %3376 = vmatprep.subr.mxu0 0.0
    %3377 = vmatpush1.xpose.msra.mxu0 0.0
    %3378 = vmatprep.subr.mxu0 0.0
    %3379 = vmatpush1.xpose.msra.mxu0 0.0
    %3380 = vmatprep.subr.mxu0 0.0
    %3381 = vmatpush1.xpose.msra.mxu0 0.0
    %3382 = vmatprep.subr.mxu0 0.0
    %3383 = vmatpush1.xpose.msra.mxu0 0.0
    %3384 = vmatprep.subr.mxu0 0.0
    %3385 = vmatpush1.xpose.msra.mxu0 0.0
    %3386 = vmatprep.subr.mxu0 0.0
    %3387 = vmatpush1.xpose.msra.mxu0 0.0
    %3388 = vmatprep.subr.mxu0 0.0
    %3389 = vmatpush1.xpose.msra.mxu0 0.0
    %3390 = vmatprep.subr.mxu0 0.0
    %3391 = vmatpush1.xpose.msra.mxu0 0.0
    %3392 = vmatprep.subr.mxu0 0.0
    %3393 = vmatpush1.xpose.msra.mxu0 0.0
    %3394 = vmatprep.subr.mxu0 0.0
    %3395 = vmatpush1.xpose.msra.mxu0 0.0
    %3396 = vmatprep.subr.mxu0 0.0
    %3397 = vmatpush1.xpose.msra.mxu0 0.0
    %3398 = vmatprep.subr.mxu0 0.0
    %3399 = vmatpush1.xpose.msra.mxu0 0.0
    %3400 = vmatprep.subr.mxu0 0.0
    %3401 = vmatpush1.xpose.msra.mxu0 0.0
    %3402 = vmatprep.subr.mxu0 0.0
    %3403 = vmatpush1.xpose.msra.mxu0 0.0
    %3404 = vmatprep.subr.mxu0 0.0
    %3405 = vmatpush1.xpose.msra.mxu0 0.0
    %3406 = vmatprep.subr.mxu0 0.0
    %3407 = vmatpush1.xpose.msra.mxu0 0.0
    %3408 = vmatprep.subr.mxu0 0.0
    %3409 = vmatpush1.xpose.msra.mxu0 0.0
    %3410 = vmatprep.subr.mxu0 0.0
    %3411 = vmatpush1.xpose.msra.mxu0 0.0
    %3412 = vmatprep.subr.mxu0 0.0
    %3413 = vmatpush1.xpose.msra.mxu0 0.0
    %3414 = vmatprep.subr.mxu0 0.0
    %3415 = vmatpush1.xpose.msra.mxu0 0.0
    %3416 = vmatprep.subr.mxu0 0.0
    %3417 = vmatpush1.xpose.msra.mxu0 0.0
    %3418 = vmatprep.subr.mxu0 0.0
    %3419 = vmatpush1.xpose.msra.mxu0 0.0
    %3420 = vmatprep.mubr.f32.mxu0 0.0
    %3421 = vmatmul.mubr.f32.gmra.mrb[0].mxu0 %v3352
    %v3422 = vpop.f32.mrb[0].mxu0
    %v3423 = vadd.f32 0.0, %v3422
    %v3424 = vpop.f32.mrb[0].mxu0
    %3425 = vdwg.mxu0
    %3426 = vrot.lane.b32.xlu0 %v2451, 112
    %v3427 = vpop.permute.xlu0 %3426
    %3428 = vrot.lane.b32.xlu0 %v2453, 112
    %v3429 = vpop.permute.xlu0 %3428
    %v3430 = vsel %vm387, %v3427, 0
    %v3432 = vsel %vm387, %v3429, 0
    %3434 = vmatprep.subr.mxu0 0.0
    %3435 = vmatpush1.xpose.msra.mxu0 %v3432
    %3436 = vmatprep.subr.mxu0 0.0
    %3437 = vmatpush1.xpose.msra.mxu0 0.0
    %3438 = vmatprep.subr.mxu0 0.0
    %3439 = vmatpush1.xpose.msra.mxu0 0.0
    %3440 = vmatprep.subr.mxu0 0.0
    %3441 = vmatpush1.xpose.msra.mxu0 0.0
    %3442 = vmatprep.subr.mxu0 0.0
    %3443 = vmatpush1.xpose.msra.mxu0 0.0
    %3444 = vmatprep.subr.mxu0 0.0
    %3445 = vmatpush1.xpose.msra.mxu0 0.0
    %3446 = vmatprep.subr.mxu0 0.0
    %3447 = vmatpush1.xpose.msra.mxu0 0.0
    %3448 = vmatprep.subr.mxu0 0.0
    %3449 = vmatpush1.xpose.msra.mxu0 0.0
    %3450 = vmatprep.subr.mxu0 0.0
    %3451 = vmatpush1.xpose.msra.mxu0 0.0
    %3452 = vmatprep.subr.mxu0 0.0
    %3453 = vmatpush1.xpose.msra.mxu0 0.0
    %3454 = vmatprep.subr.mxu0 0.0
    %3455 = vmatpush1.xpose.msra.mxu0 0.0
    %3456 = vmatprep.subr.mxu0 0.0
    %3457 = vmatpush1.xpose.msra.mxu0 0.0
    %3458 = vmatprep.subr.mxu0 0.0
    %3459 = vmatpush1.xpose.msra.mxu0 0.0
    %3460 = vmatprep.subr.mxu0 0.0
    %3461 = vmatpush1.xpose.msra.mxu0 0.0
    %3462 = vmatprep.subr.mxu0 0.0
    %3463 = vmatpush1.xpose.msra.mxu0 0.0
    %3464 = vmatprep.subr.mxu0 0.0
    %3465 = vmatpush1.xpose.msra.mxu0 0.0
    %3466 = vmatprep.subr.mxu0 0.0
    %3467 = vmatpush1.xpose.msra.mxu0 0.0
    %3468 = vmatprep.subr.mxu0 0.0
    %3469 = vmatpush1.xpose.msra.mxu0 0.0
    %3470 = vmatprep.subr.mxu0 0.0
    %3471 = vmatpush1.xpose.msra.mxu0 0.0
    %3472 = vmatprep.subr.mxu0 0.0
    %3473 = vmatpush1.xpose.msra.mxu0 0.0
    %3474 = vmatprep.subr.mxu0 0.0
    %3475 = vmatpush1.xpose.msra.mxu0 0.0
    %3476 = vmatprep.subr.mxu0 0.0
    %3477 = vmatpush1.xpose.msra.mxu0 0.0
    %3478 = vmatprep.subr.mxu0 0.0
    %3479 = vmatpush1.xpose.msra.mxu0 0.0
    %3480 = vmatprep.subr.mxu0 0.0
    %3481 = vmatpush1.xpose.msra.mxu0 0.0
    %3482 = vmatprep.subr.mxu0 0.0
    %3483 = vmatpush1.xpose.msra.mxu0 0.0
    %3484 = vmatprep.subr.mxu0 0.0
    %3485 = vmatpush1.xpose.msra.mxu0 0.0
    %3486 = vmatprep.subr.mxu0 0.0
    %3487 = vmatpush1.xpose.msra.mxu0 0.0
    %3488 = vmatprep.subr.mxu0 0.0
    %3489 = vmatpush1.xpose.msra.mxu0 0.0
    %3490 = vmatprep.subr.mxu0 0.0
    %3491 = vmatpush1.xpose.msra.mxu0 0.0
    %3492 = vmatprep.subr.mxu0 0.0
    %3493 = vmatpush1.xpose.msra.mxu0 0.0
    %3494 = vmatprep.subr.mxu0 0.0
    %3495 = vmatpush1.xpose.msra.mxu0 0.0
    %3496 = vmatprep.subr.mxu0 0.0
    %3497 = vmatpush1.xpose.msra.mxu0 0.0
    %3498 = vmatprep.mubr.f32.mxu0 0.0
    %3499 = vmatmul.mubr.f32.gmra.mrb[0].mxu0 %v3430
    %v3500 = vpop.f32.mrb[0].mxu0
    %v3501 = vadd.f32 0.0, %v3500
    %v3502 = vpop.f32.mrb[0].mxu0
    %3503 = vdwg.mxu0
    %v3504 = vmul.f32 %v3423, 0.35355338
    %v3505 = vmul.f32 %v3501, 0.35355338
    %v3506 = vsel %vm387, %v3504, -inf
    %3507 = vmax.xlane.f32.xlu0 %v3506
    %v3508 = vpop.xlane.xlu0 %3507
    %v3509 = vsel %vm387, %v3505, -inf
    %3510 = vmax.xlane.f32.xlu0 %v3509
    %v3511 = vpop.xlane.xlu0 %3510
    %v3512 = vsub.f32 %v3504, %v3508
    %v3513 = vsub.f32 %v3505, %v3511
    %v3514 = vmul.f32 %v3512, 1.442695
    %v3515 = vpow.pop %v3514
    %v3516 = vmul.f32 %v3513, 1.442695
    %v3517 = vpow.pop %v3516
    %v3518 = vsel %vm387, %v3515, 0.0
    %3519 = vadd.xlane.f32.xlu0 %v3518
    %v3520 = vpop.xlane.xlu0 %3519
    %v3521 = vsel %vm387, %v3517, 0.0
    %3522 = vadd.xlane.f32.xlu0 %v3521
    %v3523 = vpop.xlane.xlu0 %3522
    %v3524 = vrcp.pop %v3520
    %v3525 = vrcp.pop %v3523
    %v3526 = vmul.f32 %v3515, %v3524
    %v3527 = vmul.f32 %v3517, %v3525
    %3528 = vrot.lane.b32.xlu0 %v2522, 112
    %v3529 = vpop.permute.xlu0 %3528
    %v3532 = vsel %vm387, %v3526, 0
    %3534 = vmatprep.subr.mxu0 0.0
    %3535 = vmatpush1.msra.mxu0 %v3529
    %3536 = vmatprep.subr.mxu0 0.0
    %3537 = vmatpush1.msra.mxu0 0.0
    %3538 = vmatprep.subr.mxu0 0.0
    %3539 = vmatpush1.msra.mxu0 0.0
    %3540 = vmatprep.subr.mxu0 0.0
    %3541 = vmatpush1.msra.mxu0 0.0
    %3542 = vmatprep.subr.mxu0 0.0
    %3543 = vmatpush1.msra.mxu0 0.0
    %3544 = vmatprep.subr.mxu0 0.0
    %3545 = vmatpush1.msra.mxu0 0.0
    %3546 = vmatprep.subr.mxu0 0.0
    %3547 = vmatpush1.msra.mxu0 0.0
    %3548 = vmatprep.subr.mxu0 0.0
    %3549 = vmatpush1.msra.mxu0 0.0
    %3550 = vmatprep.subr.mxu0 0.0
    %3551 = vmatpush1.msra.mxu0 0.0
    %3552 = vmatprep.subr.mxu0 0.0
    %3553 = vmatpush1.msra.mxu0 0.0
    %3554 = vmatprep.subr.mxu0 0.0
    %3555 = vmatpush1.msra.mxu0 0.0
    %3556 = vmatprep.subr.mxu0 0.0
    %3557 = vmatpush1.msra.mxu0 0.0
    %3558 = vmatprep.subr.mxu0 0.0
    %3559 = vmatpush1.msra.mxu0 0.0
    %3560 = vmatprep.subr.mxu0 0.0
    %3561 = vmatpush1.msra.mxu0 0.0
    %3562 = vmatprep.subr.mxu0 0.0
    %3563 = vmatpush1.msra.mxu0 0.0
    %3564 = vmatprep.subr.mxu0 0.0
    %3565 = vmatpush1.msra.mxu0 0.0
    %3566 = vmatprep.subr.mxu0 0.0
    %3567 = vmatpush1.msra.mxu0 0.0
    %3568 = vmatprep.subr.mxu0 0.0
    %3569 = vmatpush1.msra.mxu0 0.0
    %3570 = vmatprep.subr.mxu0 0.0
    %3571 = vmatpush1.msra.mxu0 0.0
    %3572 = vmatprep.subr.mxu0 0.0
    %3573 = vmatpush1.msra.mxu0 0.0
    %3574 = vmatprep.subr.mxu0 0.0
    %3575 = vmatpush1.msra.mxu0 0.0
    %3576 = vmatprep.subr.mxu0 0.0
    %3577 = vmatpush1.msra.mxu0 0.0
    %3578 = vmatprep.subr.mxu0 0.0
    %3579 = vmatpush1.msra.mxu0 0.0
    %3580 = vmatprep.subr.mxu0 0.0
    %3581 = vmatpush1.msra.mxu0 0.0
    %3582 = vmatprep.subr.mxu0 0.0
    %3583 = vmatpush1.msra.mxu0 0.0
    %3584 = vmatprep.subr.mxu0 0.0
    %3585 = vmatpush1.msra.mxu0 0.0
    %3586 = vmatprep.subr.mxu0 0.0
    %3587 = vmatpush1.msra.mxu0 0.0
    %3588 = vmatprep.subr.mxu0 0.0
    %3589 = vmatpush1.msra.mxu0 0.0
    %3590 = vmatprep.subr.mxu0 0.0
    %3591 = vmatpush1.msra.mxu0 0.0
    %3592 = vmatprep.subr.mxu0 0.0
    %3593 = vmatpush1.msra.mxu0 0.0
    %3594 = vmatprep.subr.mxu0 0.0
    %3595 = vmatpush1.msra.mxu0 0.0
    %3596 = vmatprep.subr.mxu0 0.0
    %3597 = vmatpush1.msra.mxu0 0.0
    %3598 = vmatprep.mubr.f32.mxu0 0.0
    %3599 = vmatmul.mubr.f32.gmra.mrb[0].mxu0 %v3532
    %v3600 = vpop.f32.mrb[0].mxu0
    %v3601 = vadd.f32 0.0, %v3600
    %v3602 = vpop.f32.mrb[0].mxu0
    %3603 = vdwg.mxu0
    %3604 = vrot.lane.b32.xlu0 %v2527, 112
    %v3605 = vpop.permute.xlu0 %3604
    %v3608 = vsel %vm387, %v3527, 0
    %3610 = vmatprep.subr.mxu0 0.0
    %3611 = vmatpush1.msra.mxu0 %v3605
    %3612 = vmatprep.subr.mxu0 0.0
    %3613 = vmatpush1.msra.mxu0 0.0
    %3614 = vmatprep.subr.mxu0 0.0
    %3615 = vmatpush1.msra.mxu0 0.0
    %3616 = vmatprep.subr.mxu0 0.0
    %3617 = vmatpush1.msra.mxu0 0.0
    %3618 = vmatprep.subr.mxu0 0.0
    %3619 = vmatpush1.msra.mxu0 0.0
    %3620 = vmatprep.subr.mxu0 0.0
    %3621 = vmatpush1.msra.mxu0 0.0
    %3622 = vmatprep.subr.mxu0 0.0
    %3623 = vmatpush1.msra.mxu0 0.0
    %3624 = vmatprep.subr.mxu0 0.0
    %3625 = vmatpush1.msra.mxu0 0.0
    %3626 = vmatprep.subr.mxu0 0.0
    %3627 = vmatpush1.msra.mxu0 0.0
    %3628 = vmatprep.subr.mxu0 0.0
    %3629 = vmatpush1.msra.mxu0 0.0
    %3630 = vmatprep.subr.mxu0 0.0
    %3631 = vmatpush1.msra.mxu0 0.0
    %3632 = vmatprep.subr.mxu0 0.0
    %3633 = vmatpush1.msra.mxu0 0.0
    %3634 = vmatprep.subr.mxu0 0.0
    %3635 = vmatpush1.msra.mxu0 0.0
    %3636 = vmatprep.subr.mxu0 0.0
    %3637 = vmatpush1.msra.mxu0 0.0
    %3638 = vmatprep.subr.mxu0 0.0
    %3639 = vmatpush1.msra.mxu0 0.0
    %3640 = vmatprep.subr.mxu0 0.0
    %3641 = vmatpush1.msra.mxu0 0.0
    %3642 = vmatprep.subr.mxu0 0.0
    %3643 = vmatpush1.msra.mxu0 0.0
    %3644 = vmatprep.subr.mxu0 0.0
    %3645 = vmatpush1.msra.mxu0 0.0
    %3646 = vmatprep.subr.mxu0 0.0
    %3647 = vmatpush1.msra.mxu0 0.0
    %3648 = vmatprep.subr.mxu0 0.0
    %3649 = vmatpush1.msra.mxu0 0.0
    %3650 = vmatprep.subr.mxu0 0.0
    %3651 = vmatpush1.msra.mxu0 0.0
    %3652 = vmatprep.subr.mxu0 0.0
    %3653 = vmatpush1.msra.mxu0 0.0
    %3654 = vmatprep.subr.mxu0 0.0
    %3655 = vmatpush1.msra.mxu0 0.0
    %3656 = vmatprep.subr.mxu0 0.0
    %3657 = vmatpush1.msra.mxu0 0.0
    %3658 = vmatprep.subr.mxu0 0.0
    %3659 = vmatpush1.msra.mxu0 0.0
    %3660 = vmatprep.subr.mxu0 0.0
    %3661 = vmatpush1.msra.mxu0 0.0
    %3662 = vmatprep.subr.mxu0 0.0
    %3663 = vmatpush1.msra.mxu0 0.0
    %3664 = vmatprep.subr.mxu0 0.0
    %3665 = vmatpush1.msra.mxu0 0.0
    %3666 = vmatprep.subr.mxu0 0.0
    %3667 = vmatpush1.msra.mxu0 0.0
    %3668 = vmatprep.subr.mxu0 0.0
    %3669 = vmatpush1.msra.mxu0 0.0
    %3670 = vmatprep.subr.mxu0 0.0
    %3671 = vmatpush1.msra.mxu0 0.0
    %3672 = vmatprep.subr.mxu0 0.0
    %3673 = vmatpush1.msra.mxu0 0.0
    %3674 = vmatprep.mubr.f32.mxu0 0.0
    %3675 = vmatmul.mubr.f32.gmra.mrb[0].mxu0 %v3608
    %v3676 = vpop.f32.mrb[0].mxu0
    %v3677 = vadd.f32 0.0, %v3676
    %v3678 = vpop.f32.mrb[0].mxu0
    %3679 = vdwg.mxu0
    %v3681 = vsel %vm387, %v3601, 0
    %v3684 = vsel %vm387, %v3677, 0
    %3686 = vmatprep.subr.mxu0 0.0
    %3687 = vmatpush1.msra.mxu0 %v2339
    %3688 = vmatprep.subr.mxu0 0.0
    %3689 = vmatpush1.msra.mxu0 0.0
    %3690 = vmatprep.subr.mxu0 0.0
    %3691 = vmatpush1.msra.mxu0 0.0
    %3692 = vmatprep.subr.mxu0 0.0
    %3693 = vmatpush1.msra.mxu0 0.0
    %3694 = vmatprep.subr.mxu0 0.0
    %3695 = vmatpush1.msra.mxu0 0.0
    %3696 = vmatprep.subr.mxu0 0.0
    %3697 = vmatpush1.msra.mxu0 0.0
    %3698 = vmatprep.subr.mxu0 0.0
    %3699 = vmatpush1.msra.mxu0 0.0
    %3700 = vmatprep.subr.mxu0 0.0
    %3701 = vmatpush1.msra.mxu0 0.0
    %3702 = vmatprep.subr.mxu0 0.0
    %3703 = vmatpush1.msra.mxu0 0.0
    %3704 = vmatprep.subr.mxu0 0.0
    %3705 = vmatpush1.msra.mxu0 0.0
    %3706 = vmatprep.subr.mxu0 0.0
    %3707 = vmatpush1.msra.mxu0 0.0
    %3708 = vmatprep.subr.mxu0 0.0
    %3709 = vmatpush1.msra.mxu0 0.0
    %3710 = vmatprep.subr.mxu0 0.0
    %3711 = vmatpush1.msra.mxu0 0.0
    %3712 = vmatprep.subr.mxu0 0.0
    %3713 = vmatpush1.msra.mxu0 0.0
    %3714 = vmatprep.subr.mxu0 0.0
    %3715 = vmatpush1.msra.mxu0 0.0
    %3716 = vmatprep.subr.mxu0 0.0
    %3717 = vmatpush1.msra.mxu0 0.0
    %3718 = vmatprep.subr.mxu0 0.0
    %3719 = vmatpush1.msra.mxu0 0.0
    %3720 = vmatprep.subr.mxu0 0.0
    %3721 = vmatpush1.msra.mxu0 0.0
    %3722 = vmatprep.subr.mxu0 0.0
    %3723 = vmatpush1.msra.mxu0 0.0
    %3724 = vmatprep.subr.mxu0 0.0
    %3725 = vmatpush1.msra.mxu0 0.0
    %3726 = vmatprep.subr.mxu0 0.0
    %3727 = vmatpush1.msra.mxu0 0.0
    %3728 = vmatprep.subr.mxu0 0.0
    %3729 = vmatpush1.msra.mxu0 0.0
    %3730 = vmatprep.subr.mxu0 0.0
    %3731 = vmatpush1.msra.mxu0 0.0
    %3732 = vmatprep.subr.mxu0 0.0
    %3733 = vmatpush1.msra.mxu0 0.0
    %3734 = vmatprep.subr.mxu0 0.0
    %3735 = vmatpush1.msra.mxu0 0.0
    %3736 = vmatprep.subr.mxu0 0.0
    %3737 = vmatpush1.msra.mxu0 0.0
    %3738 = vmatprep.subr.mxu0 0.0
    %3739 = vmatpush1.msra.mxu0 0.0
    %3740 = vmatprep.subr.mxu0 0.0
    %3741 = vmatpush1.msra.mxu0 0.0
    %3742 = vmatprep.subr.mxu0 0.0
    %3743 = vmatpush1.msra.mxu0 0.0
    %3744 = vmatprep.subr.mxu0 0.0
    %3745 = vmatpush1.msra.mxu0 0.0
    %3746 = vmatprep.subr.mxu0 0.0
    %3747 = vmatpush1.msra.mxu0 0.0
    %3748 = vmatprep.subr.mxu0 0.0
    %3749 = vmatpush1.msra.mxu0 0.0
    %3750 = vmatprep.mubr.f32.mxu0 0.0
    %3751 = vmatmul.mubr.f32.gmra.mrb[0].mxu0 %v3681
    %v3752 = vpop.f32.mrb[0].mxu0
    %v3753 = vadd.f32 0.0, %v3752
    %v3754 = vpop.f32.mrb[0].mxu0
    %3755 = vmatprep.mubr.f32.mxu0 0.0
    %3756 = vmatmul.mubr.f32.gmra.mrb[0].mxu0 %v3684
    %v3757 = vpop.f32.mrb[0].mxu0
    %v3758 = vadd.f32 0.0, %v3757
    %v3759 = vpop.f32.mrb[0].mxu0
    %3760 = vdwg.mxu0
    %v3761 = vadd.f32 %v3340, %v3753
    %v3762 = vadd.f32 %v3345, %v3758
    %3763 = vrot.lane.b32.xlu0 %v2445, 104
    %v3764 = vpop.permute.xlu0 %3763
    %3765 = vrot.lane.b32.xlu0 %v2447, 104
    %v3766 = vpop.permute.xlu0 %3765
    %v3767 = vsel %vm387, %v3764, 0
    %v3769 = vsel %vm387, %v3766, 0
    %3771 = vmatprep.subr.mxu0 0.0
    %3772 = vmatpush1.xpose.msra.mxu0 %v3769
    %3773 = vmatprep.subr.mxu0 0.0
    %3774 = vmatpush1.xpose.msra.mxu0 0.0
    %3775 = vmatprep.subr.mxu0 0.0
    %3776 = vmatpush1.xpose.msra.mxu0 0.0
    %3777 = vmatprep.subr.mxu0 0.0
    %3778 = vmatpush1.xpose.msra.mxu0 0.0
    %3779 = vmatprep.subr.mxu0 0.0
    %3780 = vmatpush1.xpose.msra.mxu0 0.0
    %3781 = vmatprep.subr.mxu0 0.0
    %3782 = vmatpush1.xpose.msra.mxu0 0.0
    %3783 = vmatprep.subr.mxu0 0.0
    %3784 = vmatpush1.xpose.msra.mxu0 0.0
    %3785 = vmatprep.subr.mxu0 0.0
    %3786 = vmatpush1.xpose.msra.mxu0 0.0
    %3787 = vmatprep.subr.mxu0 0.0
    %3788 = vmatpush1.xpose.msra.mxu0 0.0
    %3789 = vmatprep.subr.mxu0 0.0
    %3790 = vmatpush1.xpose.msra.mxu0 0.0
    %3791 = vmatprep.subr.mxu0 0.0
    %3792 = vmatpush1.xpose.msra.mxu0 0.0
    %3793 = vmatprep.subr.mxu0 0.0
    %3794 = vmatpush1.xpose.msra.mxu0 0.0
    %3795 = vmatprep.subr.mxu0 0.0
    %3796 = vmatpush1.xpose.msra.mxu0 0.0
    %3797 = vmatprep.subr.mxu0 0.0
    %3798 = vmatpush1.xpose.msra.mxu0 0.0
    %3799 = vmatprep.subr.mxu0 0.0
    %3800 = vmatpush1.xpose.msra.mxu0 0.0
    %3801 = vmatprep.subr.mxu0 0.0
    %3802 = vmatpush1.xpose.msra.mxu0 0.0
    %3803 = vmatprep.subr.mxu0 0.0
    %3804 = vmatpush1.xpose.msra.mxu0 0.0
    %3805 = vmatprep.subr.mxu0 0.0
    %3806 = vmatpush1.xpose.msra.mxu0 0.0
    %3807 = vmatprep.subr.mxu0 0.0
    %3808 = vmatpush1.xpose.msra.mxu0 0.0
    %3809 = vmatprep.subr.mxu0 0.0
    %3810 = vmatpush1.xpose.msra.mxu0 0.0
    %3811 = vmatprep.subr.mxu0 0.0
    %3812 = vmatpush1.xpose.msra.mxu0 0.0
    %3813 = vmatprep.subr.mxu0 0.0
    %3814 = vmatpush1.xpose.msra.mxu0 0.0
    %3815 = vmatprep.subr.mxu0 0.0
    %3816 = vmatpush1.xpose.msra.mxu0 0.0
    %3817 = vmatprep.subr.mxu0 0.0
    %3818 = vmatpush1.xpose.msra.mxu0 0.0
    %3819 = vmatprep.subr.mxu0 0.0
    %3820 = vmatpush1.xpose.msra.mxu0 0.0
    %3821 = vmatprep.subr.mxu0 0.0
    %3822 = vmatpush1.xpose.msra.mxu0 0.0
    %3823 = vmatprep.subr.mxu0 0.0
    %3824 = vmatpush1.xpose.msra.mxu0 0.0
    %3825 = vmatprep.subr.mxu0 0.0
    %3826 = vmatpush1.xpose.msra.mxu0 0.0
    %3827 = vmatprep.subr.mxu0 0.0
    %3828 = vmatpush1.xpose.msra.mxu0 0.0
    %3829 = vmatprep.subr.mxu0 0.0
    %3830 = vmatpush1.xpose.msra.mxu0 0.0
    %3831 = vmatprep.subr.mxu0 0.0
    %3832 = vmatpush1.xpose.msra.mxu0 0.0
    %3833 = vmatprep.subr.mxu0 0.0
    %3834 = vmatpush1.xpose.msra.mxu0 0.0
    %3835 = vmatprep.mubr.f32.mxu0 0.0
    %3836 = vmatmul.mubr.f32.gmra.mrb[0].mxu0 %v3767
    %v3837 = vpop.f32.mrb[0].mxu0
    %v3838 = vadd.f32 0.0, %v3837
    %v3839 = vpop.f32.mrb[0].mxu0
    %3840 = vdwg.mxu0
    %3841 = vrot.lane.b32.xlu0 %v2451, 104
    %v3842 = vpop.permute.xlu0 %3841
    %3843 = vrot.lane.b32.xlu0 %v2453, 104
    %v3844 = vpop.permute.xlu0 %3843
    %v3845 = vsel %vm387, %v3842, 0
    %v3847 = vsel %vm387, %v3844, 0
    %3849 = vmatprep.subr.mxu0 0.0
    %3850 = vmatpush1.xpose.msra.mxu0 %v3847
    %3851 = vmatprep.subr.mxu0 0.0
    %3852 = vmatpush1.xpose.msra.mxu0 0.0
    %3853 = vmatprep.subr.mxu0 0.0
    %3854 = vmatpush1.xpose.msra.mxu0 0.0
    %3855 = vmatprep.subr.mxu0 0.0
    %3856 = vmatpush1.xpose.msra.mxu0 0.0
    %3857 = vmatprep.subr.mxu0 0.0
    %3858 = vmatpush1.xpose.msra.mxu0 0.0
    %3859 = vmatprep.subr.mxu0 0.0
    %3860 = vmatpush1.xpose.msra.mxu0 0.0
    %3861 = vmatprep.subr.mxu0 0.0
    %3862 = vmatpush1.xpose.msra.mxu0 0.0
    %3863 = vmatprep.subr.mxu0 0.0
    %3864 = vmatpush1.xpose.msra.mxu0 0.0
    %3865 = vmatprep.subr.mxu0 0.0
    %3866 = vmatpush1.xpose.msra.mxu0 0.0
    %3867 = vmatprep.subr.mxu0 0.0
    %3868 = vmatpush1.xpose.msra.mxu0 0.0
    %3869 = vmatprep.subr.mxu0 0.0
    %3870 = vmatpush1.xpose.msra.mxu0 0.0
    %3871 = vmatprep.subr.mxu0 0.0
    %3872 = vmatpush1.xpose.msra.mxu0 0.0
    %3873 = vmatprep.subr.mxu0 0.0
    %3874 = vmatpush1.xpose.msra.mxu0 0.0
    %3875 = vmatprep.subr.mxu0 0.0
    %3876 = vmatpush1.xpose.msra.mxu0 0.0
    %3877 = vmatprep.subr.mxu0 0.0
    %3878 = vmatpush1.xpose.msra.mxu0 0.0
    %3879 = vmatprep.subr.mxu0 0.0
    %3880 = vmatpush1.xpose.msra.mxu0 0.0
    %3881 = vmatprep.subr.mxu0 0.0
    %3882 = vmatpush1.xpose.msra.mxu0 0.0
    %3883 = vmatprep.subr.mxu0 0.0
    %3884 = vmatpush1.xpose.msra.mxu0 0.0
    %3885 = vmatprep.subr.mxu0 0.0
    %3886 = vmatpush1.xpose.msra.mxu0 0.0
    %3887 = vmatprep.subr.mxu0 0.0
    %3888 = vmatpush1.xpose.msra.mxu0 0.0
    %3889 = vmatprep.subr.mxu0 0.0
    %3890 = vmatpush1.xpose.msra.mxu0 0.0
    %3891 = vmatprep.subr.mxu0 0.0
    %3892 = vmatpush1.xpose.msra.mxu0 0.0
    %3893 = vmatprep.subr.mxu0 0.0
    %3894 = vmatpush1.xpose.msra.mxu0 0.0
    %3895 = vmatprep.subr.mxu0 0.0
    %3896 = vmatpush1.xpose.msra.mxu0 0.0
    %3897 = vmatprep.subr.mxu0 0.0
    %3898 = vmatpush1.xpose.msra.mxu0 0.0
    %3899 = vmatprep.subr.mxu0 0.0
    %3900 = vmatpush1.xpose.msra.mxu0 0.0
    %3901 = vmatprep.subr.mxu0 0.0
    %3902 = vmatpush1.xpose.msra.mxu0 0.0
    %3903 = vmatprep.subr.mxu0 0.0
    %3904 = vmatpush1.xpose.msra.mxu0 0.0
    %3905 = vmatprep.subr.mxu0 0.0
    %3906 = vmatpush1.xpose.msra.mxu0 0.0
    %3907 = vmatprep.subr.mxu0 0.0
    %3908 = vmatpush1.xpose.msra.mxu0 0.0
    %3909 = vmatprep.subr.mxu0 0.0
    %3910 = vmatpush1.xpose.msra.mxu0 0.0
    %3911 = vmatprep.subr.mxu0 0.0
    %3912 = vmatpush1.xpose.msra.mxu0 0.0
    %3913 = vmatprep.mubr.f32.mxu0 0.0
    %3914 = vmatmul.mubr.f32.gmra.mrb[0].mxu0 %v3845
    %v3915 = vpop.f32.mrb[0].mxu0
    %v3916 = vadd.f32 0.0, %v3915
    %v3917 = vpop.f32.mrb[0].mxu0
    %3918 = vdwg.mxu0
    %v3919 = vmul.f32 %v3838, 0.35355338
    %v3920 = vmul.f32 %v3916, 0.35355338
    %v3921 = vsel %vm387, %v3919, -inf
    %3922 = vmax.xlane.f32.xlu0 %v3921
    %v3923 = vpop.xlane.xlu0 %3922
    %v3924 = vsel %vm387, %v3920, -inf
    %3925 = vmax.xlane.f32.xlu0 %v3924
    %v3926 = vpop.xlane.xlu0 %3925
    %v3927 = vsub.f32 %v3919, %v3923
    %v3928 = vsub.f32 %v3920, %v3926
    %v3929 = vmul.f32 %v3927, 1.442695
    %v3930 = vpow.pop %v3929
    %v3931 = vmul.f32 %v3928, 1.442695
    %v3932 = vpow.pop %v3931
    %v3933 = vsel %vm387, %v3930, 0.0
    %3934 = vadd.xlane.f32.xlu0 %v3933
    %v3935 = vpop.xlane.xlu0 %3934
    %v3936 = vsel %vm387, %v3932, 0.0
    %3937 = vadd.xlane.f32.xlu0 %v3936
    %v3938 = vpop.xlane.xlu0 %3937
    %v3939 = vrcp.pop %v3935
    %v3940 = vrcp.pop %v3938
    %v3941 = vmul.f32 %v3930, %v3939
    %v3942 = vmul.f32 %v3932, %v3940
    %3943 = vrot.lane.b32.xlu0 %v2522, 104
    %v3944 = vpop.permute.xlu0 %3943
    %v3947 = vsel %vm387, %v3941, 0
    %3949 = vmatprep.subr.mxu0 0.0
    %3950 = vmatpush1.msra.mxu0 %v3944
    %3951 = vmatprep.subr.mxu0 0.0
    %3952 = vmatpush1.msra.mxu0 0.0
    %3953 = vmatprep.subr.mxu0 0.0
    %3954 = vmatpush1.msra.mxu0 0.0
    %3955 = vmatprep.subr.mxu0 0.0
    %3956 = vmatpush1.msra.mxu0 0.0
    %3957 = vmatprep.subr.mxu0 0.0
    %3958 = vmatpush1.msra.mxu0 0.0
    %3959 = vmatprep.subr.mxu0 0.0
    %3960 = vmatpush1.msra.mxu0 0.0
    %3961 = vmatprep.subr.mxu0 0.0
    %3962 = vmatpush1.msra.mxu0 0.0
    %3963 = vmatprep.subr.mxu0 0.0
    %3964 = vmatpush1.msra.mxu0 0.0
    %3965 = vmatprep.subr.mxu0 0.0
    %3966 = vmatpush1.msra.mxu0 0.0
    %3967 = vmatprep.subr.mxu0 0.0
    %3968 = vmatpush1.msra.mxu0 0.0
    %3969 = vmatprep.subr.mxu0 0.0
    %3970 = vmatpush1.msra.mxu0 0.0
    %3971 = vmatprep.subr.mxu0 0.0
    %3972 = vmatpush1.msra.mxu0 0.0
    %3973 = vmatprep.subr.mxu0 0.0
    %3974 = vmatpush1.msra.mxu0 0.0
    %3975 = vmatprep.subr.mxu0 0.0
    %3976 = vmatpush1.msra.mxu0 0.0
    %3977 = vmatprep.subr.mxu0 0.0
    %3978 = vmatpush1.msra.mxu0 0.0
    %3979 = vmatprep.subr.mxu0 0.0
    %3980 = vmatpush1.msra.mxu0 0.0
    %3981 = vmatprep.subr.mxu0 0.0
    %3982 = vmatpush1.msra.mxu0 0.0
    %3983 = vmatprep.subr.mxu0 0.0
    %3984 = vmatpush1.msra.mxu0 0.0
    %3985 = vmatprep.subr.mxu0 0.0
    %3986 = vmatpush1.msra.mxu0 0.0
    %3987 = vmatprep.subr.mxu0 0.0
    %3988 = vmatpush1.msra.mxu0 0.0
    %3989 = vmatprep.subr.mxu0 0.0
    %3990 = vmatpush1.msra.mxu0 0.0
    %3991 = vmatprep.subr.mxu0 0.0
    %3992 = vmatpush1.msra.mxu0 0.0
    %3993 = vmatprep.subr.mxu0 0.0
    %3994 = vmatpush1.msra.mxu0 0.0
    %3995 = vmatprep.subr.mxu0 0.0
    %3996 = vmatpush1.msra.mxu0 0.0
    %3997 = vmatprep.subr.mxu0 0.0
    %3998 = vmatpush1.msra.mxu0 0.0
    %3999 = vmatprep.subr.mxu0 0.0
    %4000 = vmatpush1.msra.mxu0 0.0
    %4001 = vmatprep.subr.mxu0 0.0
    %4002 = vmatpush1.msra.mxu0 0.0
    %4003 = vmatprep.subr.mxu0 0.0
    %4004 = vmatpush1.msra.mxu0 0.0
    %4005 = vmatprep.subr.mxu0 0.0
    %4006 = vmatpush1.msra.mxu0 0.0
    %4007 = vmatprep.subr.mxu0 0.0
    %4008 = vmatpush1.msra.mxu0 0.0
    %4009 = vmatprep.subr.mxu0 0.0
    %4010 = vmatpush1.msra.mxu0 0.0
    %4011 = vmatprep.subr.mxu0 0.0
    %4012 = vmatpush1.msra.mxu0 0.0
    %4013 = vmatprep.mubr.f32.mxu0 0.0
    %4014 = vmatmul.mubr.f32.gmra.mrb[0].mxu0 %v3947
    %v4015 = vpop.f32.mrb[0].mxu0
    %v4016 = vadd.f32 0.0, %v4015
    %v4017 = vpop.f32.mrb[0].mxu0
    %4018 = vdwg.mxu0
    %4019 = vrot.lane.b32.xlu0 %v2527, 104
    %v4020 = vpop.permute.xlu0 %4019
    %v4023 = vsel %vm387, %v3942, 0
    %4025 = vmatprep.subr.mxu0 0.0
    %4026 = vmatpush1.msra.mxu0 %v4020
    %4027 = vmatprep.subr.mxu0 0.0
    %4028 = vmatpush1.msra.mxu0 0.0
    %4029 = vmatprep.subr.mxu0 0.0
    %4030 = vmatpush1.msra.mxu0 0.0
    %4031 = vmatprep.subr.mxu0 0.0
    %4032 = vmatpush1.msra.mxu0 0.0
    %4033 = vmatprep.subr.mxu0 0.0
    %4034 = vmatpush1.msra.mxu0 0.0
    %4035 = vmatprep.subr.mxu0 0.0
    %4036 = vmatpush1.msra.mxu0 0.0
    %4037 = vmatprep.subr.mxu0 0.0
    %4038 = vmatpush1.msra.mxu0 0.0
    %4039 = vmatprep.subr.mxu0 0.0
    %4040 = vmatpush1.msra.mxu0 0.0
    %4041 = vmatprep.subr.mxu0 0.0
    %4042 = vmatpush1.msra.mxu0 0.0
    %4043 = vmatprep.subr.mxu0 0.0
    %4044 = vmatpush1.msra.mxu0 0.0
    %4045 = vmatprep.subr.mxu0 0.0
    %4046 = vmatpush1.msra.mxu0 0.0
    %4047 = vmatprep.subr.mxu0 0.0
    %4048 = vmatpush1.msra.mxu0 0.0
    %4049 = vmatprep.subr.mxu0 0.0
    %4050 = vmatpush1.msra.mxu0 0.0
    %4051 = vmatprep.subr.mxu0 0.0
    %4052 = vmatpush1.msra.mxu0 0.0
    %4053 = vmatprep.subr.mxu0 0.0
    %4054 = vmatpush1.msra.mxu0 0.0
    %4055 = vmatprep.subr.mxu0 0.0
    %4056 = vmatpush1.msra.mxu0 0.0
    %4057 = vmatprep.subr.mxu0 0.0
    %4058 = vmatpush1.msra.mxu0 0.0
    %4059 = vmatprep.subr.mxu0 0.0
    %4060 = vmatpush1.msra.mxu0 0.0
    %4061 = vmatprep.subr.mxu0 0.0
    %4062 = vmatpush1.msra.mxu0 0.0
    %4063 = vmatprep.subr.mxu0 0.0
    %4064 = vmatpush1.msra.mxu0 0.0
    %4065 = vmatprep.subr.mxu0 0.0
    %4066 = vmatpush1.msra.mxu0 0.0
    %4067 = vmatprep.subr.mxu0 0.0
    %4068 = vmatpush1.msra.mxu0 0.0
    %4069 = vmatprep.subr.mxu0 0.0
    %4070 = vmatpush1.msra.mxu0 0.0
    %4071 = vmatprep.subr.mxu0 0.0
    %4072 = vmatpush1.msra.mxu0 0.0
    %4073 = vmatprep.subr.mxu0 0.0
    %4074 = vmatpush1.msra.mxu0 0.0
    %4075 = vmatprep.subr.mxu0 0.0
    %4076 = vmatpush1.msra.mxu0 0.0
    %4077 = vmatprep.subr.mxu0 0.0
    %4078 = vmatpush1.msra.mxu0 0.0
    %4079 = vmatprep.subr.mxu0 0.0
    %4080 = vmatpush1.msra.mxu0 0.0
    %4081 = vmatprep.subr.mxu0 0.0
    %4082 = vmatpush1.msra.mxu0 0.0
    %4083 = vmatprep.subr.mxu0 0.0
    %4084 = vmatpush1.msra.mxu0 0.0
    %4085 = vmatprep.subr.mxu0 0.0
    %4086 = vmatpush1.msra.mxu0 0.0
    %4087 = vmatprep.subr.mxu0 0.0
    %4088 = vmatpush1.msra.mxu0 0.0
    %4089 = vmatprep.mubr.f32.mxu0 0.0
    %4090 = vmatmul.mubr.f32.gmra.mrb[0].mxu0 %v4023
    %v4091 = vpop.f32.mrb[0].mxu0
    %v4092 = vadd.f32 0.0, %v4091
    %v4093 = vpop.f32.mrb[0].mxu0
    %4094 = vdwg.mxu0
    %v4096 = vsel %vm387, %v4016, 0
    %v4099 = vsel %vm387, %v4092, 0
    %4101 = vmatprep.subr.mxu0 0.0
    %4102 = vmatpush1.msra.mxu0 %v2340
    %4103 = vmatprep.subr.mxu0 0.0
    %4104 = vmatpush1.msra.mxu0 0.0
    %4105 = vmatprep.subr.mxu0 0.0
    %4106 = vmatpush1.msra.mxu0 0.0
    %4107 = vmatprep.subr.mxu0 0.0
    %4108 = vmatpush1.msra.mxu0 0.0
    %4109 = vmatprep.subr.mxu0 0.0
    %4110 = vmatpush1.msra.mxu0 0.0
    %4111 = vmatprep.subr.mxu0 0.0
    %4112 = vmatpush1.msra.mxu0 0.0
    %4113 = vmatprep.subr.mxu0 0.0
    %4114 = vmatpush1.msra.mxu0 0.0
    %4115 = vmatprep.subr.mxu0 0.0
    %4116 = vmatpush1.msra.mxu0 0.0
    %4117 = vmatprep.subr.mxu0 0.0
    %4118 = vmatpush1.msra.mxu0 0.0
    %4119 = vmatprep.subr.mxu0 0.0
    %4120 = vmatpush1.msra.mxu0 0.0
    %4121 = vmatprep.subr.mxu0 0.0
    %4122 = vmatpush1.msra.mxu0 0.0
    %4123 = vmatprep.subr.mxu0 0.0
    %4124 = vmatpush1.msra.mxu0 0.0
    %4125 = vmatprep.subr.mxu0 0.0
    %4126 = vmatpush1.msra.mxu0 0.0
    %4127 = vmatprep.subr.mxu0 0.0
    %4128 = vmatpush1.msra.mxu0 0.0
    %4129 = vmatprep.subr.mxu0 0.0
    %4130 = vmatpush1.msra.mxu0 0.0
    %4131 = vmatprep.subr.mxu0 0.0
    %4132 = vmatpush1.msra.mxu0 0.0
    %4133 = vmatprep.subr.mxu0 0.0
    %4134 = vmatpush1.msra.mxu0 0.0
    %4135 = vmatprep.subr.mxu0 0.0
    %4136 = vmatpush1.msra.mxu0 0.0
    %4137 = vmatprep.subr.mxu0 0.0
    %4138 = vmatpush1.msra.mxu0 0.0
    %4139 = vmatprep.subr.mxu0 0.0
    %4140 = vmatpush1.msra.mxu0 0.0
    %4141 = vmatprep.subr.mxu0 0.0
    %4142 = vmatpush1.msra.mxu0 0.0
    %4143 = vmatprep.subr.mxu0 0.0
    %4144 = vmatpush1.msra.mxu0 0.0
    %4145 = vmatprep.subr.mxu0 0.0
    %4146 = vmatpush1.msra.mxu0 0.0
    %4147 = vmatprep.subr.mxu0 0.0
    %4148 = vmatpush1.msra.mxu0 0.0
    %4149 = vmatprep.subr.mxu0 0.0
    %4150 = vmatpush1.msra.mxu0 0.0
    %4151 = vmatprep.subr.mxu0 0.0
    %4152 = vmatpush1.msra.mxu0 0.0
    %4153 = vmatprep.subr.mxu0 0.0
    %4154 = vmatpush1.msra.mxu0 0.0
    %4155 = vmatprep.subr.mxu0 0.0
    %4156 = vmatpush1.msra.mxu0 0.0
    %4157 = vmatprep.subr.mxu0 0.0
    %4158 = vmatpush1.msra.mxu0 0.0
    %4159 = vmatprep.subr.mxu0 0.0
    %4160 = vmatpush1.msra.mxu0 0.0
    %4161 = vmatprep.subr.mxu0 0.0
    %4162 = vmatpush1.msra.mxu0 0.0
    %4163 = vmatprep.subr.mxu0 0.0
    %4164 = vmatpush1.msra.mxu0 0.0
    %4165 = vmatprep.mubr.f32.mxu0 0.0
    %4166 = vmatmul.mubr.f32.gmra.mrb[0].mxu0 %v4096
    %v4167 = vpop.f32.mrb[0].mxu0
    %v4168 = vadd.f32 0.0, %v4167
    %v4169 = vpop.f32.mrb[0].mxu0
    %4170 = vmatprep.mubr.f32.mxu0 0.0
    %4171 = vmatmul.mubr.f32.gmra.mrb[0].mxu0 %v4099
    %v4172 = vpop.f32.mrb[0].mxu0
    %v4173 = vadd.f32 0.0, %v4172
    %v4174 = vpop.f32.mrb[0].mxu0
    %4175 = vdwg.mxu0
    %v4176 = vadd.f32 %v3761, %v4168
    %v4177 = vadd.f32 %v3762, %v4173
    %v4178 = vlaneseq
    %v4179 = vshrl.u32 %v4178, 7
    %v4180 = vsub.s32 0, %v4179
    %v4181 = vrot.slane %v2335, %v4180
    %v4182 = vadd.f32 %v4176, %v4181
    %v4183 = vadd.f32 %v4177, %v4181
    %v4184 = vadd.f32 %v2332, %v4182
    %v4185 = vadd.f32 %v2333, %v4183
    %v4186 = vsel %vm151, %v4184, 0.0
    %4187 = vadd.xlane.f32.xlu0 %v4186
    %v4188 = vpop.xlane.xlu0 %4187
    %v4189 = vsel %vm151, %v4185, 0.0
    %4190 = vadd.xlane.f32.xlu0 %v4189
    %v4191 = vpop.xlane.xlu0 %4190
    %v4192 = vmul.f32 %v4188, %v158
    %v4193 = vmul.f32 %v4191, %v158
    %v4194 = vmul.f32 %v4184, %v4184
    %v4195 = vmul.f32 %v4185, %v4185
    %v4196 = vsel %vm151, %v4194, 0.0
    %4197 = vadd.xlane.f32.xlu0 %v4196
    %v4198 = vpop.xlane.xlu0 %4197
    %v4199 = vsel %vm151, %v4195, 0.0
    %4200 = vadd.xlane.f32.xlu0 %v4199
    %v4201 = vpop.xlane.xlu0 %4200
    %v4202 = vmul.f32 %v4198, %v158
    %v4203 = vmul.f32 %v4201, %v158
    %v4204 = vmul.f32 %v4192, %v4192
    %v4205 = vmul.f32 %v4193, %v4193
    %v4206 = vsub.f32 %v4202, %v4204
    %v4207 = vsub.f32 %v4203, %v4205
    %v4208 = vsub.f32 %v4184, %v4192
    %v4209 = vsub.f32 %v4185, %v4193
    %v4210 = vadd.f32 %v4206, 1e-12
    %v4211 = vadd.f32 %v4207, 1e-12
    %v4212 = vrsqrt.pop %v4210
    %v4213 = vrsqrt.pop %v4211
    %v4214 = vmul.f32 %v4208, %v4212
    %v4215 = vmul.f32 %v4209, %v4213
    %v4216 = vlaneseq
    %v4217 = vshrl.u32 %v4216, 7
    %v4218 = vsub.s32 1, %v4217
    %v4219 = vrot.slane %v2335, %v4218
    %v4220 = vmul.f32 %v4214, %v4219
    %v4221 = vmul.f32 %v4215, %v4219
    %v4222 = vlaneseq
    %v4223 = vshrl.u32 %v4222, 7
    %v4224 = vsub.s32 2, %v4223
    %v4225 = vrot.slane %v2335, %v4224
    %v4226 = vadd.f32 %v4220, %v4225
    %v4227 = vadd.f32 %v4221, %v4225
    %s4228 = scalar_lea.vmem %s7, 32
    %v4229 = vld [vmem:[%s4228] sm:$0xff]
    %v4230 = vld [vmem:[%s4228 + $0x8] sm:$0xff]
    %v4231 = vld [vmem:[%s4228 + $0x10] sm:$0xff]
    %v4232 = vld [vmem:[%s4228 + $0x18] sm:$0xff]
    %s4233 = scalar_lea.vmem %s10, 1
    %v4234 = vld [vmem:[%s4233] sm:$0x1]
    %v4236 = vlaneseq
    %v4237 = vshrl.u32 %v4236, 7
    %v4238 = vsub.s32 0, %v4237
    %v4239 = vrot.slane %v4234, %v4238
    %v4242 = vsel %vm151, %v4226, 0
    %v4245 = vsel %vm151, %v4227, 0
    %4247 = vmatprep.subr.mxu0 0.0
    %4248 = vmatpush1.msra.mxu0 %v4229
    %4249 = vmatprep.subr.mxu0 0.0
    %4250 = vmatpush1.msra.mxu0 %v4230
    %4251 = vmatprep.subr.mxu0 0.0
    %4252 = vmatpush1.msra.mxu0 %v4231
    %4253 = vmatprep.subr.mxu0 0.0
    %4254 = vmatpush1.msra.mxu0 %v4232
    %4255 = vmatprep.subr.mxu0 0.0
    %4256 = vmatpush1.msra.mxu0 0.0
    %4257 = vmatprep.subr.mxu0 0.0
    %4258 = vmatpush1.msra.mxu0 0.0
    %4259 = vmatprep.subr.mxu0 0.0
    %4260 = vmatpush1.msra.mxu0 0.0
    %4261 = vmatprep.subr.mxu0 0.0
    %4262 = vmatpush1.msra.mxu0 0.0
    %4263 = vmatprep.subr.mxu0 0.0
    %4264 = vmatpush1.msra.mxu0 0.0
    %4265 = vmatprep.subr.mxu0 0.0
    %4266 = vmatpush1.msra.mxu0 0.0
    %4267 = vmatprep.subr.mxu0 0.0
    %4268 = vmatpush1.msra.mxu0 0.0
    %4269 = vmatprep.subr.mxu0 0.0
    %4270 = vmatpush1.msra.mxu0 0.0
    %4271 = vmatprep.subr.mxu0 0.0
    %4272 = vmatpush1.msra.mxu0 0.0
    %4273 = vmatprep.subr.mxu0 0.0
    %4274 = vmatpush1.msra.mxu0 0.0
    %4275 = vmatprep.subr.mxu0 0.0
    %4276 = vmatpush1.msra.mxu0 0.0
    %4277 = vmatprep.subr.mxu0 0.0
    %4278 = vmatpush1.msra.mxu0 0.0
    %4279 = vmatprep.subr.mxu0 0.0
    %4280 = vmatpush1.msra.mxu0 0.0
    %4281 = vmatprep.subr.mxu0 0.0
    %4282 = vmatpush1.msra.mxu0 0.0
    %4283 = vmatprep.subr.mxu0 0.0
    %4284 = vmatpush1.msra.mxu0 0.0
    %4285 = vmatprep.subr.mxu0 0.0
    %4286 = vmatpush1.msra.mxu0 0.0
    %4287 = vmatprep.subr.mxu0 0.0
    %4288 = vmatpush1.msra.mxu0 0.0
    %4289 = vmatprep.subr.mxu0 0.0
    %4290 = vmatpush1.msra.mxu0 0.0
    %4291 = vmatprep.subr.mxu0 0.0
    %4292 = vmatpush1.msra.mxu0 0.0
    %4293 = vmatprep.subr.mxu0 0.0
    %4294 = vmatpush1.msra.mxu0 0.0
    %4295 = vmatprep.subr.mxu0 0.0
    %4296 = vmatpush1.msra.mxu0 0.0
    %4297 = vmatprep.subr.mxu0 0.0
    %4298 = vmatpush1.msra.mxu0 0.0
    %4299 = vmatprep.subr.mxu0 0.0
    %4300 = vmatpush1.msra.mxu0 0.0
    %4301 = vmatprep.subr.mxu0 0.0
    %4302 = vmatpush1.msra.mxu0 0.0
    %4303 = vmatprep.subr.mxu0 0.0
    %4304 = vmatpush1.msra.mxu0 0.0
    %4305 = vmatprep.subr.mxu0 0.0
    %4306 = vmatpush1.msra.mxu0 0.0
    %4307 = vmatprep.subr.mxu0 0.0
    %4308 = vmatpush1.msra.mxu0 0.0
    %4309 = vmatprep.subr.mxu0 0.0
    %4310 = vmatpush1.msra.mxu0 0.0
    %4311 = vmatprep.mubr.f32.mxu0 0.0
    %4312 = vmatmul.mubr.f32.gmra.mrb[0].mxu0 %v4242
    %v4313 = vpop.f32.mrb[0].mxu0
    %v4314 = vadd.f32 %v4239, %v4313
    %v4315 = vpop.f32.mrb[0].mxu0
    %4316 = vmatprep.mubr.f32.mxu0 0.0
    %4317 = vmatmul.mubr.f32.gmra.mrb[0].mxu0 %v4245
    %v4318 = vpop.f32.mrb[0].mxu0
    %v4319 = vadd.f32 %v4239, %v4318
    %v4320 = vpop.f32.mrb[0].mxu0
    %4321 = vdwg.mxu0
    %v4322 = vmul.f32 %v4314, %v4314
    %v4323 = vmul.f32 %v4319, %v4319
    %v4324 = vmul.f32 %v4314, %v4322
    %v4325 = vmul.f32 %v4319, %v4323
    %v4326 = vmul.f32 %v4324, 0.044715
    %v4327 = vmul.f32 %v4325, 0.044715
    %v4328 = vadd.f32 %v4314, %v4326
    %v4329 = vadd.f32 %v4319, %v4327
    %v4330 = vmul.f32 %v4328, 0.7978846
    %v4331 = vmul.f32 %v4329, 0.7978846
    %v4332 = vtanh.pop %v4330
    %v4333 = vtanh.pop %v4331
    %v4334 = vadd.f32 %v4332, 1.0
    %v4335 = vadd.f32 %v4333, 1.0
    %v4336 = vmul.f32 %v4334, 0.5
    %v4337 = vmul.f32 %v4335, 0.5
    %v4338 = vmul.f32 %v4314, %v4336
    %v4339 = vmul.f32 %v4319, %v4337
    %s4340 = scalar_lea.vmem %s8, 64
    %v4341 = vld [vmem:[%s4340] sm:$0xff]
    %v4342 = vld [vmem:[%s4340 + $0x8] sm:$0xff]
    %v4343 = vld [vmem:[%s4340 + $0x10] sm:$0xff]
    %v4344 = vld [vmem:[%s4340 + $0x18] sm:$0xff]
    %v4345 = vld [vmem:[%s4340 + $0x20] sm:$0xff]
    %v4346 = vld [vmem:[%s4340 + $0x28] sm:$0xff]
    %v4347 = vld [vmem:[%s4340 + $0x30] sm:$0xff]
    %v4348 = vld [vmem:[%s4340 + $0x38] sm:$0xff]
    %v4349 = vlaneseq
    %v4350 = vshrl.u32 %v4349, 7
    %v4351 = vsub.s32 3, %v4350
    %v4352 = vrot.slane %v2335, %v4351
    %v4354 = vsel %vm2208, %v4338, 0
    %v4357 = vsel %vm2208, %v4339, 0
    %4359 = vmatprep.subr.mxu0 0.0
    %4360 = vmatpush1.msra.mxu0 %v4341
    %4361 = vmatprep.subr.mxu0 0.0
    %4362 = vmatpush1.msra.mxu0 %v4342
    %4363 = vmatprep.subr.mxu0 0.0
    %4364 = vmatpush1.msra.mxu0 %v4343
    %4365 = vmatprep.subr.mxu0 0.0
    %4366 = vmatpush1.msra.mxu0 %v4344
    %4367 = vmatprep.subr.mxu0 0.0
    %4368 = vmatpush1.msra.mxu0 %v4345
    %4369 = vmatprep.subr.mxu0 0.0
    %4370 = vmatpush1.msra.mxu0 %v4346
    %4371 = vmatprep.subr.mxu0 0.0
    %4372 = vmatpush1.msra.mxu0 %v4347
    %4373 = vmatprep.subr.mxu0 0.0
    %4374 = vmatpush1.msra.mxu0 %v4348
    %4375 = vmatprep.subr.mxu0 0.0
    %4376 = vmatpush1.msra.mxu0 0.0
    %4377 = vmatprep.subr.mxu0 0.0
    %4378 = vmatpush1.msra.mxu0 0.0
    %4379 = vmatprep.subr.mxu0 0.0
    %4380 = vmatpush1.msra.mxu0 0.0
    %4381 = vmatprep.subr.mxu0 0.0
    %4382 = vmatpush1.msra.mxu0 0.0
    %4383 = vmatprep.subr.mxu0 0.0
    %4384 = vmatpush1.msra.mxu0 0.0
    %4385 = vmatprep.subr.mxu0 0.0
    %4386 = vmatpush1.msra.mxu0 0.0
    %4387 = vmatprep.subr.mxu0 0.0
    %4388 = vmatpush1.msra.mxu0 0.0
    %4389 = vmatprep.subr.mxu0 0.0
    %4390 = vmatpush1.msra.mxu0 0.0
    %4391 = vmatprep.subr.mxu0 0.0
    %4392 = vmatpush1.msra.mxu0 0.0
    %4393 = vmatprep.subr.mxu0 0.0
    %4394 = vmatpush1.msra.mxu0 0.0
    %4395 = vmatprep.subr.mxu0 0.0
    %4396 = vmatpush1.msra.mxu0 0.0
    %4397 = vmatprep.subr.mxu0 0.0
    %4398 = vmatpush1.msra.mxu0 0.0
    %4399 = vmatprep.subr.mxu0 0.0
    %4400 = vmatpush1.msra.mxu0 0.0
    %4401 = vmatprep.subr.mxu0 0.0
    %4402 = vmatpush1.msra.mxu0 0.0
    %4403 = vmatprep.subr.mxu0 0.0
    %4404 = vmatpush1.msra.mxu0 0.0
    %4405 = vmatprep.subr.mxu0 0.0
    %4406 = vmatpush1.msra.mxu0 0.0
    %4407 = vmatprep.subr.mxu0 0.0
    %4408 = vmatpush1.msra.mxu0 0.0
    %4409 = vmatprep.subr.mxu0 0.0
    %4410 = vmatpush1.msra.mxu0 0.0
    %4411 = vmatprep.subr.mxu0 0.0
    %4412 = vmatpush1.msra.mxu0 0.0
    %4413 = vmatprep.subr.mxu0 0.0
    %4414 = vmatpush1.msra.mxu0 0.0
    %4415 = vmatprep.subr.mxu0 0.0
    %4416 = vmatpush1.msra.mxu0 0.0
    %4417 = vmatprep.subr.mxu0 0.0
    %4418 = vmatpush1.msra.mxu0 0.0
    %4419 = vmatprep.subr.mxu0 0.0
    %4420 = vmatpush1.msra.mxu0 0.0
    %4421 = vmatprep.subr.mxu0 0.0
    %4422 = vmatpush1.msra.mxu0 0.0
    %4423 = vmatprep.mubr.f32.mxu0 0.0
    %4424 = vmatmul.mubr.f32.gmra.mrb[0].mxu0 %v4354
    %v4425 = vpop.f32.mrb[0].mxu0
    %v4426 = vadd.f32 %v4352, %v4425
    %v4427 = vpop.f32.mrb[0].mxu0
    %4428 = vmatprep.mubr.f32.mxu0 0.0
    %4429 = vmatmul.mubr.f32.gmra.mrb[0].mxu0 %v4357
    %v4430 = vpop.f32.mrb[0].mxu0
    %v4431 = vadd.f32 %v4352, %v4430
    %v4432 = vpop.f32.mrb[0].mxu0
    %4433 = vdwg.mxu0
    %v4434 = vadd.f32 %v4226, %v4426
    %v4435 = vadd.f32 %v4227, %v4431
    %v4436 = vsel %vm151, %v4434, 0.0
    %4437 = vadd.xlane.f32.xlu0 %v4436
    %v4438 = vpop.xlane.xlu0 %4437
    %v4439 = vsel %vm151, %v4435, 0.0
    %4440 = vadd.xlane.f32.xlu0 %v4439
    %v4441 = vpop.xlane.xlu0 %4440
    %v4442 = vmul.f32 %v4438, %v158
    %v4443 = vmul.f32 %v4441, %v158
    %v4444 = vmul.f32 %v4434, %v4434
    %v4445 = vmul.f32 %v4435, %v4435
    %v4446 = vsel %vm151, %v4444, 0.0
    %4447 = vadd.xlane.f32.xlu0 %v4446
    %v4448 = vpop.xlane.xlu0 %4447
    %v4449 = vsel %vm151, %v4445, 0.0
    %4450 = vadd.xlane.f32.xlu0 %v4449
    %v4451 = vpop.xlane.xlu0 %4450
    %v4452 = vmul.f32 %v4448, %v158
    %v4453 = vmul.f32 %v4451, %v158
    %v4454 = vmul.f32 %v4442, %v4442
    %v4455 = vmul.f32 %v4443, %v4443
    %v4456 = vsub.f32 %v4452, %v4454
    %v4457 = vsub.f32 %v4453, %v4455
    %v4458 = vsub.f32 %v4434, %v4442
    %v4459 = vsub.f32 %v4435, %v4443
    %v4460 = vadd.f32 %v4456, 1e-12
    %v4461 = vadd.f32 %v4457, 1e-12
    %v4462 = vrsqrt.pop %v4460
    %v4463 = vrsqrt.pop %v4461
    %v4464 = vmul.f32 %v4458, %v4462
    %v4465 = vmul.f32 %v4459, %v4463
    %v4466 = vlaneseq
    %v4467 = vshrl.u32 %v4466, 7
    %v4468 = vsub.s32 4, %v4467
    %v4469 = vrot.slane %v2335, %v4468
    %v4470 = vmul.f32 %v4464, %v4469
    %v4471 = vmul.f32 %v4465, %v4469
    %v4472 = vlaneseq
    %v4473 = vshrl.u32 %v4472, 7
    %v4474 = vsub.s32 5, %v4473
    %v4475 = vrot.slane %v2335, %v4474
    %v4476 = vadd.f32 %v4470, %v4475
    %v4477 = vadd.f32 %v4471, %v4475
    %v4478 = vsel %vm151, %v4476, 0.0
    %v4479 = vrot.slane %v4478, 4
    %v4480 = vadd.f32 %v4478, %v4479
    %v4481 = vrot.slane %v4480, 2
    %v4482 = vadd.f32 %v4480, %v4481
    %v4483 = vrot.slane %v4482, 1
    %v4484 = vadd.f32 %v4482, %v4483
    %v4485 = vsel %vm151, %v4477, 0.0
    %v4486 = vrot.slane %v4485, 4
    %v4487 = vadd.f32 %v4485, %v4486
    %v4488 = vrot.slane %v4487, 2
    %v4489 = vadd.f32 %v4487, %v4488
    %v4490 = vrot.slane %v4489, 1
    %v4491 = vadd.f32 %v4489, %v4490
    %v4492 = vrcp.pop 8.0
    %v4493 = vmul.f32 %v4484, %v4492
    %v4494 = vmul.f32 %v4491, %v4492
    %vm4497 = vcmask 1041409
    %v4498 = vsel %vm4497, %v4494, %v4493
    %vm4500 = vcmask 254976
    %4501 = vst.msk [vmem:[#allocation2] sm:$0x3] %vm4500, %v4498
    // Predicated region
    $region46: #{sentence_encoder_forward.1} parent=1 // pred_check
      _
    $region47: #{sentence_encoder_forward.1} parent=1 // pred_check_branch
      %4503 = sbr.rel (0) target = $region49
    $region48: #{sentence_encoder_forward.1} parent=1 // pred_region
      %s4505 = ssub.s32 32, 32
      %4506 = vsyncadd [#allocation3], %s4505
      %s4508 = sshll.u32 [#allocation2], 4
      %s4509 = int_to_ptr.vmem [resolvable:$true] %s4508
      %4511 = dma.vmem_to_hbm [thread:$0]  %s4509, 32, %s11, [#allocation3]
    $region49: #{sentence_encoder_forward.1} parent=1 // pred_fallthru
      _
    // Predicated region
    $region50: #{sentence_encoder_forward.1} parent=1 // pred_check
      _
    $region51: #{sentence_encoder_forward.1} parent=1 // pred_check_branch
      %4513 = sbr.rel (0) target = $region53
    $region52: #{sentence_encoder_forward.1} parent=1 // pred_region
      %4514 = dma.done [#allocation3], 32
    $region53: #{sentence_encoder_forward.1} parent=1 // pred_fallthru
      _
    %4515 = vsyncpa [#allocation3], 1

</llo_original>
